<compile_context>
chip_gen: v7x
topology: tpu7x:2x2x1
jax: 0.10.0
libtpu: 0.0.40
codegen_flags: <defaults>
</compile_context>

<pallas_src>
import math
import functools

import jax
import jax.numpy as jnp
from jax import lax
from jax.experimental import pallas as pl
from jax.experimental.pallas import tpu as pltpu


# ----------------------------- hyper-parameters -----------------------------
HYP = dict(
    seq_len=8,
    vocab_num=64,
    pos_vocab_num=16,
    hidden=32,
    num_heads=4,
    num_layers=2,
    att_dropout=0.1,   # dropout treated as identity (eval semantics)
    res_dropout=0.1,
)
BATCH = 2
LN_EPS = 1e-5
NEG_INF = -1e9
INV_SQRT2 = 0.7071067811865475


# ----------------------------- fused Pallas kernel ---------------------------
def gpt_kernel(bpe_ref, mask_ref, pos_ref,
               wqkv_ref, bqkv_ref, wres_ref, bres_ref,
               g1_ref, b1_ref, w1_ref, bf1_ref, w2_ref, bf2_ref,
               g2_ref, b2_ref, wpred_ref,
               out_ref, *, num_heads):
    """Entire GPT forward for one batch tile (grid axis = batch tiles)."""
    S, H = pos_ref.shape
    bt = mask_ref.shape[0]                 # batch rows handled by this grid step
    L = wqkv_ref.shape[0]
    nh = num_heads
    hd = H // nh
    V = wpred_ref.shape[1]
    scale = 1.0 / math.sqrt(H / nh)        # torch: score /= sqrt(hidden/num_heads)

    # ---- embedding: gathered BPE rows + positional rows, flattened (bt*S, H) ----
    pos = pos_ref[...]                                            # (S, H)
    pos_t = pos if bt == 1 else jnp.concatenate([pos] * bt, axis=0)
    x = bpe_ref[...] + pos_t                                      # (bt*S, H)

    # ---- per-row additive causal*sequence masks, built ONCE, reused by layers ----
    row = lax.broadcasted_iota(jnp.int32, (S, S), 0)
    col = lax.broadcasted_iota(jnp.int32, (S, S), 1)
    tril = (col <= row).astype(jnp.float32)                       # (S, S)
    mask_all = mask_ref[...]                                      # (bt, 1, S)
    add_masks = [((1.0 - tril * mask_all[b]) * NEG_INF)[None, :, :]   # (1, S, S)
                 for b in range(bt)]

    def head_stack(mat, base):
        # (S, 3H) -> (nh, S, hd) via static lane slices stacked on a new head dim
        return jnp.stack([mat[:, base + h * hd: base + (h + 1) * hd]
                          for h in range(nh)], axis=0)

    # ---- transformer layers (L is small & static -> unrolled Python loop) ----
    for l in range(L):
        # --- fused QKV projection: one wide MXU push for the whole batch tile ---
        qkv = jnp.dot(x, wqkv_ref[l],
                      preferred_element_type=jnp.float32) + bqkv_ref[l]   # (bt*S, 3H)

        att_rows = []
        for b in range(bt):
            qkv_b = qkv[b * S:(b + 1) * S, :]                     # (S, 3H)
            q = head_stack(qkv_b, 0 * H)                          # (nh, S, hd)
            k = head_stack(qkv_b, 1 * H)
            v = head_stack(qkv_b, 2 * H)

            s = jnp.einsum('hqd,hkd->hqk', q, k,
                           preferred_element_type=jnp.float32) * scale    # (nh, S, S)
            s = s + add_masks[b]
            m = jnp.max(s, axis=-1, keepdims=True)
            e = jnp.exp(s - m)
            p = e / jnp.sum(e, axis=-1, keepdims=True)
            # TODO(synk): attention dropout omitted (identity / eval semantics)

            ctx = jnp.einsum('hqk,hkd->hqd', p, v,
                             preferred_element_type=jnp.float32)          # (nh, S, hd)
            # heads back into lanes (head-major, matches torch flatten) so the
            # output projection is ONE dense (H, H) matmul with the head sum
            # accumulated inside the MXU contraction.
            ctx_cat = jnp.concatenate([ctx[h] for h in range(nh)], axis=-1)  # (S, H)
            att_rows.append(jnp.dot(ctx_cat, wres_ref[l],
                                    preferred_element_type=jnp.float32))
        a = att_rows[0] if bt == 1 else jnp.concatenate(att_rows, axis=0)    # (bt*S, H)
        a = a + bres_ref[l]
        # TODO(synk): residual dropout omitted (identity / eval semantics)

        # --- residual + LayerNorm 1 (OpenAI style, biased variance) ---
        h1 = x + a
        u1 = jnp.mean(h1, axis=-1, keepdims=True)
        s1 = jnp.mean((h1 - u1) ** 2, axis=-1, keepdims=True)
        h1n = g1_ref[l] * ((h1 - u1) * lax.rsqrt(s1 + LN_EPS)) + b1_ref[l]

        # --- feed-forward with exact (erf) GELU ---
        a1 = jnp.dot(h1n, w1_ref[l], preferred_element_type=jnp.float32) + bf1_ref[l]
        g = 0.5 * a1 * (1.0 + lax.erf(a1 * INV_SQRT2))
        a2 = jnp.dot(g, w2_ref[l], preferred_element_type=jnp.float32) + bf2_ref[l]

        # --- residual + LayerNorm 2 ---
        h2 = h1n + a2
        u2 = jnp.mean(h2, axis=-1, keepdims=True)
        s2 = jnp.mean((h2 - u2) ** 2, axis=-1, keepdims=True)
        x = g2_ref[l] * ((h2 - u2) * lax.rsqrt(s2 + LN_EPS)) + b2_ref[l]

    # ---- predict head (no bias) + softmax; lane-dense (2V = 128) store ----
    score = jnp.dot(x, wpred_ref[...], preferred_element_type=jnp.float32)   # (bt*S, V)
    ms = jnp.max(score, axis=-1, keepdims=True)
    es = jnp.exp(score - ms)
    prob = es / jnp.sum(es, axis=-1, keepdims=True)
    out_ref[...] = jnp.concatenate([score, prob], axis=-1)                   # (bt*S, 2V)


# ----------------------------- pallas_call wrapper ----------------------------
WEIGHT_NAMES = ('wqkv', 'bqkv', 'wres', 'bres', 'g1', 'b1',
                'w1', 'bf1', 'w2', 'bf2', 'g2', 'b2', 'w_pred')


def _full_spec(shape):
    """Grid-invariant full-array BlockSpec -> weight DMA'd to VMEM once."""
    ndim = len(shape)
    return pl.BlockSpec(tuple(shape), lambda b: (0,) * ndim)


def _num_batch_tiles(batch):
    """v7x has 2 TensorCores/chip -> shard the batch across them with a
    parallel grid; single-TC chips (v5e/v6e) -> fold the whole batch into
    one grid step (no per-step overhead, better MXU row occupancy)."""
    try:
        kind = jax.devices()[0].device_kind.lower()
    except Exception:
        return 1
    if ('v7' in kind or '7x' in kind) and batch % 2 == 0:
        return 2
    return 1


def gpt_forward(packed, input_ids, seq_mask):
    B, S = input_ids.shape
    H = packed['pos_emb'].shape[1]
    V = packed['w_pred'].shape[1]
    nh = HYP['num_heads']

    nt = _num_batch_tiles(B)
    bt = B // nt

    # Token-embedding gather stays one tiny XLA op; everything else is fused.
    bpe = packed['bpe_emb'][input_ids].astype(jnp.float32).reshape(B * S, H)
    mask = seq_mask.astype(jnp.float32).reshape(B, 1, S)
    pos = packed['pos_emb'][:S].astype(jnp.float32)               # pos_idx = arange(S)

    weights = tuple(packed[n] for n in WEIGHT_NAMES)
    in_specs = [pl.BlockSpec((bt * S, H), lambda b: (b, 0)),
                pl.BlockSpec((bt, 1, S), lambda b: (b, 0, 0)),
                _full_spec(pos.shape)]
    in_specs += [_full_spec(w.shape) for w in weights]

    out = pl.pallas_call(
        functools.partial(gpt_kernel, num_heads=nh),
        out_shape=jax.ShapeDtypeStruct((B * S, 2 * V), jnp.float32),
        grid=(nt,),
        in_specs=in_specs,
        out_specs=pl.BlockSpec((bt * S, 2 * V), lambda b: (b, 0)),
        compiler_params=pltpu.CompilerParams(dimension_semantics=("parallel",)),
    )(bpe, mask, pos, *weights)

    out = out.reshape(B, S, 2 * V)
    return out[..., :V], out[..., V:]                             # score, prob


# ----------------------------- parameter init / packing ----------------------
def init_params(key, hyp):
    """Parameters in their 'natural' (PyTorch-like) shapes."""
    H, V, PV, L = hyp['hidden'], hyp['vocab_num'], hyp['pos_vocab_num'], hyp['num_layers']

    def nrm(k, shape, scale=0.02):
        return (scale * jax.random.normal(k, shape)).astype(jnp.float32)

    keys = jax.random.split(key, 3 + L)
    params = dict(
        bpe_emb=nrm(keys[0], (V, H)),
        pos_emb=nrm(keys[1], (PV, H)),
        w_pred=nrm(keys[2], (H, V)),
        layers=[],
    )
    for l in range(L):
        lk = jax.random.split(keys[3 + l], 4)
        params['layers'].append(dict(
            wqkv=nrm(lk[0], (H, 3 * H)), bqkv=jnp.zeros((3 * H,), jnp.float32),
            wres=nrm(lk[1], (H, H)),     bres=jnp.zeros((H,), jnp.float32),
            g1=jnp.ones((H,), jnp.float32), b1=jnp.zeros((H,), jnp.float32),
            w1=nrm(lk[2], (H, 4 * H)),   bf1=jnp.zeros((4 * H,), jnp.float32),
            w2=nrm(lk[3], (4 * H, H)),   bf2=jnp.zeros((H,), jnp.float32),
            g2=jnp.ones((H,), jnp.float32), b2=jnp.zeros((H,), jnp.float32),
        ))
    return params


def pack_params(params, hyp):
    """One-time repack: stack layers; wqkv stays fused (L, H, 3H)."""
    def stack(name):
        return jnp.stack([lp[name] for lp in params['layers']], axis=0)

    def vec(name):
        return stack(name)[:, None, :]

    return dict(
        bpe_emb=params['bpe_emb'],
        pos_emb=params['pos_emb'],
        w_pred=params['w_pred'],
        wqkv=stack('wqkv'),            # (L, H, 3H)
        bqkv=vec('bqkv'),              # (L, 1, 3H)
        wres=stack('wres'),            # (L, H, H)
        bres=vec('bres'),
        g1=vec('g1'), b1=vec('b1'),
        w1=stack('w1'), bf1=vec('bf1'),
        w2=stack('w2'), bf2=vec('bf2'),
        g2=vec('g2'), b2=vec('b2'),
    )


# ----------------------------- pure-JAX reference -----------------------------
def reference_forward(params, hyp, input_ids, seq_mask):
    """Direct transcription of the PyTorch GPT_model forward (eval mode)."""
    H, nh = hyp['hidden'], hyp['num_heads']
    S = hyp['seq_len']
    hd = H // nh
    B = input_ids.shape[0]
    seq_mask = seq_mask.astype(jnp.float32)

    x = params['bpe_emb'][input_ids] + params['pos_emb'][:S][None, :, :]

    def ln(t, g, b):
        u = t.mean(-1, keepdims=True)
        s = ((t - u) ** 2).mean(-1, keepdims=True)
        return g * (t - u) / jnp.sqrt(s + LN_EPS) + b

    tril = jnp.tril(jnp.ones((S, S), jnp.float32))
    for lp in params['layers']:
        qkv = x @ lp['wqkv'] + lp['bqkv']
        q, k, v = qkv[..., :H], qkv[..., H:2 * H], qkv[..., 2 * H:]

        def split(t):
            return t.reshape(B, S, nh, hd).transpose(0, 2, 1, 3)

        qh, kh, vh = split(q), split(k), split(v)
        att = jnp.einsum('bhqd,bhkd->bhqk', qh, kh) / jnp.sqrt(H / nh)
        mask = tril[None, None, :, :] * seq_mask[:, None, None, :]
        att = att + (1.0 - mask) * NEG_INF
        p = jax.nn.softmax(att, axis=-1)
        ctx = jnp.einsum('bhqk,bhkd->bhqd', p, vh)
        ctx = ctx.transpose(0, 2, 1, 3).reshape(B, S, H)
        a = ctx @ lp['wres'] + lp['bres']

        h1 = ln(x + a, lp['g1'], lp['b1'])
        a1 = h1 @ lp['w1'] + lp['bf1']
        g = 0.5 * a1 * (1.0 + lax.erf(a1 * INV_SQRT2))
        a2 = g @ lp['w2'] + lp['bf2']
        x = ln(h1 + a2, lp['g2'], lp['b2'])

    score = x @ params['w_pred']
    prob = jax.nn.softmax(score, axis=-1)
    return score, prob


# ----------------------------- main -------------------------------------------
if __name__ == "__main__":
    key = jax.random.PRNGKey(0)
    pkey, ikey = jax.random.split(key)

    params = init_params(pkey, HYP)
    packed = pack_params(params, HYP)

    input_ids = jax.random.randint(ikey, (BATCH, HYP['seq_len']), 0, HYP['vocab_num'])
    # sequence mask: first row fully valid, second row has the last 3 tokens padded
    seq_mask = jnp.ones((BATCH, HYP['seq_len']), jnp.float32)
    seq_mask = seq_mask.at[1, -3:].set(0.0)

    fwd = jax.jit(gpt_forward)
    pred_score, pred_prob = fwd(packed, input_ids, seq_mask)
    jax.block_until_ready((pred_score, pred_prob))

    with jax.default_matmul_precision("float32"):
        ref_score, ref_prob = reference_forward(params, HYP, input_ids, seq_mask)

    assert pred_score.shape == (BATCH, HYP['seq_len'], HYP['vocab_num'])
    assert pred_prob.shape == (BATCH, HYP['seq_len'], HYP['vocab_num'])
    assert bool(jnp.all(jnp.isfinite(pred_score)))
    assert bool(jnp.all(jnp.isfinite(pred_prob)))
    assert bool(jnp.allclose(jnp.sum(pred_prob, axis=-1), 1.0, atol=1e-3))
    assert bool(jnp.allclose(pred_score, ref_score, atol=2e-2))
    assert bool(jnp.allclose(pred_prob, ref_prob, atol=2e-3))

    print("KERNEL_OK")
</pallas_src>

<mosaic_0001>
module attributes {stable_mosaic.version = 11 : i64} {
  func.func @gpt_kernel(%arg0: i32, %arg1: memref<16x32xf32, #tpu.memory_space<vmem>>, %arg2: memref<2x1x8xf32, #tpu.memory_space<vmem>>, %arg3: memref<8x32xf32, #tpu.memory_space<vmem>>, %arg4: memref<2x32x96xf32, #tpu.memory_space<vmem>>, %arg5: memref<2x1x96xf32, #tpu.memory_space<vmem>>, %arg6: memref<2x32x32xf32, #tpu.memory_space<vmem>>, %arg7: memref<2x1x32xf32, #tpu.memory_space<vmem>>, %arg8: memref<2x1x32xf32, #tpu.memory_space<vmem>>, %arg9: memref<2x1x32xf32, #tpu.memory_space<vmem>>, %arg10: memref<2x32x128xf32, #tpu.memory_space<vmem>>, %arg11: memref<2x1x128xf32, #tpu.memory_space<vmem>>, %arg12: memref<2x128x32xf32, #tpu.memory_space<vmem>>, %arg13: memref<2x1x32xf32, #tpu.memory_space<vmem>>, %arg14: memref<2x1x32xf32, #tpu.memory_space<vmem>>, %arg15: memref<2x1x32xf32, #tpu.memory_space<vmem>>, %arg16: memref<32x64xf32, #tpu.memory_space<vmem>>, %arg17: memref<16x128xf32, #tpu.memory_space<vmem>>) attributes {dimension_semantics = [#tpu.dimension_semantics<parallel>], iteration_bounds = array<i64: 1>, scalar_prefetch = 0 : i64, scratch_operands = 0 : i64, tpu.core_type = #tpu.core_type<tc>, window_params = [{transform_indices = @transform_0, window_bounds = array<i64: 16, 32>}, {transform_indices = @transform_1, window_bounds = array<i64: 2, 1, 8>}, {pipeline_mode = #tpu.pipeline_mode<synchronous>, transform_indices = @transform_2, window_bounds = array<i64: 8, 32>}, {pipeline_mode = #tpu.pipeline_mode<synchronous>, transform_indices = @transform_3, window_bounds = array<i64: 2, 32, 96>}, {pipeline_mode = #tpu.pipeline_mode<synchronous>, transform_indices = @transform_4, window_bounds = array<i64: 2, 1, 96>}, {pipeline_mode = #tpu.pipeline_mode<synchronous>, transform_indices = @transform_5, window_bounds = array<i64: 2, 32, 32>}, {pipeline_mode = #tpu.pipeline_mode<synchronous>, transform_indices = @transform_6, window_bounds = array<i64: 2, 1, 32>}, {pipeline_mode = #tpu.pipeline_mode<synchronous>, transform_indices = @transform_7, window_bounds = array<i64: 2, 1, 32>}, {pipeline_mode = #tpu.pipeline_mode<synchronous>, transform_indices = @transform_8, window_bounds = array<i64: 2, 1, 32>}, {pipeline_mode = #tpu.pipeline_mode<synchronous>, transform_indices = @transform_9, window_bounds = array<i64: 2, 32, 128>}, {pipeline_mode = #tpu.pipeline_mode<synchronous>, transform_indices = @transform_10, window_bounds = array<i64: 2, 1, 128>}, {pipeline_mode = #tpu.pipeline_mode<synchronous>, transform_indices = @transform_11, window_bounds = array<i64: 2, 128, 32>}, {pipeline_mode = #tpu.pipeline_mode<synchronous>, transform_indices = @transform_12, window_bounds = array<i64: 2, 1, 32>}, {pipeline_mode = #tpu.pipeline_mode<synchronous>, transform_indices = @transform_13, window_bounds = array<i64: 2, 1, 32>}, {pipeline_mode = #tpu.pipeline_mode<synchronous>, transform_indices = @transform_14, window_bounds = array<i64: 2, 1, 32>}, {pipeline_mode = #tpu.pipeline_mode<synchronous>, transform_indices = @transform_15, window_bounds = array<i64: 32, 64>}, {transform_indices = @transform_16, window_bounds = array<i64: 16, 128>}]} {
    %c0 = arith.constant 0 : index
    %c0_0 = arith.constant 0 : index
    %0 = vector.load %arg3[%c0, %c0_0] : memref<8x32xf32, #tpu.memory_space<vmem>>, vector<8x32xf32>
    %1 = tpu.concatenate %0, %0 in 0 : vector<8x32xf32>, vector<8x32xf32> -> vector<16x32xf32>
    %c0_1 = arith.constant 0 : index
    %c0_2 = arith.constant 0 : index
    %2 = vector.load %arg1[%c0_1, %c0_2] : memref<16x32xf32, #tpu.memory_space<vmem>>, vector<16x32xf32>
    %3 = arith.addf %2, %1 : vector<16x32xf32>
    %4 = tpu.iota {dimensions = array<i32: 0>} : vector<8x8xi32>
    %5 = tpu.iota {dimensions = array<i32: 1>} : vector<8x8xi32>
    %6 = arith.cmpi sle, %5, %4 : vector<8x8xi32>
    %7 = arith.extui %6 : vector<8x8xi1> to vector<8x8xi32>
    %8 = arith.sitofp %7 : vector<8x8xi32> to vector<8x8xf32>
    %c0_3 = arith.constant 0 : index
    %c0_4 = arith.constant 0 : index
    %c0_5 = arith.constant 0 : index
    %9 = vector.load %arg2[%c0_3, %c0_4, %c0_5] : memref<2x1x8xf32, #tpu.memory_space<vmem>>, vector<2x1x8xf32>
    %10 = vector.extract_strided_slice %9 {offsets = [0, 0, 0], sizes = [1, 1, 8], strides = [1, 1, 1]} : vector<2x1x8xf32> to vector<1x1x8xf32>
    %11 = vector.shape_cast %10 : vector<1x1x8xf32> to vector<1x8xf32>
    %12 = vector.broadcast %11 : vector<1x8xf32> to vector<8x8xf32>
    %13 = arith.mulf %8, %12 : vector<8x8xf32>
    %cst = arith.constant 1.000000e+00 : f32
    %14 = vector.broadcast %cst : f32 to vector<8x8xf32>
    %15 = arith.subf %14, %13 : vector<8x8xf32>
    %cst_6 = arith.constant -1.000000e+09 : f32
    %16 = vector.broadcast %cst_6 : f32 to vector<8x8xf32>
    %17 = arith.mulf %15, %16 : vector<8x8xf32>
    %18 = vector.shape_cast %17 : vector<8x8xf32> to vector<1x8x8xf32>
    %19 = vector.extract_strided_slice %9 {offsets = [1, 0, 0], sizes = [1, 1, 8], strides = [1, 1, 1]} : vector<2x1x8xf32> to vector<1x1x8xf32>
    %20 = vector.shape_cast %19 : vector<1x1x8xf32> to vector<1x8xf32>
    %21 = vector.broadcast %20 : vector<1x8xf32> to vector<8x8xf32>
    %22 = arith.mulf %8, %21 : vector<8x8xf32>
    %cst_7 = arith.constant 1.000000e+00 : f32
    %23 = vector.broadcast %cst_7 : f32 to vector<8x8xf32>
    %24 = arith.subf %23, %22 : vector<8x8xf32>
    %cst_8 = arith.constant -1.000000e+09 : f32
    %25 = vector.broadcast %cst_8 : f32 to vector<8x8xf32>
    %26 = arith.mulf %24, %25 : vector<8x8xf32>
    %27 = vector.shape_cast %26 : vector<8x8xf32> to vector<1x8x8xf32>
    %c0_9 = arith.constant 0 : index
    %c0_10 = arith.constant 0 : index
    %c0_11 = arith.constant 0 : index
    %28 = vector.load %arg4[%c0_9, %c0_10, %c0_11] : memref<2x32x96xf32, #tpu.memory_space<vmem>>, vector<1x32x96xf32>
    %29 = vector.shape_cast %28 : vector<1x32x96xf32> to vector<32x96xf32>
    %cst_12 = arith.constant dense<0.000000e+00> : vector<16x96xf32>
    %30 = tpu.matmul %3, %29, %cst_12 {dimension_numbers = #tpu.dot_dimension_numbers<[1], [0], [0], [1], [0, 0, 1, 1], [], []>} : vector<16x32xf32>, vector<32x96xf32>, vector<16x96xf32> -> vector<16x96xf32>
    %c0_13 = arith.constant 0 : index
    %c0_14 = arith.constant 0 : index
    %c0_15 = arith.constant 0 : index
    %31 = vector.load %arg5[%c0_13, %c0_14, %c0_15] : memref<2x1x96xf32, #tpu.memory_space<vmem>>, vector<1x1x96xf32>
    %32 = vector.shape_cast %31 : vector<1x1x96xf32> to vector<1x96xf32>
    %33 = vector.broadcast %32 : vector<1x96xf32> to vector<16x96xf32>
    %34 = arith.addf %30, %33 : vector<16x96xf32>
    %35 = vector.extract_strided_slice %34 {offsets = [0, 0], sizes = [8, 96], strides = [1, 1]} : vector<16x96xf32> to vector<8x96xf32>
    %36 = vector.extract_strided_slice %35 {offsets = [0, 0], sizes = [8, 8], strides = [1, 1]} : vector<8x96xf32> to vector<8x8xf32>
    %37 = vector.extract_strided_slice %35 {offsets = [0, 8], sizes = [8, 8], strides = [1, 1]} : vector<8x96xf32> to vector<8x8xf32>
    %38 = vector.extract_strided_slice %35 {offsets = [0, 16], sizes = [8, 8], strides = [1, 1]} : vector<8x96xf32> to vector<8x8xf32>
    %39 = vector.extract_strided_slice %35 {offsets = [0, 24], sizes = [8, 8], strides = [1, 1]} : vector<8x96xf32> to vector<8x8xf32>
    %40 = vector.shape_cast %36 : vector<8x8xf32> to vector<1x8x8xf32>
    %41 = vector.shape_cast %37 : vector<8x8xf32> to vector<1x8x8xf32>
    %42 = vector.shape_cast %38 : vector<8x8xf32> to vector<1x8x8xf32>
    %43 = vector.shape_cast %39 : vector<8x8xf32> to vector<1x8x8xf32>
    %44 = tpu.concatenate %40, %41, %42, %43 in 0 : vector<1x8x8xf32>, vector<1x8x8xf32>, vector<1x8x8xf32>, vector<1x8x8xf32> -> vector<4x8x8xf32>
    %45 = vector.extract_strided_slice %35 {offsets = [0, 32], sizes = [8, 8], strides = [1, 1]} : vector<8x96xf32> to vector<8x8xf32>
    %46 = vector.extract_strided_slice %35 {offsets = [0, 40], sizes = [8, 8], strides = [1, 1]} : vector<8x96xf32> to vector<8x8xf32>
    %47 = vector.extract_strided_slice %35 {offsets = [0, 48], sizes = [8, 8], strides = [1, 1]} : vector<8x96xf32> to vector<8x8xf32>
    %48 = vector.extract_strided_slice %35 {offsets = [0, 56], sizes = [8, 8], strides = [1, 1]} : vector<8x96xf32> to vector<8x8xf32>
    %49 = vector.shape_cast %45 : vector<8x8xf32> to vector<1x8x8xf32>
    %50 = vector.shape_cast %46 : vector<8x8xf32> to vector<1x8x8xf32>
    %51 = vector.shape_cast %47 : vector<8x8xf32> to vector<1x8x8xf32>
    %52 = vector.shape_cast %48 : vector<8x8xf32> to vector<1x8x8xf32>
    %53 = tpu.concatenate %49, %50, %51, %52 in 0 : vector<1x8x8xf32>, vector<1x8x8xf32>, vector<1x8x8xf32>, vector<1x8x8xf32> -> vector<4x8x8xf32>
    %54 = vector.extract_strided_slice %35 {offsets = [0, 64], sizes = [8, 8], strides = [1, 1]} : vector<8x96xf32> to vector<8x8xf32>
    %55 = vector.extract_strided_slice %35 {offsets = [0, 72], sizes = [8, 8], strides = [1, 1]} : vector<8x96xf32> to vector<8x8xf32>
    %56 = vector.extract_strided_slice %35 {offsets = [0, 80], sizes = [8, 8], strides = [1, 1]} : vector<8x96xf32> to vector<8x8xf32>
    %57 = vector.extract_strided_slice %35 {offsets = [0, 88], sizes = [8, 8], strides = [1, 1]} : vector<8x96xf32> to vector<8x8xf32>
    %58 = vector.shape_cast %54 : vector<8x8xf32> to vector<1x8x8xf32>
    %59 = vector.shape_cast %55 : vector<8x8xf32> to vector<1x8x8xf32>
    %60 = vector.shape_cast %56 : vector<8x8xf32> to vector<1x8x8xf32>
    %61 = vector.shape_cast %57 : vector<8x8xf32> to vector<1x8x8xf32>
    %62 = tpu.concatenate %58, %59, %60, %61 in 0 : vector<1x8x8xf32>, vector<1x8x8xf32>, vector<1x8x8xf32>, vector<1x8x8xf32> -> vector<4x8x8xf32>
    "tpu.trace_start"() <{level = 10 : i32, message = "hqd,hkd->hqk"}> : () -> ()
    %cst_16 = arith.constant dense<0.000000e+00> : vector<4x8x8xf32>
    %63 = tpu.matmul %44, %53, %cst_16 {dimension_numbers = #tpu.dot_dimension_numbers<[2], [2], [1], [1], [0, 0, 0, 1, 1, 1], [0], [0]>} : vector<4x8x8xf32>, vector<4x8x8xf32>, vector<4x8x8xf32> -> vector<4x8x8xf32>
    "tpu.trace_stop"() : () -> ()
    %cst_17 = arith.constant 0.353553385 : f32
    %64 = vector.broadcast %cst_17 : f32 to vector<4x8x8xf32>
    %65 = arith.mulf %63, %64 : vector<4x8x8xf32>
    %66 = vector.broadcast %18 : vector<1x8x8xf32> to vector<4x8x8xf32>
    %67 = arith.addf %65, %66 : vector<4x8x8xf32>
    %cst_18 = arith.constant dense<0xFF800000> : vector<4x8xf32>
    %68 = vector.multi_reduction <maximumf>, %67, %cst_18 [2] : vector<4x8x8xf32> to vector<4x8xf32>
    %69 = vector.shape_cast %68 : vector<4x8xf32> to vector<4x8x1xf32>
    %70 = vector.broadcast %69 : vector<4x8x1xf32> to vector<4x8x8xf32>
    %71 = arith.subf %67, %70 : vector<4x8x8xf32>
    %72 = math.exp %71 : vector<4x8x8xf32>
    %cst_19 = arith.constant dense<0.000000e+00> : vector<4x8xf32>
    %73 = vector.multi_reduction <add>, %72, %cst_19 [2] : vector<4x8x8xf32> to vector<4x8xf32>
    %74 = vector.shape_cast %73 : vector<4x8xf32> to vector<4x8x1xf32>
    %75 = vector.broadcast %74 : vector<4x8x1xf32> to vector<4x8x8xf32>
    %76 = arith.divf %72, %75 : vector<4x8x8xf32>
    "tpu.trace_start"() <{level = 10 : i32, message = "hqk,hkd->hqd"}> : () -> ()
    %cst_20 = arith.constant dense<0.000000e+00> : vector<4x8x8xf32>
    %77 = tpu.matmul %76, %62, %cst_20 {dimension_numbers = #tpu.dot_dimension_numbers<[2], [1], [1], [2], [0, 0, 0, 1, 1, 2], [0], [0]>} : vector<4x8x8xf32>, vector<4x8x8xf32>, vector<4x8x8xf32> -> vector<4x8x8xf32>
    "tpu.trace_stop"() : () -> ()
    %78 = vector.extract_strided_slice %77 {offsets = [0, 0, 0], sizes = [1, 8, 8], strides = [1, 1, 1]} : vector<4x8x8xf32> to vector<1x8x8xf32>
    %79 = vector.shape_cast %78 : vector<1x8x8xf32> to vector<8x8xf32>
    %80 = vector.extract_strided_slice %77 {offsets = [1, 0, 0], sizes = [1, 8, 8], strides = [1, 1, 1]} : vector<4x8x8xf32> to vector<1x8x8xf32>
    %81 = vector.shape_cast %80 : vector<1x8x8xf32> to vector<8x8xf32>
    %82 = vector.extract_strided_slice %77 {offsets = [2, 0, 0], sizes = [1, 8, 8], strides = [1, 1, 1]} : vector<4x8x8xf32> to vector<1x8x8xf32>
    %83 = vector.shape_cast %82 : vector<1x8x8xf32> to vector<8x8xf32>
    %84 = vector.extract_strided_slice %77 {offsets = [3, 0, 0], sizes = [1, 8, 8], strides = [1, 1, 1]} : vector<4x8x8xf32> to vector<1x8x8xf32>
    %85 = vector.shape_cast %84 : vector<1x8x8xf32> to vector<8x8xf32>
    %86 = tpu.concatenate %79, %81, %83, %85 in 1 : vector<8x8xf32>, vector<8x8xf32>, vector<8x8xf32>, vector<8x8xf32> -> vector<8x32xf32>
    %c0_21 = arith.constant 0 : index
    %c0_22 = arith.constant 0 : index
    %c0_23 = arith.constant 0 : index
    %87 = vector.load %arg6[%c0_21, %c0_22, %c0_23] : memref<2x32x32xf32, #tpu.memory_space<vmem>>, vector<1x32x32xf32>
    %88 = vector.shape_cast %87 : vector<1x32x32xf32> to vector<32x32xf32>
    %cst_24 = arith.constant dense<0.000000e+00> : vector<8x32xf32>
    %89 = tpu.matmul %86, %88, %cst_24 {dimension_numbers = #tpu.dot_dimension_numbers<[1], [0], [0], [1], [0, 0, 1, 1], [], []>} : vector<8x32xf32>, vector<32x32xf32>, vector<8x32xf32> -> vector<8x32xf32>
    %90 = vector.extract_strided_slice %34 {offsets = [8, 0], sizes = [8, 96], strides = [1, 1]} : vector<16x96xf32> to vector<8x96xf32>
    %91 = vector.extract_strided_slice %90 {offsets = [0, 0], sizes = [8, 8], strides = [1, 1]} : vector<8x96xf32> to vector<8x8xf32>
    %92 = vector.extract_strided_slice %90 {offsets = [0, 8], sizes = [8, 8], strides = [1, 1]} : vector<8x96xf32> to vector<8x8xf32>
    %93 = vector.extract_strided_slice %90 {offsets = [0, 16], sizes = [8, 8], strides = [1, 1]} : vector<8x96xf32> to vector<8x8xf32>
    %94 = vector.extract_strided_slice %90 {offsets = [0, 24], sizes = [8, 8], strides = [1, 1]} : vector<8x96xf32> to vector<8x8xf32>
    %95 = vector.shape_cast %91 : vector<8x8xf32> to vector<1x8x8xf32>
    %96 = vector.shape_cast %92 : vector<8x8xf32> to vector<1x8x8xf32>
    %97 = vector.shape_cast %93 : vector<8x8xf32> to vector<1x8x8xf32>
    %98 = vector.shape_cast %94 : vector<8x8xf32> to vector<1x8x8xf32>
    %99 = tpu.concatenate %95, %96, %97, %98 in 0 : vector<1x8x8xf32>, vector<1x8x8xf32>, vector<1x8x8xf32>, vector<1x8x8xf32> -> vector<4x8x8xf32>
    %100 = vector.extract_strided_slice %90 {offsets = [0, 32], sizes = [8, 8], strides = [1, 1]} : vector<8x96xf32> to vector<8x8xf32>
    %101 = vector.extract_strided_slice %90 {offsets = [0, 40], sizes = [8, 8], strides = [1, 1]} : vector<8x96xf32> to vector<8x8xf32>
    %102 = vector.extract_strided_slice %90 {offsets = [0, 48], sizes = [8, 8], strides = [1, 1]} : vector<8x96xf32> to vector<8x8xf32>
    %103 = vector.extract_strided_slice %90 {offsets = [0, 56], sizes = [8, 8], strides = [1, 1]} : vector<8x96xf32> to vector<8x8xf32>
    %104 = vector.shape_cast %100 : vector<8x8xf32> to vector<1x8x8xf32>
    %105 = vector.shape_cast %101 : vector<8x8xf32> to vector<1x8x8xf32>
    %106 = vector.shape_cast %102 : vector<8x8xf32> to vector<1x8x8xf32>
    %107 = vector.shape_cast %103 : vector<8x8xf32> to vector<1x8x8xf32>
    %108 = tpu.concatenate %104, %105, %106, %107 in 0 : vector<1x8x8xf32>, vector<1x8x8xf32>, vector<1x8x8xf32>, vector<1x8x8xf32> -> vector<4x8x8xf32>
    %109 = vector.extract_strided_slice %90 {offsets = [0, 64], sizes = [8, 8], strides = [1, 1]} : vector<8x96xf32> to vector<8x8xf32>
    %110 = vector.extract_strided_slice %90 {offsets = [0, 72], sizes = [8, 8], strides = [1, 1]} : vector<8x96xf32> to vector<8x8xf32>
    %111 = vector.extract_strided_slice %90 {offsets = [0, 80], sizes = [8, 8], strides = [1, 1]} : vector<8x96xf32> to vector<8x8xf32>
    %112 = vector.extract_strided_slice %90 {offsets = [0, 88], sizes = [8, 8], strides = [1, 1]} : vector<8x96xf32> to vector<8x8xf32>
    %113 = vector.shape_cast %109 : vector<8x8xf32> to vector<1x8x8xf32>
    %114 = vector.shape_cast %110 : vector<8x8xf32> to vector<1x8x8xf32>
    %115 = vector.shape_cast %111 : vector<8x8xf32> to vector<1x8x8xf32>
    %116 = vector.shape_cast %112 : vector<8x8xf32> to vector<1x8x8xf32>
    %117 = tpu.concatenate %113, %114, %115, %116 in 0 : vector<1x8x8xf32>, vector<1x8x8xf32>, vector<1x8x8xf32>, vector<1x8x8xf32> -> vector<4x8x8xf32>
    "tpu.trace_start"() <{level = 10 : i32, message = "hqd,hkd->hqk"}> : () -> ()
    %cst_25 = arith.constant dense<0.000000e+00> : vector<4x8x8xf32>
    %118 = tpu.matmul %99, %108, %cst_25 {dimension_numbers = #tpu.dot_dimension_numbers<[2], [2], [1], [1], [0, 0, 0, 1, 1, 1], [0], [0]>} : vector<4x8x8xf32>, vector<4x8x8xf32>, vector<4x8x8xf32> -> vector<4x8x8xf32>
    "tpu.trace_stop"() : () -> ()
    %cst_26 = arith.constant 0.353553385 : f32
    %119 = vector.broadcast %cst_26 : f32 to vector<4x8x8xf32>
    %120 = arith.mulf %118, %119 : vector<4x8x8xf32>
    %121 = vector.broadcast %27 : vector<1x8x8xf32> to vector<4x8x8xf32>
    %122 = arith.addf %120, %121 : vector<4x8x8xf32>
    %cst_27 = arith.constant dense<0xFF800000> : vector<4x8xf32>
    %123 = vector.multi_reduction <maximumf>, %122, %cst_27 [2] : vector<4x8x8xf32> to vector<4x8xf32>
    %124 = vector.shape_cast %123 : vector<4x8xf32> to vector<4x8x1xf32>
    %125 = vector.broadcast %124 : vector<4x8x1xf32> to vector<4x8x8xf32>
    %126 = arith.subf %122, %125 : vector<4x8x8xf32>
    %127 = math.exp %126 : vector<4x8x8xf32>
    %cst_28 = arith.constant dense<0.000000e+00> : vector<4x8xf32>
    %128 = vector.multi_reduction <add>, %127, %cst_28 [2] : vector<4x8x8xf32> to vector<4x8xf32>
    %129 = vector.shape_cast %128 : vector<4x8xf32> to vector<4x8x1xf32>
    %130 = vector.broadcast %129 : vector<4x8x1xf32> to vector<4x8x8xf32>
    %131 = arith.divf %127, %130 : vector<4x8x8xf32>
    "tpu.trace_start"() <{level = 10 : i32, message = "hqk,hkd->hqd"}> : () -> ()
    %cst_29 = arith.constant dense<0.000000e+00> : vector<4x8x8xf32>
    %132 = tpu.matmul %131, %117, %cst_29 {dimension_numbers = #tpu.dot_dimension_numbers<[2], [1], [1], [2], [0, 0, 0, 1, 1, 2], [0], [0]>} : vector<4x8x8xf32>, vector<4x8x8xf32>, vector<4x8x8xf32> -> vector<4x8x8xf32>
    "tpu.trace_stop"() : () -> ()
    %133 = vector.extract_strided_slice %132 {offsets = [0, 0, 0], sizes = [1, 8, 8], strides = [1, 1, 1]} : vector<4x8x8xf32> to vector<1x8x8xf32>
    %134 = vector.shape_cast %133 : vector<1x8x8xf32> to vector<8x8xf32>
    %135 = vector.extract_strided_slice %132 {offsets = [1, 0, 0], sizes = [1, 8, 8], strides = [1, 1, 1]} : vector<4x8x8xf32> to vector<1x8x8xf32>
    %136 = vector.shape_cast %135 : vector<1x8x8xf32> to vector<8x8xf32>
    %137 = vector.extract_strided_slice %132 {offsets = [2, 0, 0], sizes = [1, 8, 8], strides = [1, 1, 1]} : vector<4x8x8xf32> to vector<1x8x8xf32>
    %138 = vector.shape_cast %137 : vector<1x8x8xf32> to vector<8x8xf32>
    %139 = vector.extract_strided_slice %132 {offsets = [3, 0, 0], sizes = [1, 8, 8], strides = [1, 1, 1]} : vector<4x8x8xf32> to vector<1x8x8xf32>
    %140 = vector.shape_cast %139 : vector<1x8x8xf32> to vector<8x8xf32>
    %141 = tpu.concatenate %134, %136, %138, %140 in 1 : vector<8x8xf32>, vector<8x8xf32>, vector<8x8xf32>, vector<8x8xf32> -> vector<8x32xf32>
    %c0_30 = arith.constant 0 : index
    %c0_31 = arith.constant 0 : index
    %c0_32 = arith.constant 0 : index
    %142 = vector.load %arg6[%c0_30, %c0_31, %c0_32] : memref<2x32x32xf32, #tpu.memory_space<vmem>>, vector<1x32x32xf32>
    %143 = vector.shape_cast %142 : vector<1x32x32xf32> to vector<32x32xf32>
    %cst_33 = arith.constant dense<0.000000e+00> : vector<8x32xf32>
    %144 = tpu.matmul %141, %143, %cst_33 {dimension_numbers = #tpu.dot_dimension_numbers<[1], [0], [0], [1], [0, 0, 1, 1], [], []>} : vector<8x32xf32>, vector<32x32xf32>, vector<8x32xf32> -> vector<8x32xf32>
    %145 = tpu.concatenate %89, %144 in 0 : vector<8x32xf32>, vector<8x32xf32> -> vector<16x32xf32>
    %c0_34 = arith.constant 0 : index
    %c0_35 = arith.constant 0 : index
    %c0_36 = arith.constant 0 : index
    %146 = vector.load %arg7[%c0_34, %c0_35, %c0_36] : memref<2x1x32xf32, #tpu.memory_space<vmem>>, vector<1x1x32xf32>
    %147 = vector.shape_cast %146 : vector<1x1x32xf32> to vector<1x32xf32>
    %148 = vector.broadcast %147 : vector<1x32xf32> to vector<16x32xf32>
    %149 = arith.addf %145, %148 : vector<16x32xf32>
    %150 = arith.addf %3, %149 : vector<16x32xf32>
    %cst_37 = arith.constant dense<0.000000e+00> : vector<16xf32>
    %151 = vector.multi_reduction <add>, %150, %cst_37 [1] : vector<16x32xf32> to vector<16xf32>
    %152 = vector.shape_cast %151 : vector<16xf32> to vector<16x1xf32>
    %cst_38 = arith.constant 3.200000e+01 : f32
    %153 = vector.broadcast %cst_38 : f32 to vector<16x1xf32>
    %154 = arith.divf %152, %153 : vector<16x1xf32>
    %155 = vector.broadcast %154 : vector<16x1xf32> to vector<16x32xf32>
    %156 = arith.subf %150, %155 : vector<16x32xf32>
    %157 = arith.mulf %156, %156 : vector<16x32xf32>
    %cst_39 = arith.constant dense<0.000000e+00> : vector<16xf32>
    %158 = vector.multi_reduction <add>, %157, %cst_39 [1] : vector<16x32xf32> to vector<16xf32>
    %159 = vector.shape_cast %158 : vector<16xf32> to vector<16x1xf32>
    %cst_40 = arith.constant 3.200000e+01 : f32
    %160 = vector.broadcast %cst_40 : f32 to vector<16x1xf32>
    %161 = arith.divf %159, %160 : vector<16x1xf32>
    %c0_41 = arith.constant 0 : index
    %c0_42 = arith.constant 0 : index
    %c0_43 = arith.constant 0 : index
    %162 = vector.load %arg8[%c0_41, %c0_42, %c0_43] : memref<2x1x32xf32, #tpu.memory_space<vmem>>, vector<1x1x32xf32>
    %163 = vector.shape_cast %162 : vector<1x1x32xf32> to vector<1x32xf32>
    %164 = vector.broadcast %154 : vector<16x1xf32> to vector<16x32xf32>
    %165 = arith.subf %150, %164 : vector<16x32xf32>
    %cst_44 = arith.constant 9.99999974E-6 : f32
    %166 = vector.broadcast %cst_44 : f32 to vector<16x1xf32>
    %167 = arith.addf %161, %166 : vector<16x1xf32>
    %168 = math.rsqrt %167 : vector<16x1xf32>
    %169 = vector.broadcast %168 : vector<16x1xf32> to vector<16x32xf32>
    %170 = arith.mulf %165, %169 : vector<16x32xf32>
    %171 = vector.broadcast %163 : vector<1x32xf32> to vector<16x32xf32>
    %172 = arith.mulf %171, %170 : vector<16x32xf32>
    %c0_45 = arith.constant 0 : index
    %c0_46 = arith.constant 0 : index
    %c0_47 = arith.constant 0 : index
    %173 = vector.load %arg9[%c0_45, %c0_46, %c0_47] : memref<2x1x32xf32, #tpu.memory_space<vmem>>, vector<1x1x32xf32>
    %174 = vector.shape_cast %173 : vector<1x1x32xf32> to vector<1x32xf32>
    %175 = vector.broadcast %174 : vector<1x32xf32> to vector<16x32xf32>
    %176 = arith.addf %172, %175 : vector<16x32xf32>
    %c0_48 = arith.constant 0 : index
    %c0_49 = arith.constant 0 : index
    %c0_50 = arith.constant 0 : index
    %177 = vector.load %arg10[%c0_48, %c0_49, %c0_50] : memref<2x32x128xf32, #tpu.memory_space<vmem>>, vector<1x32x128xf32>
    %178 = vector.shape_cast %177 : vector<1x32x128xf32> to vector<32x128xf32>
    %cst_51 = arith.constant dense<0.000000e+00> : vector<16x128xf32>
    %179 = tpu.matmul %176, %178, %cst_51 {dimension_numbers = #tpu.dot_dimension_numbers<[1], [0], [0], [1], [0, 0, 1, 1], [], []>} : vector<16x32xf32>, vector<32x128xf32>, vector<16x128xf32> -> vector<16x128xf32>
    %c0_52 = arith.constant 0 : index
    %c0_53 = arith.constant 0 : index
    %c0_54 = arith.constant 0 : index
    %180 = vector.load %arg11[%c0_52, %c0_53, %c0_54] : memref<2x1x128xf32, #tpu.memory_space<vmem>>, vector<1x1x128xf32>
    %181 = vector.shape_cast %180 : vector<1x1x128xf32> to vector<1x128xf32>
    %182 = vector.broadcast %181 : vector<1x128xf32> to vector<16x128xf32>
    %183 = arith.addf %179, %182 : vector<16x128xf32>
    %cst_55 = arith.constant 5.000000e-01 : f32
    %184 = vector.broadcast %cst_55 : f32 to vector<16x128xf32>
    %185 = arith.mulf %184, %183 : vector<16x128xf32>
    %cst_56 = arith.constant 0.707106769 : f32
    %186 = vector.broadcast %cst_56 : f32 to vector<16x128xf32>
    %187 = arith.mulf %183, %186 : vector<16x128xf32>
    %188 = math.erf %187 : vector<16x128xf32>
    %cst_57 = arith.constant 1.000000e+00 : f32
    %189 = vector.broadcast %cst_57 : f32 to vector<16x128xf32>
    %190 = arith.addf %189, %188 : vector<16x128xf32>
    %191 = arith.mulf %185, %190 : vector<16x128xf32>
    %c0_58 = arith.constant 0 : index
    %c0_59 = arith.constant 0 : index
    %c0_60 = arith.constant 0 : index
    %192 = vector.load %arg12[%c0_58, %c0_59, %c0_60] : memref<2x128x32xf32, #tpu.memory_space<vmem>>, vector<1x128x32xf32>
    %193 = vector.shape_cast %192 : vector<1x128x32xf32> to vector<128x32xf32>
    %cst_61 = arith.constant dense<0.000000e+00> : vector<16x32xf32>
    %194 = tpu.matmul %191, %193, %cst_61 {dimension_numbers = #tpu.dot_dimension_numbers<[1], [0], [0], [1], [0, 0, 1, 1], [], []>} : vector<16x128xf32>, vector<128x32xf32>, vector<16x32xf32> -> vector<16x32xf32>
    %c0_62 = arith.constant 0 : index
    %c0_63 = arith.constant 0 : index
    %c0_64 = arith.constant 0 : index
    %195 = vector.load %arg13[%c0_62, %c0_63, %c0_64] : memref<2x1x32xf32, #tpu.memory_space<vmem>>, vector<1x1x32xf32>
    %196 = vector.shape_cast %195 : vector<1x1x32xf32> to vector<1x32xf32>
    %197 = vector.broadcast %196 : vector<1x32xf32> to vector<16x32xf32>
    %198 = arith.addf %194, %197 : vector<16x32xf32>
    %199 = arith.addf %176, %198 : vector<16x32xf32>
    %cst_65 = arith.constant dense<0.000000e+00> : vector<16xf32>
    %200 = vector.multi_reduction <add>, %199, %cst_65 [1] : vector<16x32xf32> to vector<16xf32>
    %201 = vector.shape_cast %200 : vector<16xf32> to vector<16x1xf32>
    %cst_66 = arith.constant 3.200000e+01 : f32
    %202 = vector.broadcast %cst_66 : f32 to vector<16x1xf32>
    %203 = arith.divf %201, %202 : vector<16x1xf32>
    %204 = vector.broadcast %203 : vector<16x1xf32> to vector<16x32xf32>
    %205 = arith.subf %199, %204 : vector<16x32xf32>
    %206 = arith.mulf %205, %205 : vector<16x32xf32>
    %cst_67 = arith.constant dense<0.000000e+00> : vector<16xf32>
    %207 = vector.multi_reduction <add>, %206, %cst_67 [1] : vector<16x32xf32> to vector<16xf32>
    %208 = vector.shape_cast %207 : vector<16xf32> to vector<16x1xf32>
    %cst_68 = arith.constant 3.200000e+01 : f32
    %209 = vector.broadcast %cst_68 : f32 to vector<16x1xf32>
    %210 = arith.divf %208, %209 : vector<16x1xf32>
    %c0_69 = arith.constant 0 : index
    %c0_70 = arith.constant 0 : index
    %c0_71 = arith.constant 0 : index
    %211 = vector.load %arg14[%c0_69, %c0_70, %c0_71] : memref<2x1x32xf32, #tpu.memory_space<vmem>>, vector<1x1x32xf32>
    %212 = vector.shape_cast %211 : vector<1x1x32xf32> to vector<1x32xf32>
    %213 = vector.broadcast %203 : vector<16x1xf32> to vector<16x32xf32>
    %214 = arith.subf %199, %213 : vector<16x32xf32>
    %cst_72 = arith.constant 9.99999974E-6 : f32
    %215 = vector.broadcast %cst_72 : f32 to vector<16x1xf32>
    %216 = arith.addf %210, %215 : vector<16x1xf32>
    %217 = math.rsqrt %216 : vector<16x1xf32>
    %218 = vector.broadcast %217 : vector<16x1xf32> to vector<16x32xf32>
    %219 = arith.mulf %214, %218 : vector<16x32xf32>
    %220 = vector.broadcast %212 : vector<1x32xf32> to vector<16x32xf32>
    %221 = arith.mulf %220, %219 : vector<16x32xf32>
    %c0_73 = arith.constant 0 : index
    %c0_74 = arith.constant 0 : index
    %c0_75 = arith.constant 0 : index
    %222 = vector.load %arg15[%c0_73, %c0_74, %c0_75] : memref<2x1x32xf32, #tpu.memory_space<vmem>>, vector<1x1x32xf32>
    %223 = vector.shape_cast %222 : vector<1x1x32xf32> to vector<1x32xf32>
    %224 = vector.broadcast %223 : vector<1x32xf32> to vector<16x32xf32>
    %225 = arith.addf %221, %224 : vector<16x32xf32>
    %c1 = arith.constant 1 : index
    %c0_76 = arith.constant 0 : index
    %c0_77 = arith.constant 0 : index
    %226 = vector.load %arg4[%c1, %c0_76, %c0_77] : memref<2x32x96xf32, #tpu.memory_space<vmem>>, vector<1x32x96xf32>
    %227 = vector.shape_cast %226 : vector<1x32x96xf32> to vector<32x96xf32>
    %cst_78 = arith.constant dense<0.000000e+00> : vector<16x96xf32>
    %228 = tpu.matmul %225, %227, %cst_78 {dimension_numbers = #tpu.dot_dimension_numbers<[1], [0], [0], [1], [0, 0, 1, 1], [], []>} : vector<16x32xf32>, vector<32x96xf32>, vector<16x96xf32> -> vector<16x96xf32>
    %c1_79 = arith.constant 1 : index
    %c0_80 = arith.constant 0 : index
    %c0_81 = arith.constant 0 : index
    %229 = vector.load %arg5[%c1_79, %c0_80, %c0_81] : memref<2x1x96xf32, #tpu.memory_space<vmem>>, vector<1x1x96xf32>
    %230 = vector.shape_cast %229 : vector<1x1x96xf32> to vector<1x96xf32>
    %231 = vector.broadcast %230 : vector<1x96xf32> to vector<16x96xf32>
    %232 = arith.addf %228, %231 : vector<16x96xf32>
    %233 = vector.extract_strided_slice %232 {offsets = [0, 0], sizes = [8, 96], strides = [1, 1]} : vector<16x96xf32> to vector<8x96xf32>
    %234 = vector.extract_strided_slice %233 {offsets = [0, 0], sizes = [8, 8], strides = [1, 1]} : vector<8x96xf32> to vector<8x8xf32>
    %235 = vector.extract_strided_slice %233 {offsets = [0, 8], sizes = [8, 8], strides = [1, 1]} : vector<8x96xf32> to vector<8x8xf32>
    %236 = vector.extract_strided_slice %233 {offsets = [0, 16], sizes = [8, 8], strides = [1, 1]} : vector<8x96xf32> to vector<8x8xf32>
    %237 = vector.extract_strided_slice %233 {offsets = [0, 24], sizes = [8, 8], strides = [1, 1]} : vector<8x96xf32> to vector<8x8xf32>
    %238 = vector.shape_cast %234 : vector<8x8xf32> to vector<1x8x8xf32>
    %239 = vector.shape_cast %235 : vector<8x8xf32> to vector<1x8x8xf32>
    %240 = vector.shape_cast %236 : vector<8x8xf32> to vector<1x8x8xf32>
    %241 = vector.shape_cast %237 : vector<8x8xf32> to vector<1x8x8xf32>
    %242 = tpu.concatenate %238, %239, %240, %241 in 0 : vector<1x8x8xf32>, vector<1x8x8xf32>, vector<1x8x8xf32>, vector<1x8x8xf32> -> vector<4x8x8xf32>
    %243 = vector.extract_strided_slice %233 {offsets = [0, 32], sizes = [8, 8], strides = [1, 1]} : vector<8x96xf32> to vector<8x8xf32>
    %244 = vector.extract_strided_slice %233 {offsets = [0, 40], sizes = [8, 8], strides = [1, 1]} : vector<8x96xf32> to vector<8x8xf32>
    %245 = vector.extract_strided_slice %233 {offsets = [0, 48], sizes = [8, 8], strides = [1, 1]} : vector<8x96xf32> to vector<8x8xf32>
    %246 = vector.extract_strided_slice %233 {offsets = [0, 56], sizes = [8, 8], strides = [1, 1]} : vector<8x96xf32> to vector<8x8xf32>
    %247 = vector.shape_cast %243 : vector<8x8xf32> to vector<1x8x8xf32>
    %248 = vector.shape_cast %244 : vector<8x8xf32> to vector<1x8x8xf32>
    %249 = vector.shape_cast %245 : vector<8x8xf32> to vector<1x8x8xf32>
    %250 = vector.shape_cast %246 : vector<8x8xf32> to vector<1x8x8xf32>
    %251 = tpu.concatenate %247, %248, %249, %250 in 0 : vector<1x8x8xf32>, vector<1x8x8xf32>, vector<1x8x8xf32>, vector<1x8x8xf32> -> vector<4x8x8xf32>
    %252 = vector.extract_strided_slice %233 {offsets = [0, 64], sizes = [8, 8], strides = [1, 1]} : vector<8x96xf32> to vector<8x8xf32>
    %253 = vector.extract_strided_slice %233 {offsets = [0, 72], sizes = [8, 8], strides = [1, 1]} : vector<8x96xf32> to vector<8x8xf32>
    %254 = vector.extract_strided_slice %233 {offsets = [0, 80], sizes = [8, 8], strides = [1, 1]} : vector<8x96xf32> to vector<8x8xf32>
    %255 = vector.extract_strided_slice %233 {offsets = [0, 88], sizes = [8, 8], strides = [1, 1]} : vector<8x96xf32> to vector<8x8xf32>
    %256 = vector.shape_cast %252 : vector<8x8xf32> to vector<1x8x8xf32>
    %257 = vector.shape_cast %253 : vector<8x8xf32> to vector<1x8x8xf32>
    %258 = vector.shape_cast %254 : vector<8x8xf32> to vector<1x8x8xf32>
    %259 = vector.shape_cast %255 : vector<8x8xf32> to vector<1x8x8xf32>
    %260 = tpu.concatenate %256, %257, %258, %259 in 0 : vector<1x8x8xf32>, vector<1x8x8xf32>, vector<1x8x8xf32>, vector<1x8x8xf32> -> vector<4x8x8xf32>
    "tpu.trace_start"() <{level = 10 : i32, message = "hqd,hkd->hqk"}> : () -> ()
    %cst_82 = arith.constant dense<0.000000e+00> : vector<4x8x8xf32>
    %261 = tpu.matmul %242, %251, %cst_82 {dimension_numbers = #tpu.dot_dimension_numbers<[2], [2], [1], [1], [0, 0, 0, 1, 1, 1], [0], [0]>} : vector<4x8x8xf32>, vector<4x8x8xf32>, vector<4x8x8xf32> -> vector<4x8x8xf32>
    "tpu.trace_stop"() : () -> ()
    %cst_83 = arith.constant 0.353553385 : f32
    %262 = vector.broadcast %cst_83 : f32 to vector<4x8x8xf32>
    %263 = arith.mulf %261, %262 : vector<4x8x8xf32>
    %264 = vector.broadcast %18 : vector<1x8x8xf32> to vector<4x8x8xf32>
    %265 = arith.addf %263, %264 : vector<4x8x8xf32>
    %cst_84 = arith.constant dense<0xFF800000> : vector<4x8xf32>
    %266 = vector.multi_reduction <maximumf>, %265, %cst_84 [2] : vector<4x8x8xf32> to vector<4x8xf32>
    %267 = vector.shape_cast %266 : vector<4x8xf32> to vector<4x8x1xf32>
    %268 = vector.broadcast %267 : vector<4x8x1xf32> to vector<4x8x8xf32>
    %269 = arith.subf %265, %268 : vector<4x8x8xf32>
    %270 = math.exp %269 : vector<4x8x8xf32>
    %cst_85 = arith.constant dense<0.000000e+00> : vector<4x8xf32>
    %271 = vector.multi_reduction <add>, %270, %cst_85 [2] : vector<4x8x8xf32> to vector<4x8xf32>
    %272 = vector.shape_cast %271 : vector<4x8xf32> to vector<4x8x1xf32>
    %273 = vector.broadcast %272 : vector<4x8x1xf32> to vector<4x8x8xf32>
    %274 = arith.divf %270, %273 : vector<4x8x8xf32>
    "tpu.trace_start"() <{level = 10 : i32, message = "hqk,hkd->hqd"}> : () -> ()
    %cst_86 = arith.constant dense<0.000000e+00> : vector<4x8x8xf32>
    %275 = tpu.matmul %274, %260, %cst_86 {dimension_numbers = #tpu.dot_dimension_numbers<[2], [1], [1], [2], [0, 0, 0, 1, 1, 2], [0], [0]>} : vector<4x8x8xf32>, vector<4x8x8xf32>, vector<4x8x8xf32> -> vector<4x8x8xf32>
    "tpu.trace_stop"() : () -> ()
    %276 = vector.extract_strided_slice %275 {offsets = [0, 0, 0], sizes = [1, 8, 8], strides = [1, 1, 1]} : vector<4x8x8xf32> to vector<1x8x8xf32>
    %277 = vector.shape_cast %276 : vector<1x8x8xf32> to vector<8x8xf32>
    %278 = vector.extract_strided_slice %275 {offsets = [1, 0, 0], sizes = [1, 8, 8], strides = [1, 1, 1]} : vector<4x8x8xf32> to vector<1x8x8xf32>
    %279 = vector.shape_cast %278 : vector<1x8x8xf32> to vector<8x8xf32>
    %280 = vector.extract_strided_slice %275 {offsets = [2, 0, 0], sizes = [1, 8, 8], strides = [1, 1, 1]} : vector<4x8x8xf32> to vector<1x8x8xf32>
    %281 = vector.shape_cast %280 : vector<1x8x8xf32> to vector<8x8xf32>
    %282 = vector.extract_strided_slice %275 {offsets = [3, 0, 0], sizes = [1, 8, 8], strides = [1, 1, 1]} : vector<4x8x8xf32> to vector<1x8x8xf32>
    %283 = vector.shape_cast %282 : vector<1x8x8xf32> to vector<8x8xf32>
    %284 = tpu.concatenate %277, %279, %281, %283 in 1 : vector<8x8xf32>, vector<8x8xf32>, vector<8x8xf32>, vector<8x8xf32> -> vector<8x32xf32>
    %c1_87 = arith.constant 1 : index
    %c0_88 = arith.constant 0 : index
    %c0_89 = arith.constant 0 : index
    %285 = vector.load %arg6[%c1_87, %c0_88, %c0_89] : memref<2x32x32xf32, #tpu.memory_space<vmem>>, vector<1x32x32xf32>
    %286 = vector.shape_cast %285 : vector<1x32x32xf32> to vector<32x32xf32>
    %cst_90 = arith.constant dense<0.000000e+00> : vector<8x32xf32>
    %287 = tpu.matmul %284, %286, %cst_90 {dimension_numbers = #tpu.dot_dimension_numbers<[1], [0], [0], [1], [0, 0, 1, 1], [], []>} : vector<8x32xf32>, vector<32x32xf32>, vector<8x32xf32> -> vector<8x32xf32>
    %288 = vector.extract_strided_slice %232 {offsets = [8, 0], sizes = [8, 96], strides = [1, 1]} : vector<16x96xf32> to vector<8x96xf32>
    %289 = vector.extract_strided_slice %288 {offsets = [0, 0], sizes = [8, 8], strides = [1, 1]} : vector<8x96xf32> to vector<8x8xf32>
    %290 = vector.extract_strided_slice %288 {offsets = [0, 8], sizes = [8, 8], strides = [1, 1]} : vector<8x96xf32> to vector<8x8xf32>
    %291 = vector.extract_strided_slice %288 {offsets = [0, 16], sizes = [8, 8], strides = [1, 1]} : vector<8x96xf32> to vector<8x8xf32>
    %292 = vector.extract_strided_slice %288 {offsets = [0, 24], sizes = [8, 8], strides = [1, 1]} : vector<8x96xf32> to vector<8x8xf32>
    %293 = vector.shape_cast %289 : vector<8x8xf32> to vector<1x8x8xf32>
    %294 = vector.shape_cast %290 : vector<8x8xf32> to vector<1x8x8xf32>
    %295 = vector.shape_cast %291 : vector<8x8xf32> to vector<1x8x8xf32>
    %296 = vector.shape_cast %292 : vector<8x8xf32> to vector<1x8x8xf32>
    %297 = tpu.concatenate %293, %294, %295, %296 in 0 : vector<1x8x8xf32>, vector<1x8x8xf32>, vector<1x8x8xf32>, vector<1x8x8xf32> -> vector<4x8x8xf32>
    %298 = vector.extract_strided_slice %288 {offsets = [0, 32], sizes = [8, 8], strides = [1, 1]} : vector<8x96xf32> to vector<8x8xf32>
    %299 = vector.extract_strided_slice %288 {offsets = [0, 40], sizes = [8, 8], strides = [1, 1]} : vector<8x96xf32> to vector<8x8xf32>
    %300 = vector.extract_strided_slice %288 {offsets = [0, 48], sizes = [8, 8], strides = [1, 1]} : vector<8x96xf32> to vector<8x8xf32>
    %301 = vector.extract_strided_slice %288 {offsets = [0, 56], sizes = [8, 8], strides = [1, 1]} : vector<8x96xf32> to vector<8x8xf32>
    %302 = vector.shape_cast %298 : vector<8x8xf32> to vector<1x8x8xf32>
    %303 = vector.shape_cast %299 : vector<8x8xf32> to vector<1x8x8xf32>
    %304 = vector.shape_cast %300 : vector<8x8xf32> to vector<1x8x8xf32>
    %305 = vector.shape_cast %301 : vector<8x8xf32> to vector<1x8x8xf32>
    %306 = tpu.concatenate %302, %303, %304, %305 in 0 : vector<1x8x8xf32>, vector<1x8x8xf32>, vector<1x8x8xf32>, vector<1x8x8xf32> -> vector<4x8x8xf32>
    %307 = vector.extract_strided_slice %288 {offsets = [0, 64], sizes = [8, 8], strides = [1, 1]} : vector<8x96xf32> to vector<8x8xf32>
    %308 = vector.extract_strided_slice %288 {offsets = [0, 72], sizes = [8, 8], strides = [1, 1]} : vector<8x96xf32> to vector<8x8xf32>
    %309 = vector.extract_strided_slice %288 {offsets = [0, 80], sizes = [8, 8], strides = [1, 1]} : vector<8x96xf32> to vector<8x8xf32>
    %310 = vector.extract_strided_slice %288 {offsets = [0, 88], sizes = [8, 8], strides = [1, 1]} : vector<8x96xf32> to vector<8x8xf32>
    %311 = vector.shape_cast %307 : vector<8x8xf32> to vector<1x8x8xf32>
    %312 = vector.shape_cast %308 : vector<8x8xf32> to vector<1x8x8xf32>
    %313 = vector.shape_cast %309 : vector<8x8xf32> to vector<1x8x8xf32>
    %314 = vector.shape_cast %310 : vector<8x8xf32> to vector<1x8x8xf32>
    %315 = tpu.concatenate %311, %312, %313, %314 in 0 : vector<1x8x8xf32>, vector<1x8x8xf32>, vector<1x8x8xf32>, vector<1x8x8xf32> -> vector<4x8x8xf32>
    "tpu.trace_start"() <{level = 10 : i32, message = "hqd,hkd->hqk"}> : () -> ()
    %cst_91 = arith.constant dense<0.000000e+00> : vector<4x8x8xf32>
    %316 = tpu.matmul %297, %306, %cst_91 {dimension_numbers = #tpu.dot_dimension_numbers<[2], [2], [1], [1], [0, 0, 0, 1, 1, 1], [0], [0]>} : vector<4x8x8xf32>, vector<4x8x8xf32>, vector<4x8x8xf32> -> vector<4x8x8xf32>
    "tpu.trace_stop"() : () -> ()
    %cst_92 = arith.constant 0.353553385 : f32
    %317 = vector.broadcast %cst_92 : f32 to vector<4x8x8xf32>
    %318 = arith.mulf %316, %317 : vector<4x8x8xf32>
    %319 = vector.broadcast %27 : vector<1x8x8xf32> to vector<4x8x8xf32>
    %320 = arith.addf %318, %319 : vector<4x8x8xf32>
    %cst_93 = arith.constant dense<0xFF800000> : vector<4x8xf32>
    %321 = vector.multi_reduction <maximumf>, %320, %cst_93 [2] : vector<4x8x8xf32> to vector<4x8xf32>
    %322 = vector.shape_cast %321 : vector<4x8xf32> to vector<4x8x1xf32>
    %323 = vector.broadcast %322 : vector<4x8x1xf32> to vector<4x8x8xf32>
    %324 = arith.subf %320, %323 : vector<4x8x8xf32>
    %325 = math.exp %324 : vector<4x8x8xf32>
    %cst_94 = arith.constant dense<0.000000e+00> : vector<4x8xf32>
    %326 = vector.multi_reduction <add>, %325, %cst_94 [2] : vector<4x8x8xf32> to vector<4x8xf32>
    %327 = vector.shape_cast %326 : vector<4x8xf32> to vector<4x8x1xf32>
    %328 = vector.broadcast %327 : vector<4x8x1xf32> to vector<4x8x8xf32>
    %329 = arith.divf %325, %328 : vector<4x8x8xf32>
    "tpu.trace_start"() <{level = 10 : i32, message = "hqk,hkd->hqd"}> : () -> ()
    %cst_95 = arith.constant dense<0.000000e+00> : vector<4x8x8xf32>
    %330 = tpu.matmul %329, %315, %cst_95 {dimension_numbers = #tpu.dot_dimension_numbers<[2], [1], [1], [2], [0, 0, 0, 1, 1, 2], [0], [0]>} : vector<4x8x8xf32>, vector<4x8x8xf32>, vector<4x8x8xf32> -> vector<4x8x8xf32>
    "tpu.trace_stop"() : () -> ()
    %331 = vector.extract_strided_slice %330 {offsets = [0, 0, 0], sizes = [1, 8, 8], strides = [1, 1, 1]} : vector<4x8x8xf32> to vector<1x8x8xf32>
    %332 = vector.shape_cast %331 : vector<1x8x8xf32> to vector<8x8xf32>
    %333 = vector.extract_strided_slice %330 {offsets = [1, 0, 0], sizes = [1, 8, 8], strides = [1, 1, 1]} : vector<4x8x8xf32> to vector<1x8x8xf32>
    %334 = vector.shape_cast %333 : vector<1x8x8xf32> to vector<8x8xf32>
    %335 = vector.extract_strided_slice %330 {offsets = [2, 0, 0], sizes = [1, 8, 8], strides = [1, 1, 1]} : vector<4x8x8xf32> to vector<1x8x8xf32>
    %336 = vector.shape_cast %335 : vector<1x8x8xf32> to vector<8x8xf32>
    %337 = vector.extract_strided_slice %330 {offsets = [3, 0, 0], sizes = [1, 8, 8], strides = [1, 1, 1]} : vector<4x8x8xf32> to vector<1x8x8xf32>
    %338 = vector.shape_cast %337 : vector<1x8x8xf32> to vector<8x8xf32>
    %339 = tpu.concatenate %332, %334, %336, %338 in 1 : vector<8x8xf32>, vector<8x8xf32>, vector<8x8xf32>, vector<8x8xf32> -> vector<8x32xf32>
    %c1_96 = arith.constant 1 : index
    %c0_97 = arith.constant 0 : index
    %c0_98 = arith.constant 0 : index
    %340 = vector.load %arg6[%c1_96, %c0_97, %c0_98] : memref<2x32x32xf32, #tpu.memory_space<vmem>>, vector<1x32x32xf32>
    %341 = vector.shape_cast %340 : vector<1x32x32xf32> to vector<32x32xf32>
    %cst_99 = arith.constant dense<0.000000e+00> : vector<8x32xf32>
    %342 = tpu.matmul %339, %341, %cst_99 {dimension_numbers = #tpu.dot_dimension_numbers<[1], [0], [0], [1], [0, 0, 1, 1], [], []>} : vector<8x32xf32>, vector<32x32xf32>, vector<8x32xf32> -> vector<8x32xf32>
    %343 = tpu.concatenate %287, %342 in 0 : vector<8x32xf32>, vector<8x32xf32> -> vector<16x32xf32>
    %c1_100 = arith.constant 1 : index
    %c0_101 = arith.constant 0 : index
    %c0_102 = arith.constant 0 : index
    %344 = vector.load %arg7[%c1_100, %c0_101, %c0_102] : memref<2x1x32xf32, #tpu.memory_space<vmem>>, vector<1x1x32xf32>
    %345 = vector.shape_cast %344 : vector<1x1x32xf32> to vector<1x32xf32>
    %346 = vector.broadcast %345 : vector<1x32xf32> to vector<16x32xf32>
    %347 = arith.addf %343, %346 : vector<16x32xf32>
    %348 = arith.addf %225, %347 : vector<16x32xf32>
    %cst_103 = arith.constant dense<0.000000e+00> : vector<16xf32>
    %349 = vector.multi_reduction <add>, %348, %cst_103 [1] : vector<16x32xf32> to vector<16xf32>
    %350 = vector.shape_cast %349 : vector<16xf32> to vector<16x1xf32>
    %cst_104 = arith.constant 3.200000e+01 : f32
    %351 = vector.broadcast %cst_104 : f32 to vector<16x1xf32>
    %352 = arith.divf %350, %351 : vector<16x1xf32>
    %353 = vector.broadcast %352 : vector<16x1xf32> to vector<16x32xf32>
    %354 = arith.subf %348, %353 : vector<16x32xf32>
    %355 = arith.mulf %354, %354 : vector<16x32xf32>
    %cst_105 = arith.constant dense<0.000000e+00> : vector<16xf32>
    %356 = vector.multi_reduction <add>, %355, %cst_105 [1] : vector<16x32xf32> to vector<16xf32>
    %357 = vector.shape_cast %356 : vector<16xf32> to vector<16x1xf32>
    %cst_106 = arith.constant 3.200000e+01 : f32
    %358 = vector.broadcast %cst_106 : f32 to vector<16x1xf32>
    %359 = arith.divf %357, %358 : vector<16x1xf32>
    %c1_107 = arith.constant 1 : index
    %c0_108 = arith.constant 0 : index
    %c0_109 = arith.constant 0 : index
    %360 = vector.load %arg8[%c1_107, %c0_108, %c0_109] : memref<2x1x32xf32, #tpu.memory_space<vmem>>, vector<1x1x32xf32>
    %361 = vector.shape_cast %360 : vector<1x1x32xf32> to vector<1x32xf32>
    %362 = vector.broadcast %352 : vector<16x1xf32> to vector<16x32xf32>
    %363 = arith.subf %348, %362 : vector<16x32xf32>
    %cst_110 = arith.constant 9.99999974E-6 : f32
    %364 = vector.broadcast %cst_110 : f32 to vector<16x1xf32>
    %365 = arith.addf %359, %364 : vector<16x1xf32>
    %366 = math.rsqrt %365 : vector<16x1xf32>
    %367 = vector.broadcast %366 : vector<16x1xf32> to vector<16x32xf32>
    %368 = arith.mulf %363, %367 : vector<16x32xf32>
    %369 = vector.broadcast %361 : vector<1x32xf32> to vector<16x32xf32>
    %370 = arith.mulf %369, %368 : vector<16x32xf32>
    %c1_111 = arith.constant 1 : index
    %c0_112 = arith.constant 0 : index
    %c0_113 = arith.constant 0 : index
    %371 = vector.load %arg9[%c1_111, %c0_112, %c0_113] : memref<2x1x32xf32, #tpu.memory_space<vmem>>, vector<1x1x32xf32>
    %372 = vector.shape_cast %371 : vector<1x1x32xf32> to vector<1x32xf32>
    %373 = vector.broadcast %372 : vector<1x32xf32> to vector<16x32xf32>
    %374 = arith.addf %370, %373 : vector<16x32xf32>
    %c1_114 = arith.constant 1 : index
    %c0_115 = arith.constant 0 : index
    %c0_116 = arith.constant 0 : index
    %375 = vector.load %arg10[%c1_114, %c0_115, %c0_116] : memref<2x32x128xf32, #tpu.memory_space<vmem>>, vector<1x32x128xf32>
    %376 = vector.shape_cast %375 : vector<1x32x128xf32> to vector<32x128xf32>
    %cst_117 = arith.constant dense<0.000000e+00> : vector<16x128xf32>
    %377 = tpu.matmul %374, %376, %cst_117 {dimension_numbers = #tpu.dot_dimension_numbers<[1], [0], [0], [1], [0, 0, 1, 1], [], []>} : vector<16x32xf32>, vector<32x128xf32>, vector<16x128xf32> -> vector<16x128xf32>
    %c1_118 = arith.constant 1 : index
    %c0_119 = arith.constant 0 : index
    %c0_120 = arith.constant 0 : index
    %378 = vector.load %arg11[%c1_118, %c0_119, %c0_120] : memref<2x1x128xf32, #tpu.memory_space<vmem>>, vector<1x1x128xf32>
    %379 = vector.shape_cast %378 : vector<1x1x128xf32> to vector<1x128xf32>
    %380 = vector.broadcast %379 : vector<1x128xf32> to vector<16x128xf32>
    %381 = arith.addf %377, %380 : vector<16x128xf32>
    %cst_121 = arith.constant 5.000000e-01 : f32
    %382 = vector.broadcast %cst_121 : f32 to vector<16x128xf32>
    %383 = arith.mulf %382, %381 : vector<16x128xf32>
    %cst_122 = arith.constant 0.707106769 : f32
    %384 = vector.broadcast %cst_122 : f32 to vector<16x128xf32>
    %385 = arith.mulf %381, %384 : vector<16x128xf32>
    %386 = math.erf %385 : vector<16x128xf32>
    %cst_123 = arith.constant 1.000000e+00 : f32
    %387 = vector.broadcast %cst_123 : f32 to vector<16x128xf32>
    %388 = arith.addf %387, %386 : vector<16x128xf32>
    %389 = arith.mulf %383, %388 : vector<16x128xf32>
    %c1_124 = arith.constant 1 : index
    %c0_125 = arith.constant 0 : index
    %c0_126 = arith.constant 0 : index
    %390 = vector.load %arg12[%c1_124, %c0_125, %c0_126] : memref<2x128x32xf32, #tpu.memory_space<vmem>>, vector<1x128x32xf32>
    %391 = vector.shape_cast %390 : vector<1x128x32xf32> to vector<128x32xf32>
    %cst_127 = arith.constant dense<0.000000e+00> : vector<16x32xf32>
    %392 = tpu.matmul %389, %391, %cst_127 {dimension_numbers = #tpu.dot_dimension_numbers<[1], [0], [0], [1], [0, 0, 1, 1], [], []>} : vector<16x128xf32>, vector<128x32xf32>, vector<16x32xf32> -> vector<16x32xf32>
    %c1_128 = arith.constant 1 : index
    %c0_129 = arith.constant 0 : index
    %c0_130 = arith.constant 0 : index
    %393 = vector.load %arg13[%c1_128, %c0_129, %c0_130] : memref<2x1x32xf32, #tpu.memory_space<vmem>>, vector<1x1x32xf32>
    %394 = vector.shape_cast %393 : vector<1x1x32xf32> to vector<1x32xf32>
    %395 = vector.broadcast %394 : vector<1x32xf32> to vector<16x32xf32>
    %396 = arith.addf %392, %395 : vector<16x32xf32>
    %397 = arith.addf %374, %396 : vector<16x32xf32>
    %cst_131 = arith.constant dense<0.000000e+00> : vector<16xf32>
    %398 = vector.multi_reduction <add>, %397, %cst_131 [1] : vector<16x32xf32> to vector<16xf32>
    %399 = vector.shape_cast %398 : vector<16xf32> to vector<16x1xf32>
    %cst_132 = arith.constant 3.200000e+01 : f32
    %400 = vector.broadcast %cst_132 : f32 to vector<16x1xf32>
    %401 = arith.divf %399, %400 : vector<16x1xf32>
    %402 = vector.broadcast %401 : vector<16x1xf32> to vector<16x32xf32>
    %403 = arith.subf %397, %402 : vector<16x32xf32>
    %404 = arith.mulf %403, %403 : vector<16x32xf32>
    %cst_133 = arith.constant dense<0.000000e+00> : vector<16xf32>
    %405 = vector.multi_reduction <add>, %404, %cst_133 [1] : vector<16x32xf32> to vector<16xf32>
    %406 = vector.shape_cast %405 : vector<16xf32> to vector<16x1xf32>
    %cst_134 = arith.constant 3.200000e+01 : f32
    %407 = vector.broadcast %cst_134 : f32 to vector<16x1xf32>
    %408 = arith.divf %406, %407 : vector<16x1xf32>
    %c1_135 = arith.constant 1 : index
    %c0_136 = arith.constant 0 : index
    %c0_137 = arith.constant 0 : index
    %409 = vector.load %arg14[%c1_135, %c0_136, %c0_137] : memref<2x1x32xf32, #tpu.memory_space<vmem>>, vector<1x1x32xf32>
    %410 = vector.shape_cast %409 : vector<1x1x32xf32> to vector<1x32xf32>
    %411 = vector.broadcast %401 : vector<16x1xf32> to vector<16x32xf32>
    %412 = arith.subf %397, %411 : vector<16x32xf32>
    %cst_138 = arith.constant 9.99999974E-6 : f32
    %413 = vector.broadcast %cst_138 : f32 to vector<16x1xf32>
    %414 = arith.addf %408, %413 : vector<16x1xf32>
    %415 = math.rsqrt %414 : vector<16x1xf32>
    %416 = vector.broadcast %415 : vector<16x1xf32> to vector<16x32xf32>
    %417 = arith.mulf %412, %416 : vector<16x32xf32>
    %418 = vector.broadcast %410 : vector<1x32xf32> to vector<16x32xf32>
    %419 = arith.mulf %418, %417 : vector<16x32xf32>
    %c1_139 = arith.constant 1 : index
    %c0_140 = arith.constant 0 : index
    %c0_141 = arith.constant 0 : index
    %420 = vector.load %arg15[%c1_139, %c0_140, %c0_141] : memref<2x1x32xf32, #tpu.memory_space<vmem>>, vector<1x1x32xf32>
    %421 = vector.shape_cast %420 : vector<1x1x32xf32> to vector<1x32xf32>
    %422 = vector.broadcast %421 : vector<1x32xf32> to vector<16x32xf32>
    %423 = arith.addf %419, %422 : vector<16x32xf32>
    %c0_142 = arith.constant 0 : index
    %c0_143 = arith.constant 0 : index
    %424 = vector.load %arg16[%c0_142, %c0_143] : memref<32x64xf32, #tpu.memory_space<vmem>>, vector<32x64xf32>
    %cst_144 = arith.constant dense<0.000000e+00> : vector<16x64xf32>
    %425 = tpu.matmul %423, %424, %cst_144 {dimension_numbers = #tpu.dot_dimension_numbers<[1], [0], [0], [1], [0, 0, 1, 1], [], []>} : vector<16x32xf32>, vector<32x64xf32>, vector<16x64xf32> -> vector<16x64xf32>
    %cst_145 = arith.constant dense<0xFF800000> : vector<16xf32>
    %426 = vector.multi_reduction <maximumf>, %425, %cst_145 [1] : vector<16x64xf32> to vector<16xf32>
    %427 = vector.shape_cast %426 : vector<16xf32> to vector<16x1xf32>
    %428 = vector.broadcast %427 : vector<16x1xf32> to vector<16x64xf32>
    %429 = arith.subf %425, %428 : vector<16x64xf32>
    %430 = math.exp %429 : vector<16x64xf32>
    %cst_146 = arith.constant dense<0.000000e+00> : vector<16xf32>
    %431 = vector.multi_reduction <add>, %430, %cst_146 [1] : vector<16x64xf32> to vector<16xf32>
    %432 = vector.shape_cast %431 : vector<16xf32> to vector<16x1xf32>
    %433 = vector.broadcast %432 : vector<16x1xf32> to vector<16x64xf32>
    %434 = arith.divf %430, %433 : vector<16x64xf32>
    %435 = tpu.concatenate %425, %434 in 1 : vector<16x64xf32>, vector<16x64xf32> -> vector<16x128xf32>
    %c0_147 = arith.constant 0 : index
    %c0_148 = arith.constant 0 : index
    %436 = vector.load %arg17[%c0_147, %c0_148] : memref<16x128xf32, #tpu.memory_space<vmem>>, vector<16x128xf32>
    tpu.vector_store %arg17[%c0_147, %c0_148], %435 {strides = array<i32>} : memref<16x128xf32, #tpu.memory_space<vmem>>, vector<16x128xf32>,
    return
  }
  func.func @transform_0(%arg0: i32) -> (i32, i32) {
    %c0_i32 = arith.constant 0 : i32
    %c0_i32_0 = arith.constant 0 : i32
    return %arg0, %c0_i32 : i32, i32
  }
  func.func @transform_1(%arg0: i32) -> (i32, i32, i32) {
    %c0_i32 = arith.constant 0 : i32
    %c0_i32_0 = arith.constant 0 : i32
    %c0_i32_1 = arith.constant 0 : i32
    return %arg0, %c0_i32, %c0_i32_0 : i32, i32, i32
  }
  func.func @transform_2(%arg0: i32) -> (i32, i32) {
    %c0_i32 = arith.constant 0 : i32
    %c0_i32_0 = arith.constant 0 : i32
    %c0_i32_1 = arith.constant 0 : i32
    return %c0_i32, %c0_i32_0 : i32, i32
  }
  func.func @transform_3(%arg0: i32) -> (i32, i32, i32) {
    %c0_i32 = arith.constant 0 : i32
    %c0_i32_0 = arith.constant 0 : i32
    %c0_i32_1 = arith.constant 0 : i32
    %c0_i32_2 = arith.constant 0 : i32
    return %c0_i32, %c0_i32_0, %c0_i32_1 : i32, i32, i32
  }
  func.func @transform_4(%arg0: i32) -> (i32, i32, i32) {
    %c0_i32 = arith.constant 0 : i32
    %c0_i32_0 = arith.constant 0 : i32
    %c0_i32_1 = arith.constant 0 : i32
    %c0_i32_2 = arith.constant 0 : i32
    return %c0_i32, %c0_i32_0, %c0_i32_1 : i32, i32, i32
  }
  func.func @transform_5(%arg0: i32) -> (i32, i32, i32) {
    %c0_i32 = arith.constant 0 : i32
    %c0_i32_0 = arith.constant 0 : i32
    %c0_i32_1 = arith.constant 0 : i32
    %c0_i32_2 = arith.constant 0 : i32
    return %c0_i32, %c0_i32_0, %c0_i32_1 : i32, i32, i32
  }
  func.func @transform_6(%arg0: i32) -> (i32, i32, i32) {
    %c0_i32 = arith.constant 0 : i32
    %c0_i32_0 = arith.constant 0 : i32
    %c0_i32_1 = arith.constant 0 : i32
    %c0_i32_2 = arith.constant 0 : i32
    return %c0_i32, %c0_i32_0, %c0_i32_1 : i32, i32, i32
  }
  func.func @transform_7(%arg0: i32) -> (i32, i32, i32) {
    %c0_i32 = arith.constant 0 : i32
    %c0_i32_0 = arith.constant 0 : i32
    %c0_i32_1 = arith.constant 0 : i32
    %c0_i32_2 = arith.constant 0 : i32
    return %c0_i32, %c0_i32_0, %c0_i32_1 : i32, i32, i32
  }
  func.func @transform_8(%arg0: i32) -> (i32, i32, i32) {
    %c0_i32 = arith.constant 0 : i32
    %c0_i32_0 = arith.constant 0 : i32
    %c0_i32_1 = arith.constant 0 : i32
    %c0_i32_2 = arith.constant 0 : i32
    return %c0_i32, %c0_i32_0, %c0_i32_1 : i32, i32, i32
  }
  func.func @transform_9(%arg0: i32) -> (i32, i32, i32) {
    %c0_i32 = arith.constant 0 : i32
    %c0_i32_0 = arith.constant 0 : i32
    %c0_i32_1 = arith.constant 0 : i32
    %c0_i32_2 = arith.constant 0 : i32
    return %c0_i32, %c0_i32_0, %c0_i32_1 : i32, i32, i32
  }
  func.func @transform_10(%arg0: i32) -> (i32, i32, i32) {
    %c0_i32 = arith.constant 0 : i32
    %c0_i32_0 = arith.constant 0 : i32
    %c0_i32_1 = arith.constant 0 : i32
    %c0_i32_2 = arith.constant 0 : i32
    return %c0_i32, %c0_i32_0, %c0_i32_1 : i32, i32, i32
  }
  func.func @transform_11(%arg0: i32) -> (i32, i32, i32) {
    %c0_i32 = arith.constant 0 : i32
    %c0_i32_0 = arith.constant 0 : i32
    %c0_i32_1 = arith.constant 0 : i32
    %c0_i32_2 = arith.constant 0 : i32
    return %c0_i32, %c0_i32_0, %c0_i32_1 : i32, i32, i32
  }
  func.func @transform_12(%arg0: i32) -> (i32, i32, i32) {
    %c0_i32 = arith.constant 0 : i32
    %c0_i32_0 = arith.constant 0 : i32
    %c0_i32_1 = arith.constant 0 : i32
    %c0_i32_2 = arith.constant 0 : i32
    return %c0_i32, %c0_i32_0, %c0_i32_1 : i32, i32, i32
  }
  func.func @transform_13(%arg0: i32) -> (i32, i32, i32) {
    %c0_i32 = arith.constant 0 : i32
    %c0_i32_0 = arith.constant 0 : i32
    %c0_i32_1 = arith.constant 0 : i32
    %c0_i32_2 = arith.constant 0 : i32
    return %c0_i32, %c0_i32_0, %c0_i32_1 : i32, i32, i32
  }
  func.func @transform_14(%arg0: i32) -> (i32, i32, i32) {
    %c0_i32 = arith.constant 0 : i32
    %c0_i32_0 = arith.constant 0 : i32
    %c0_i32_1 = arith.constant 0 : i32
    %c0_i32_2 = arith.constant 0 : i32
    return %c0_i32, %c0_i32_0, %c0_i32_1 : i32, i32, i32
  }
  func.func @transform_15(%arg0: i32) -> (i32, i32) {
    %c0_i32 = arith.constant 0 : i32
    %c0_i32_0 = arith.constant 0 : i32
    %c0_i32_1 = arith.constant 0 : i32
    return %c0_i32, %c0_i32_0 : i32, i32
  }
  func.func @transform_16(%arg0: i32) -> (i32, i32) {
    %c0_i32 = arith.constant 0 : i32
    %c0_i32_0 = arith.constant 0 : i32
    return %arg0, %c0_i32 : i32, i32
  }
}

</mosaic_0001>

<llo_original>
// kernel: gpt_forward.1
$region0: #{gpt_forward.1}
  #allocation0 [shape = 'u32[]', space=smem, size = 0x4, offset = 0x4, fixed_abs, tag = 'smem constant byte address 0x4 - core index']
  #allocation1 [shape = 'u32[144,128]{1,0:T(1,128)}', space=vmem, size = 0x12000, scoped, tag = 'internal scratch']
  %s0 = inlined_call_operand.vmem [shape: f32[16,32], index: 0, kind: input, shape index: {}]
  %s1 = inlined_call_operand.vmem [shape: f32[2,1,8], index: 1, kind: input, shape index: {}]
  %s2 = inlined_call_operand.vmem [shape: f32[8,32], index: 2, kind: input, shape index: {}]
  %s3 = inlined_call_operand.vmem [shape: f32[2,32,96], index: 3, kind: input, shape index: {}]
  %s4 = inlined_call_operand.vmem [shape: f32[2,1,96], index: 4, kind: input, shape index: {}]
  %s5 = inlined_call_operand.vmem [shape: f32[2,32,32], index: 5, kind: input, shape index: {}]
  %s6 = inlined_call_operand.vmem [shape: f32[2,1,32], index: 6, kind: input, shape index: {}]
  %s7 = inlined_call_operand.vmem [shape: f32[2,1,32], index: 7, kind: input, shape index: {}]
  %s8 = inlined_call_operand.vmem [shape: f32[2,1,32], index: 8, kind: input, shape index: {}]
  %s9 = inlined_call_operand.vmem [shape: f32[2,32,128], index: 9, kind: input, shape index: {}]
  %s10 = inlined_call_operand.vmem [shape: f32[2,1,128], index: 10, kind: input, shape index: {}]
  %s11 = inlined_call_operand.vmem [shape: f32[2,128,32], index: 11, kind: input, shape index: {}]
  %s12 = inlined_call_operand.vmem [shape: f32[2,1,32], index: 12, kind: input, shape index: {}]
  %s13 = inlined_call_operand.vmem [shape: f32[2,1,32], index: 13, kind: input, shape index: {}]
  %s14 = inlined_call_operand.vmem [shape: f32[2,1,32], index: 14, kind: input, shape index: {}]
  %s15 = inlined_call_operand.vmem [shape: f32[32,64], index: 15, kind: input, shape index: {}]
  %s16 = inlined_call_operand.vmem [shape: f32[16,128], index: 16, kind: output, shape index: {}]
  %s17 = sld [smem:[#allocation0]]
  $region74: #{gpt_forward.1} parent=0
    _
  %s19 = ssub.s32 1, %s17
  %s20 = scalar_select 0, %s19, %s17
  // Predicated region
  $region2: #{gpt_forward.1} parent=0 // pred_check
    _
  $region3: #{gpt_forward.1} parent=0 // pred_check_branch
    %22 = sbr.rel (0) target = $region5
  $region4: #{gpt_forward.1} parent=0 // pred_region
    _
  $region5: #{gpt_forward.1} parent=0 // pred_fallthru
    _
  // Predicated region
  $region6: #{gpt_forward.1} parent=0 // pred_check
    _
  $region7: #{gpt_forward.1} parent=0 // pred_check_branch
    %24 = sbr.rel (0) target = $region9
  $region8: #{gpt_forward.1} parent=0 // pred_region
    _
  $region9: #{gpt_forward.1} parent=0 // pred_fallthru
    _
  // Predicated region
  $region10: #{gpt_forward.1} parent=0 // pred_check
    _
  $region11: #{gpt_forward.1} parent=0 // pred_check_branch
    %26 = sbr.rel (0) target = $region13
  $region12: #{gpt_forward.1} parent=0 // pred_region
    _
  $region13: #{gpt_forward.1} parent=0 // pred_fallthru
    _
  // Predicated region
  $region14: #{gpt_forward.1} parent=0 // pred_check
    _
  $region15: #{gpt_forward.1} parent=0 // pred_check_branch
    %28 = sbr.rel (0) target = $region17
  $region16: #{gpt_forward.1} parent=0 // pred_region
    _
  $region17: #{gpt_forward.1} parent=0 // pred_fallthru
    _
  // Predicated region
  $region18: #{gpt_forward.1} parent=0 // pred_check
    _
  $region19: #{gpt_forward.1} parent=0 // pred_check_branch
    %30 = sbr.rel (0) target = $region21
  $region20: #{gpt_forward.1} parent=0 // pred_region
    _
  $region21: #{gpt_forward.1} parent=0 // pred_fallthru
    _
  // Predicated region
  $region22: #{gpt_forward.1} parent=0 // pred_check
    _
  $region23: #{gpt_forward.1} parent=0 // pred_check_branch
    %32 = sbr.rel (0) target = $region25
  $region24: #{gpt_forward.1} parent=0 // pred_region
    _
  $region25: #{gpt_forward.1} parent=0 // pred_fallthru
    _
  // Predicated region
  $region26: #{gpt_forward.1} parent=0 // pred_check
    _
  $region27: #{gpt_forward.1} parent=0 // pred_check_branch
    %34 = sbr.rel (0) target = $region29
  $region28: #{gpt_forward.1} parent=0 // pred_region
    _
  $region29: #{gpt_forward.1} parent=0 // pred_fallthru
    _
  // Predicated region
  $region30: #{gpt_forward.1} parent=0 // pred_check
    _
  $region31: #{gpt_forward.1} parent=0 // pred_check_branch
    %36 = sbr.rel (0) target = $region33
  $region32: #{gpt_forward.1} parent=0 // pred_region
    _
  $region33: #{gpt_forward.1} parent=0 // pred_fallthru
    _
  // Predicated region
  $region34: #{gpt_forward.1} parent=0 // pred_check
    _
  $region35: #{gpt_forward.1} parent=0 // pred_check_branch
    %38 = sbr.rel (0) target = $region37
  $region36: #{gpt_forward.1} parent=0 // pred_region
    _
  $region37: #{gpt_forward.1} parent=0 // pred_fallthru
    _
  // Predicated region
  $region38: #{gpt_forward.1} parent=0 // pred_check
    _
  $region39: #{gpt_forward.1} parent=0 // pred_check_branch
    %40 = sbr.rel (0) target = $region41
  $region40: #{gpt_forward.1} parent=0 // pred_region
    _
  $region41: #{gpt_forward.1} parent=0 // pred_fallthru
    _
  // Predicated region
  $region42: #{gpt_forward.1} parent=0 // pred_check
    _
  $region43: #{gpt_forward.1} parent=0 // pred_check_branch
    %42 = sbr.rel (0) target = $region45
  $region44: #{gpt_forward.1} parent=0 // pred_region
    _
  $region45: #{gpt_forward.1} parent=0 // pred_fallthru
    _
  // Predicated region
  $region46: #{gpt_forward.1} parent=0 // pred_check
    _
  $region47: #{gpt_forward.1} parent=0 // pred_check_branch
    %44 = sbr.rel (0) target = $region49
  $region48: #{gpt_forward.1} parent=0 // pred_region
    _
  $region49: #{gpt_forward.1} parent=0 // pred_fallthru
    _
  // Predicated region
  $region50: #{gpt_forward.1} parent=0 // pred_check
    _
  $region51: #{gpt_forward.1} parent=0 // pred_check_branch
    %46 = sbr.rel (0) target = $region53
  $region52: #{gpt_forward.1} parent=0 // pred_region
    _
  $region53: #{gpt_forward.1} parent=0 // pred_fallthru
    _
  // Predicated region
  $region54: #{gpt_forward.1} parent=0 // pred_check
    _
  $region55: #{gpt_forward.1} parent=0 // pred_check_branch
    %48 = sbr.rel (0) target = $region57
  $region56: #{gpt_forward.1} parent=0 // pred_region
    _
  $region57: #{gpt_forward.1} parent=0 // pred_fallthru
    _
  // Predicated region
  $region58: #{gpt_forward.1} parent=0 // pred_check
    _
  $region59: #{gpt_forward.1} parent=0 // pred_check_branch
    %50 = sbr.rel (0) target = $region61
  $region60: #{gpt_forward.1} parent=0 // pred_region
    _
  $region61: #{gpt_forward.1} parent=0 // pred_fallthru
    _
  // Predicated region
  $region62: #{gpt_forward.1} parent=0 // pred_check
    _
  $region63: #{gpt_forward.1} parent=0 // pred_check_branch
    %52 = sbr.rel (0) target = $region65
  $region64: #{gpt_forward.1} parent=0 // pred_region
    _
  $region65: #{gpt_forward.1} parent=0 // pred_fallthru
    _
  %v53 = vld [vmem:[%s2] sm:$0xff]
  %v54 = vld [vmem:[%s0] sm:$0xff]
  %v55 = vld [vmem:[%s0 + $0x8] sm:$0xff]
  %v56 = vadd.f32 %v54, %v53
  %v57 = vadd.f32 %v55, %v53
  %v58 = vlaneseq
  %v59 = vshrl.u32 %v58, 7
  %v60 = vlaneseq
  %v61 = vand.u32 %v60, 127
  %vm62 = vcmp.le.s32.totalorder %v61, %v59
  %v63 = vsel %vm62, 1, 0
  %v64 = vcvt.s32.f32 %v63
  %v65 = vld [vmem:[%s1] sm:$0x1]
  %v66 = vld [vmem:[%s1 + $0x1] sm:$0x1]
  %v68 = vlaneseq
  %v69 = vshrl.u32 %v68, 7
  %v70 = vsub.s32 0, %v69
  %v71 = vrot.slane %v65, %v70
  %v73 = vmul.f32 %v64, %v71
  %v74 = vsub.f32 1.0, %v73
  %v75 = vmul.f32 %v74, -1e+09
  %v77 = vlaneseq
  %v78 = vshrl.u32 %v77, 7
  %v79 = vsub.s32 0, %v78
  %v80 = vrot.slane %v66, %v79
  %v82 = vmul.f32 %v64, %v80
  %v83 = vsub.f32 1.0, %v82
  %v84 = vmul.f32 %v83, -1e+09
  %v85 = vld [vmem:[%s3] sm:$0xff]
  %v86 = vld [vmem:[%s3 + $0x8] sm:$0xff]
  %v87 = vld [vmem:[%s3 + $0x10] sm:$0xff]
  %v88 = vld [vmem:[%s3 + $0x18] sm:$0xff]
  %v89 = vld [vmem:[%s4] sm:$0x1]
  %v91 = vlaneseq
  %v92 = vshrl.u32 %v91, 7
  %v93 = vsub.s32 0, %v92
  %v94 = vrot.slane %v89, %v93
  %vm96 = vcmask 261120
  %v98 = vsel %vm96, %v56, 0
  %v101 = vsel %vm96, %v57, 0
  %103 = vmatprep.subr.mxu0 0.0
  %104 = vmatpush1.msra.mxu0 %v85
  %105 = vmatprep.subr.mxu0 0.0
  %106 = vmatpush1.msra.mxu0 %v86
  %107 = vmatprep.subr.mxu0 0.0
  %108 = vmatpush1.msra.mxu0 %v87
  %109 = vmatprep.subr.mxu0 0.0
  %110 = vmatpush1.msra.mxu0 %v88
  %111 = vmatprep.subr.mxu0 0.0
  %112 = vmatpush1.msra.mxu0 0.0
  %113 = vmatprep.subr.mxu0 0.0
  %114 = vmatpush1.msra.mxu0 0.0
  %115 = vmatprep.subr.mxu0 0.0
  %116 = vmatpush1.msra.mxu0 0.0
  %117 = vmatprep.subr.mxu0 0.0
  %118 = vmatpush1.msra.mxu0 0.0
  %119 = vmatprep.subr.mxu0 0.0
  %120 = vmatpush1.msra.mxu0 0.0
  %121 = vmatprep.subr.mxu0 0.0
  %122 = vmatpush1.msra.mxu0 0.0
  %123 = vmatprep.subr.mxu0 0.0
  %124 = vmatpush1.msra.mxu0 0.0
  %125 = vmatprep.subr.mxu0 0.0
  %126 = vmatpush1.msra.mxu0 0.0
  %127 = vmatprep.subr.mxu0 0.0
  %128 = vmatpush1.msra.mxu0 0.0
  %129 = vmatprep.subr.mxu0 0.0
  %130 = vmatpush1.msra.mxu0 0.0
  %131 = vmatprep.subr.mxu0 0.0
  %132 = vmatpush1.msra.mxu0 0.0
  %133 = vmatprep.subr.mxu0 0.0
  %134 = vmatpush1.msra.mxu0 0.0
  %135 = vmatprep.subr.mxu0 0.0
  %136 = vmatpush1.msra.mxu0 0.0
  %137 = vmatprep.subr.mxu0 0.0
  %138 = vmatpush1.msra.mxu0 0.0
  %139 = vmatprep.subr.mxu0 0.0
  %140 = vmatpush1.msra.mxu0 0.0
  %141 = vmatprep.subr.mxu0 0.0
  %142 = vmatpush1.msra.mxu0 0.0
  %143 = vmatprep.subr.mxu0 0.0
  %144 = vmatpush1.msra.mxu0 0.0
  %145 = vmatprep.subr.mxu0 0.0
  %146 = vmatpush1.msra.mxu0 0.0
  %147 = vmatprep.subr.mxu0 0.0
  %148 = vmatpush1.msra.mxu0 0.0
  %149 = vmatprep.subr.mxu0 0.0
  %150 = vmatpush1.msra.mxu0 0.0
  %151 = vmatprep.subr.mxu0 0.0
  %152 = vmatpush1.msra.mxu0 0.0
  %153 = vmatprep.subr.mxu0 0.0
  %154 = vmatpush1.msra.mxu0 0.0
  %155 = vmatprep.subr.mxu0 0.0
  %156 = vmatpush1.msra.mxu0 0.0
  %157 = vmatprep.subr.mxu0 0.0
  %158 = vmatpush1.msra.mxu0 0.0
  %159 = vmatprep.subr.mxu0 0.0
  %160 = vmatpush1.msra.mxu0 0.0
  %161 = vmatprep.subr.mxu0 0.0
  %162 = vmatpush1.msra.mxu0 0.0
  %163 = vmatprep.subr.mxu0 0.0
  %164 = vmatpush1.msra.mxu0 0.0
  %165 = vmatprep.subr.mxu0 0.0
  %166 = vmatpush1.msra.mxu0 0.0
  %167 = vmatprep.mubr.f32.mxu0 0.0
  %168 = vmatmul.mubr.f32.gmra.mrb[0].mxu0 %v98
  %v169 = vpop.f32.mrb[0].mxu0
  %v170 = vadd.f32 %v94, %v169
  %v171 = vpop.f32.mrb[0].mxu0
  %172 = vmatprep.mubr.f32.mxu0 0.0
  %173 = vmatmul.mubr.f32.gmra.mrb[0].mxu0 %v101
  %v174 = vpop.f32.mrb[0].mxu0
  %v175 = vadd.f32 %v94, %v174
  %v176 = vpop.f32.mrb[0].mxu0
  %177 = vdwg.mxu0
  %179 = vrot.lane.b32.xlu0 %v170, 120
  %v180 = vpop.permute.xlu0 %179
  %181 = vrot.lane.b32.xlu0 %v170, 112
  %v182 = vpop.permute.xlu0 %181
  %183 = vrot.lane.b32.xlu0 %v170, 104
  %v184 = vpop.permute.xlu0 %183
  %185 = vrot.lane.b32.xlu0 %v170, 96
  %v186 = vpop.permute.xlu0 %185
  %vm187 = vcmask 64512
  %v188 = vsel %vm187, %v170, 0
  %v190 = vsel %vm187, %v186, 0
  %192 = vmatprep.subr.mxu0 0.0
  %193 = vmatpush1.xpose.msra.mxu0 %v190
  %194 = vmatprep.subr.mxu0 0.0
  %195 = vmatpush1.xpose.msra.mxu0 0.0
  %196 = vmatprep.subr.mxu0 0.0
  %197 = vmatpush1.xpose.msra.mxu0 0.0
  %198 = vmatprep.subr.mxu0 0.0
  %199 = vmatpush1.xpose.msra.mxu0 0.0
  %200 = vmatprep.subr.mxu0 0.0
  %201 = vmatpush1.xpose.msra.mxu0 0.0
  %202 = vmatprep.subr.mxu0 0.0
  %203 = vmatpush1.xpose.msra.mxu0 0.0
  %204 = vmatprep.subr.mxu0 0.0
  %205 = vmatpush1.xpose.msra.mxu0 0.0
  %206 = vmatprep.subr.mxu0 0.0
  %207 = vmatpush1.xpose.msra.mxu0 0.0
  %208 = vmatprep.subr.mxu0 0.0
  %209 = vmatpush1.xpose.msra.mxu0 0.0
  %210 = vmatprep.subr.mxu0 0.0
  %211 = vmatpush1.xpose.msra.mxu0 0.0
  %212 = vmatprep.subr.mxu0 0.0
  %213 = vmatpush1.xpose.msra.mxu0 0.0
  %214 = vmatprep.subr.mxu0 0.0
  %215 = vmatpush1.xpose.msra.mxu0 0.0
  %216 = vmatprep.subr.mxu0 0.0
  %217 = vmatpush1.xpose.msra.mxu0 0.0
  %218 = vmatprep.subr.mxu0 0.0
  %219 = vmatpush1.xpose.msra.mxu0 0.0
  %220 = vmatprep.subr.mxu0 0.0
  %221 = vmatpush1.xpose.msra.mxu0 0.0
  %222 = vmatprep.subr.mxu0 0.0
  %223 = vmatpush1.xpose.msra.mxu0 0.0
  %224 = vmatprep.subr.mxu0 0.0
  %225 = vmatpush1.xpose.msra.mxu0 0.0
  %226 = vmatprep.subr.mxu0 0.0
  %227 = vmatpush1.xpose.msra.mxu0 0.0
  %228 = vmatprep.subr.mxu0 0.0
  %229 = vmatpush1.xpose.msra.mxu0 0.0
  %230 = vmatprep.subr.mxu0 0.0
  %231 = vmatpush1.xpose.msra.mxu0 0.0
  %232 = vmatprep.subr.mxu0 0.0
  %233 = vmatpush1.xpose.msra.mxu0 0.0
  %234 = vmatprep.subr.mxu0 0.0
  %235 = vmatpush1.xpose.msra.mxu0 0.0
  %236 = vmatprep.subr.mxu0 0.0
  %237 = vmatpush1.xpose.msra.mxu0 0.0
  %238 = vmatprep.subr.mxu0 0.0
  %239 = vmatpush1.xpose.msra.mxu0 0.0
  %240 = vmatprep.subr.mxu0 0.0
  %241 = vmatpush1.xpose.msra.mxu0 0.0
  %242 = vmatprep.subr.mxu0 0.0
  %243 = vmatpush1.xpose.msra.mxu0 0.0
  %244 = vmatprep.subr.mxu0 0.0
  %245 = vmatpush1.xpose.msra.mxu0 0.0
  %246 = vmatprep.subr.mxu0 0.0
  %247 = vmatpush1.xpose.msra.mxu0 0.0
  %248 = vmatprep.subr.mxu0 0.0
  %249 = vmatpush1.xpose.msra.mxu0 0.0
  %250 = vmatprep.subr.mxu0 0.0
  %251 = vmatpush1.xpose.msra.mxu0 0.0
  %252 = vmatprep.subr.mxu0 0.0
  %253 = vmatpush1.xpose.msra.mxu0 0.0
  %254 = vmatprep.subr.mxu0 0.0
  %255 = vmatpush1.xpose.msra.mxu0 0.0
  %256 = vmatprep.mubr.f32.mxu0 0.0
  %257 = vmatmul.mubr.f32.gmra.mrb[0].mxu0 %v188
  %v258 = vpop.f32.mrb[0].mxu0
  %v259 = vadd.f32 0.0, %v258
  %v260 = vpop.f32.mrb[0].mxu0
  %261 = vdwg.mxu0
  %262 = vrot.lane.b32.xlu0 %v180, 96
  %v263 = vpop.permute.xlu0 %262
  %v264 = vsel %vm187, %v180, 0
  %v266 = vsel %vm187, %v263, 0
  %268 = vmatprep.subr.mxu0 0.0
  %269 = vmatpush1.xpose.msra.mxu0 %v266
  %270 = vmatprep.subr.mxu0 0.0
  %271 = vmatpush1.xpose.msra.mxu0 0.0
  %272 = vmatprep.subr.mxu0 0.0
  %273 = vmatpush1.xpose.msra.mxu0 0.0
  %274 = vmatprep.subr.mxu0 0.0
  %275 = vmatpush1.xpose.msra.mxu0 0.0
  %276 = vmatprep.subr.mxu0 0.0
  %277 = vmatpush1.xpose.msra.mxu0 0.0
  %278 = vmatprep.subr.mxu0 0.0
  %279 = vmatpush1.xpose.msra.mxu0 0.0
  %280 = vmatprep.subr.mxu0 0.0
  %281 = vmatpush1.xpose.msra.mxu0 0.0
  %282 = vmatprep.subr.mxu0 0.0
  %283 = vmatpush1.xpose.msra.mxu0 0.0
  %284 = vmatprep.subr.mxu0 0.0
  %285 = vmatpush1.xpose.msra.mxu0 0.0
  %286 = vmatprep.subr.mxu0 0.0
  %287 = vmatpush1.xpose.msra.mxu0 0.0
  %288 = vmatprep.subr.mxu0 0.0
  %289 = vmatpush1.xpose.msra.mxu0 0.0
  %290 = vmatprep.subr.mxu0 0.0
  %291 = vmatpush1.xpose.msra.mxu0 0.0
  %292 = vmatprep.subr.mxu0 0.0
  %293 = vmatpush1.xpose.msra.mxu0 0.0
  %294 = vmatprep.subr.mxu0 0.0
  %295 = vmatpush1.xpose.msra.mxu0 0.0
  %296 = vmatprep.subr.mxu0 0.0
  %297 = vmatpush1.xpose.msra.mxu0 0.0
  %298 = vmatprep.subr.mxu0 0.0
  %299 = vmatpush1.xpose.msra.mxu0 0.0
  %300 = vmatprep.subr.mxu0 0.0
  %301 = vmatpush1.xpose.msra.mxu0 0.0
  %302 = vmatprep.subr.mxu0 0.0
  %303 = vmatpush1.xpose.msra.mxu0 0.0
  %304 = vmatprep.subr.mxu0 0.0
  %305 = vmatpush1.xpose.msra.mxu0 0.0
  %306 = vmatprep.subr.mxu0 0.0
  %307 = vmatpush1.xpose.msra.mxu0 0.0
  %308 = vmatprep.subr.mxu0 0.0
  %309 = vmatpush1.xpose.msra.mxu0 0.0
  %310 = vmatprep.subr.mxu0 0.0
  %311 = vmatpush1.xpose.msra.mxu0 0.0
  %312 = vmatprep.subr.mxu0 0.0
  %313 = vmatpush1.xpose.msra.mxu0 0.0
  %314 = vmatprep.subr.mxu0 0.0
  %315 = vmatpush1.xpose.msra.mxu0 0.0
  %316 = vmatprep.subr.mxu0 0.0
  %317 = vmatpush1.xpose.msra.mxu0 0.0
  %318 = vmatprep.subr.mxu0 0.0
  %319 = vmatpush1.xpose.msra.mxu0 0.0
  %320 = vmatprep.subr.mxu0 0.0
  %321 = vmatpush1.xpose.msra.mxu0 0.0
  %322 = vmatprep.subr.mxu0 0.0
  %323 = vmatpush1.xpose.msra.mxu0 0.0
  %324 = vmatprep.subr.mxu0 0.0
  %325 = vmatpush1.xpose.msra.mxu0 0.0
  %326 = vmatprep.subr.mxu0 0.0
  %327 = vmatpush1.xpose.msra.mxu0 0.0
  %328 = vmatprep.subr.mxu0 0.0
  %329 = vmatpush1.xpose.msra.mxu0 0.0
  %330 = vmatprep.subr.mxu0 0.0
  %331 = vmatpush1.xpose.msra.mxu0 0.0
  %332 = vmatprep.mubr.f32.mxu0 0.0
  %333 = vmatmul.mubr.f32.gmra.mrb[0].mxu0 %v264
  %v334 = vpop.f32.mrb[0].mxu0
  %v335 = vadd.f32 0.0, %v334
  %v336 = vpop.f32.mrb[0].mxu0
  %337 = vdwg.mxu0
  %338 = vrot.lane.b32.xlu0 %v182, 96
  %v339 = vpop.permute.xlu0 %338
  %v340 = vsel %vm187, %v182, 0
  %v342 = vsel %vm187, %v339, 0
  %344 = vmatprep.subr.mxu0 0.0
  %345 = vmatpush1.xpose.msra.mxu0 %v342
  %346 = vmatprep.subr.mxu0 0.0
  %347 = vmatpush1.xpose.msra.mxu0 0.0
  %348 = vmatprep.subr.mxu0 0.0
  %349 = vmatpush1.xpose.msra.mxu0 0.0
  %350 = vmatprep.subr.mxu0 0.0
  %351 = vmatpush1.xpose.msra.mxu0 0.0
  %352 = vmatprep.subr.mxu0 0.0
  %353 = vmatpush1.xpose.msra.mxu0 0.0
  %354 = vmatprep.subr.mxu0 0.0
  %355 = vmatpush1.xpose.msra.mxu0 0.0
  %356 = vmatprep.subr.mxu0 0.0
  %357 = vmatpush1.xpose.msra.mxu0 0.0
  %358 = vmatprep.subr.mxu0 0.0
  %359 = vmatpush1.xpose.msra.mxu0 0.0
  %360 = vmatprep.subr.mxu0 0.0
  %361 = vmatpush1.xpose.msra.mxu0 0.0
  %362 = vmatprep.subr.mxu0 0.0
  %363 = vmatpush1.xpose.msra.mxu0 0.0
  %364 = vmatprep.subr.mxu0 0.0
  %365 = vmatpush1.xpose.msra.mxu0 0.0
  %366 = vmatprep.subr.mxu0 0.0
  %367 = vmatpush1.xpose.msra.mxu0 0.0
  %368 = vmatprep.subr.mxu0 0.0
  %369 = vmatpush1.xpose.msra.mxu0 0.0
  %370 = vmatprep.subr.mxu0 0.0
  %371 = vmatpush1.xpose.msra.mxu0 0.0
  %372 = vmatprep.subr.mxu0 0.0
  %373 = vmatpush1.xpose.msra.mxu0 0.0
  %374 = vmatprep.subr.mxu0 0.0
  %375 = vmatpush1.xpose.msra.mxu0 0.0
  %376 = vmatprep.subr.mxu0 0.0
  %377 = vmatpush1.xpose.msra.mxu0 0.0
  %378 = vmatprep.subr.mxu0 0.0
  %379 = vmatpush1.xpose.msra.mxu0 0.0
  %380 = vmatprep.subr.mxu0 0.0
  %381 = vmatpush1.xpose.msra.mxu0 0.0
  %382 = vmatprep.subr.mxu0 0.0
  %383 = vmatpush1.xpose.msra.mxu0 0.0
  %384 = vmatprep.subr.mxu0 0.0
  %385 = vmatpush1.xpose.msra.mxu0 0.0
  %386 = vmatprep.subr.mxu0 0.0
  %387 = vmatpush1.xpose.msra.mxu0 0.0
  %388 = vmatprep.subr.mxu0 0.0
  %389 = vmatpush1.xpose.msra.mxu0 0.0
  %390 = vmatprep.subr.mxu0 0.0
  %391 = vmatpush1.xpose.msra.mxu0 0.0
  %392 = vmatprep.subr.mxu0 0.0
  %393 = vmatpush1.xpose.msra.mxu0 0.0
  %394 = vmatprep.subr.mxu0 0.0
  %395 = vmatpush1.xpose.msra.mxu0 0.0
  %396 = vmatprep.subr.mxu0 0.0
  %397 = vmatpush1.xpose.msra.mxu0 0.0
  %398 = vmatprep.subr.mxu0 0.0
  %399 = vmatpush1.xpose.msra.mxu0 0.0
  %400 = vmatprep.subr.mxu0 0.0
  %401 = vmatpush1.xpose.msra.mxu0 0.0
  %402 = vmatprep.subr.mxu0 0.0
  %403 = vmatpush1.xpose.msra.mxu0 0.0
  %404 = vmatprep.subr.mxu0 0.0
  %405 = vmatpush1.xpose.msra.mxu0 0.0
  %406 = vmatprep.subr.mxu0 0.0
  %407 = vmatpush1.xpose.msra.mxu0 0.0
  %408 = vmatprep.mubr.f32.mxu0 0.0
  %409 = vmatmul.mubr.f32.gmra.mrb[0].mxu0 %v340
  %v410 = vpop.f32.mrb[0].mxu0
  %v411 = vadd.f32 0.0, %v410
  %v412 = vpop.f32.mrb[0].mxu0
  %413 = vdwg.mxu0
  %414 = vrot.lane.b32.xlu0 %v184, 96
  %v415 = vpop.permute.xlu0 %414
  %v416 = vsel %vm187, %v184, 0
  %v418 = vsel %vm187, %v415, 0
  %420 = vmatprep.subr.mxu0 0.0
  %421 = vmatpush1.xpose.msra.mxu0 %v418
  %422 = vmatprep.subr.mxu0 0.0
  %423 = vmatpush1.xpose.msra.mxu0 0.0
  %424 = vmatprep.subr.mxu0 0.0
  %425 = vmatpush1.xpose.msra.mxu0 0.0
  %426 = vmatprep.subr.mxu0 0.0
  %427 = vmatpush1.xpose.msra.mxu0 0.0
  %428 = vmatprep.subr.mxu0 0.0
  %429 = vmatpush1.xpose.msra.mxu0 0.0
  %430 = vmatprep.subr.mxu0 0.0
  %431 = vmatpush1.xpose.msra.mxu0 0.0
  %432 = vmatprep.subr.mxu0 0.0
  %433 = vmatpush1.xpose.msra.mxu0 0.0
  %434 = vmatprep.subr.mxu0 0.0
  %435 = vmatpush1.xpose.msra.mxu0 0.0
  %436 = vmatprep.subr.mxu0 0.0
  %437 = vmatpush1.xpose.msra.mxu0 0.0
  %438 = vmatprep.subr.mxu0 0.0
  %439 = vmatpush1.xpose.msra.mxu0 0.0
  %440 = vmatprep.subr.mxu0 0.0
  %441 = vmatpush1.xpose.msra.mxu0 0.0
  %442 = vmatprep.subr.mxu0 0.0
  %443 = vmatpush1.xpose.msra.mxu0 0.0
  %444 = vmatprep.subr.mxu0 0.0
  %445 = vmatpush1.xpose.msra.mxu0 0.0
  %446 = vmatprep.subr.mxu0 0.0
  %447 = vmatpush1.xpose.msra.mxu0 0.0
  %448 = vmatprep.subr.mxu0 0.0
  %449 = vmatpush1.xpose.msra.mxu0 0.0
  %450 = vmatprep.subr.mxu0 0.0
  %451 = vmatpush1.xpose.msra.mxu0 0.0
  %452 = vmatprep.subr.mxu0 0.0
  %453 = vmatpush1.xpose.msra.mxu0 0.0
  %454 = vmatprep.subr.mxu0 0.0
  %455 = vmatpush1.xpose.msra.mxu0 0.0
  %456 = vmatprep.subr.mxu0 0.0
  %457 = vmatpush1.xpose.msra.mxu0 0.0
  %458 = vmatprep.subr.mxu0 0.0
  %459 = vmatpush1.xpose.msra.mxu0 0.0
  %460 = vmatprep.subr.mxu0 0.0
  %461 = vmatpush1.xpose.msra.mxu0 0.0
  %462 = vmatprep.subr.mxu0 0.0
  %463 = vmatpush1.xpose.msra.mxu0 0.0
  %464 = vmatprep.subr.mxu0 0.0
  %465 = vmatpush1.xpose.msra.mxu0 0.0
  %466 = vmatprep.subr.mxu0 0.0
  %467 = vmatpush1.xpose.msra.mxu0 0.0
  %468 = vmatprep.subr.mxu0 0.0
  %469 = vmatpush1.xpose.msra.mxu0 0.0
  %470 = vmatprep.subr.mxu0 0.0
  %471 = vmatpush1.xpose.msra.mxu0 0.0
  %472 = vmatprep.subr.mxu0 0.0
  %473 = vmatpush1.xpose.msra.mxu0 0.0
  %474 = vmatprep.subr.mxu0 0.0
  %475 = vmatpush1.xpose.msra.mxu0 0.0
  %476 = vmatprep.subr.mxu0 0.0
  %477 = vmatpush1.xpose.msra.mxu0 0.0
  %478 = vmatprep.subr.mxu0 0.0
  %479 = vmatpush1.xpose.msra.mxu0 0.0
  %480 = vmatprep.subr.mxu0 0.0
  %481 = vmatpush1.xpose.msra.mxu0 0.0
  %482 = vmatprep.subr.mxu0 0.0
  %483 = vmatpush1.xpose.msra.mxu0 0.0
  %484 = vmatprep.mubr.f32.mxu0 0.0
  %485 = vmatmul.mubr.f32.gmra.mrb[0].mxu0 %v416
  %v486 = vpop.f32.mrb[0].mxu0
  %v487 = vadd.f32 0.0, %v486
  %v488 = vpop.f32.mrb[0].mxu0
  %489 = vdwg.mxu0
  %v490 = vmul.f32 %v259, 0.35355338
  %v491 = vmul.f32 %v335, 0.35355338
  %v492 = vmul.f32 %v411, 0.35355338
  %v493 = vmul.f32 %v487, 0.35355338
  %v494 = vadd.f32 %v490, %v75
  %v495 = vadd.f32 %v491, %v75
  %v496 = vadd.f32 %v492, %v75
  %v497 = vadd.f32 %v493, %v75
  %v498 = vsel %vm187, %v494, -inf
  %499 = vmax.xlane.f32.xlu0 %v498
  %v500 = vpop.xlane.xlu0 %499
  %v501 = vsel %vm187, %v495, -inf
  %502 = vmax.xlane.f32.xlu0 %v501
  %v503 = vpop.xlane.xlu0 %502
  %v504 = vsel %vm187, %v496, -inf
  %505 = vmax.xlane.f32.xlu0 %v504
  %v506 = vpop.xlane.xlu0 %505
  %v507 = vsel %vm187, %v497, -inf
  %508 = vmax.xlane.f32.xlu0 %v507
  %v509 = vpop.xlane.xlu0 %508
  %v510 = vsub.f32 %v494, %v500
  %v511 = vsub.f32 %v495, %v503
  %v512 = vsub.f32 %v496, %v506
  %v513 = vsub.f32 %v497, %v509
  %v514 = vmul.f32 %v510, 1.442695
  %v515 = vpow.pop %v514
  %v516 = vmul.f32 %v511, 1.442695
  %v517 = vpow.pop %v516
  %v518 = vmul.f32 %v512, 1.442695
  %v519 = vpow.pop %v518
  %v520 = vmul.f32 %v513, 1.442695
  %v521 = vpow.pop %v520
  %v522 = vsel %vm187, %v515, 0.0
  %523 = vadd.xlane.f32.xlu0 %v522
  %v524 = vpop.xlane.xlu0 %523
  %v525 = vsel %vm187, %v517, 0.0
  %526 = vadd.xlane.f32.xlu0 %v525
  %v527 = vpop.xlane.xlu0 %526
  %v528 = vsel %vm187, %v519, 0.0
  %529 = vadd.xlane.f32.xlu0 %v528
  %v530 = vpop.xlane.xlu0 %529
  %v531 = vsel %vm187, %v521, 0.0
  %532 = vadd.xlane.f32.xlu0 %v531
  %v533 = vpop.xlane.xlu0 %532
  %v534 = vrcp.pop %v524
  %v535 = vmul.f32 %v515, %v534
  %v536 = vrcp.pop %v527
  %v537 = vmul.f32 %v517, %v536
  %v538 = vrcp.pop %v530
  %v539 = vmul.f32 %v519, %v538
  %v540 = vrcp.pop %v533
  %v541 = vmul.f32 %v521, %v540
  %542 = vrot.lane.b32.xlu0 %v170, 64
  %v543 = vpop.permute.xlu0 %542
  %v546 = vsel %vm187, %v535, 0
  %548 = vmatprep.subr.mxu0 0.0
  %549 = vmatpush1.msra.mxu0 %v543
  %550 = vmatprep.subr.mxu0 0.0
  %551 = vmatpush1.msra.mxu0 0.0
  %552 = vmatprep.subr.mxu0 0.0
  %553 = vmatpush1.msra.mxu0 0.0
  %554 = vmatprep.subr.mxu0 0.0
  %555 = vmatpush1.msra.mxu0 0.0
  %556 = vmatprep.subr.mxu0 0.0
  %557 = vmatpush1.msra.mxu0 0.0
  %558 = vmatprep.subr.mxu0 0.0
  %559 = vmatpush1.msra.mxu0 0.0
  %560 = vmatprep.subr.mxu0 0.0
  %561 = vmatpush1.msra.mxu0 0.0
  %562 = vmatprep.subr.mxu0 0.0
  %563 = vmatpush1.msra.mxu0 0.0
  %564 = vmatprep.subr.mxu0 0.0
  %565 = vmatpush1.msra.mxu0 0.0
  %566 = vmatprep.subr.mxu0 0.0
  %567 = vmatpush1.msra.mxu0 0.0
  %568 = vmatprep.subr.mxu0 0.0
  %569 = vmatpush1.msra.mxu0 0.0
  %570 = vmatprep.subr.mxu0 0.0
  %571 = vmatpush1.msra.mxu0 0.0
  %572 = vmatprep.subr.mxu0 0.0
  %573 = vmatpush1.msra.mxu0 0.0
  %574 = vmatprep.subr.mxu0 0.0
  %575 = vmatpush1.msra.mxu0 0.0
  %576 = vmatprep.subr.mxu0 0.0
  %577 = vmatpush1.msra.mxu0 0.0
  %578 = vmatprep.subr.mxu0 0.0
  %579 = vmatpush1.msra.mxu0 0.0
  %580 = vmatprep.subr.mxu0 0.0
  %581 = vmatpush1.msra.mxu0 0.0
  %582 = vmatprep.subr.mxu0 0.0
  %583 = vmatpush1.msra.mxu0 0.0
  %584 = vmatprep.subr.mxu0 0.0
  %585 = vmatpush1.msra.mxu0 0.0
  %586 = vmatprep.subr.mxu0 0.0
  %587 = vmatpush1.msra.mxu0 0.0
  %588 = vmatprep.subr.mxu0 0.0
  %589 = vmatpush1.msra.mxu0 0.0
  %590 = vmatprep.subr.mxu0 0.0
  %591 = vmatpush1.msra.mxu0 0.0
  %592 = vmatprep.subr.mxu0 0.0
  %593 = vmatpush1.msra.mxu0 0.0
  %594 = vmatprep.subr.mxu0 0.0
  %595 = vmatpush1.msra.mxu0 0.0
  %596 = vmatprep.subr.mxu0 0.0
  %597 = vmatpush1.msra.mxu0 0.0
  %598 = vmatprep.subr.mxu0 0.0
  %599 = vmatpush1.msra.mxu0 0.0
  %600 = vmatprep.subr.mxu0 0.0
  %601 = vmatpush1.msra.mxu0 0.0
  %602 = vmatprep.subr.mxu0 0.0
  %603 = vmatpush1.msra.mxu0 0.0
  %604 = vmatprep.subr.mxu0 0.0
  %605 = vmatpush1.msra.mxu0 0.0
  %606 = vmatprep.subr.mxu0 0.0
  %607 = vmatpush1.msra.mxu0 0.0
  %608 = vmatprep.subr.mxu0 0.0
  %609 = vmatpush1.msra.mxu0 0.0
  %610 = vmatprep.subr.mxu0 0.0
  %611 = vmatpush1.msra.mxu0 0.0
  %612 = vmatprep.mubr.f32.mxu0 0.0
  %613 = vmatmul.mubr.f32.gmra.mrb[0].mxu0 %v546
  %v614 = vpop.f32.mrb[0].mxu0
  %v615 = vadd.f32 0.0, %v614
  %v616 = vpop.f32.mrb[0].mxu0
  %617 = vdwg.mxu0
  %618 = vrot.lane.b32.xlu0 %v180, 64
  %v619 = vpop.permute.xlu0 %618
  %v622 = vsel %vm187, %v537, 0
  %624 = vmatprep.subr.mxu0 0.0
  %625 = vmatpush1.msra.mxu0 %v619
  %626 = vmatprep.subr.mxu0 0.0
  %627 = vmatpush1.msra.mxu0 0.0
  %628 = vmatprep.subr.mxu0 0.0
  %629 = vmatpush1.msra.mxu0 0.0
  %630 = vmatprep.subr.mxu0 0.0
  %631 = vmatpush1.msra.mxu0 0.0
  %632 = vmatprep.subr.mxu0 0.0
  %633 = vmatpush1.msra.mxu0 0.0
  %634 = vmatprep.subr.mxu0 0.0
  %635 = vmatpush1.msra.mxu0 0.0
  %636 = vmatprep.subr.mxu0 0.0
  %637 = vmatpush1.msra.mxu0 0.0
  %638 = vmatprep.subr.mxu0 0.0
  %639 = vmatpush1.msra.mxu0 0.0
  %640 = vmatprep.subr.mxu0 0.0
  %641 = vmatpush1.msra.mxu0 0.0
  %642 = vmatprep.subr.mxu0 0.0
  %643 = vmatpush1.msra.mxu0 0.0
  %644 = vmatprep.subr.mxu0 0.0
  %645 = vmatpush1.msra.mxu0 0.0
  %646 = vmatprep.subr.mxu0 0.0
  %647 = vmatpush1.msra.mxu0 0.0
  %648 = vmatprep.subr.mxu0 0.0
  %649 = vmatpush1.msra.mxu0 0.0
  %650 = vmatprep.subr.mxu0 0.0
  %651 = vmatpush1.msra.mxu0 0.0
  %652 = vmatprep.subr.mxu0 0.0
  %653 = vmatpush1.msra.mxu0 0.0
  %654 = vmatprep.subr.mxu0 0.0
  %655 = vmatpush1.msra.mxu0 0.0
  %656 = vmatprep.subr.mxu0 0.0
  %657 = vmatpush1.msra.mxu0 0.0
  %658 = vmatprep.subr.mxu0 0.0
  %659 = vmatpush1.msra.mxu0 0.0
  %660 = vmatprep.subr.mxu0 0.0
  %661 = vmatpush1.msra.mxu0 0.0
  %662 = vmatprep.subr.mxu0 0.0
  %663 = vmatpush1.msra.mxu0 0.0
  %664 = vmatprep.subr.mxu0 0.0
  %665 = vmatpush1.msra.mxu0 0.0
  %666 = vmatprep.subr.mxu0 0.0
  %667 = vmatpush1.msra.mxu0 0.0
  %668 = vmatprep.subr.mxu0 0.0
  %669 = vmatpush1.msra.mxu0 0.0
  %670 = vmatprep.subr.mxu0 0.0
  %671 = vmatpush1.msra.mxu0 0.0
  %672 = vmatprep.subr.mxu0 0.0
  %673 = vmatpush1.msra.mxu0 0.0
  %674 = vmatprep.subr.mxu0 0.0
  %675 = vmatpush1.msra.mxu0 0.0
  %676 = vmatprep.subr.mxu0 0.0
  %677 = vmatpush1.msra.mxu0 0.0
  %678 = vmatprep.subr.mxu0 0.0
  %679 = vmatpush1.msra.mxu0 0.0
  %680 = vmatprep.subr.mxu0 0.0
  %681 = vmatpush1.msra.mxu0 0.0
  %682 = vmatprep.subr.mxu0 0.0
  %683 = vmatpush1.msra.mxu0 0.0
  %684 = vmatprep.subr.mxu0 0.0
  %685 = vmatpush1.msra.mxu0 0.0
  %686 = vmatprep.subr.mxu0 0.0
  %687 = vmatpush1.msra.mxu0 0.0
  %688 = vmatprep.mubr.f32.mxu0 0.0
  %689 = vmatmul.mubr.f32.gmra.mrb[0].mxu0 %v622
  %v690 = vpop.f32.mrb[0].mxu0
  %v691 = vadd.f32 0.0, %v690
  %v692 = vpop.f32.mrb[0].mxu0
  %693 = vdwg.mxu0
  %694 = vrot.lane.b32.xlu0 %v182, 64
  %v695 = vpop.permute.xlu0 %694
  %v698 = vsel %vm187, %v539, 0
  %700 = vmatprep.subr.mxu0 0.0
  %701 = vmatpush1.msra.mxu0 %v695
  %702 = vmatprep.subr.mxu0 0.0
  %703 = vmatpush1.msra.mxu0 0.0
  %704 = vmatprep.subr.mxu0 0.0
  %705 = vmatpush1.msra.mxu0 0.0
  %706 = vmatprep.subr.mxu0 0.0
  %707 = vmatpush1.msra.mxu0 0.0
  %708 = vmatprep.subr.mxu0 0.0
  %709 = vmatpush1.msra.mxu0 0.0
  %710 = vmatprep.subr.mxu0 0.0
  %711 = vmatpush1.msra.mxu0 0.0
  %712 = vmatprep.subr.mxu0 0.0
  %713 = vmatpush1.msra.mxu0 0.0
  %714 = vmatprep.subr.mxu0 0.0
  %715 = vmatpush1.msra.mxu0 0.0
  %716 = vmatprep.subr.mxu0 0.0
  %717 = vmatpush1.msra.mxu0 0.0
  %718 = vmatprep.subr.mxu0 0.0
  %719 = vmatpush1.msra.mxu0 0.0
  %720 = vmatprep.subr.mxu0 0.0
  %721 = vmatpush1.msra.mxu0 0.0
  %722 = vmatprep.subr.mxu0 0.0
  %723 = vmatpush1.msra.mxu0 0.0
  %724 = vmatprep.subr.mxu0 0.0
  %725 = vmatpush1.msra.mxu0 0.0
  %726 = vmatprep.subr.mxu0 0.0
  %727 = vmatpush1.msra.mxu0 0.0
  %728 = vmatprep.subr.mxu0 0.0
  %729 = vmatpush1.msra.mxu0 0.0
  %730 = vmatprep.subr.mxu0 0.0
  %731 = vmatpush1.msra.mxu0 0.0
  %732 = vmatprep.subr.mxu0 0.0
  %733 = vmatpush1.msra.mxu0 0.0
  %734 = vmatprep.subr.mxu0 0.0
  %735 = vmatpush1.msra.mxu0 0.0
  %736 = vmatprep.subr.mxu0 0.0
  %737 = vmatpush1.msra.mxu0 0.0
  %738 = vmatprep.subr.mxu0 0.0
  %739 = vmatpush1.msra.mxu0 0.0
  %740 = vmatprep.subr.mxu0 0.0
  %741 = vmatpush1.msra.mxu0 0.0
  %742 = vmatprep.subr.mxu0 0.0
  %743 = vmatpush1.msra.mxu0 0.0
  %744 = vmatprep.subr.mxu0 0.0
  %745 = vmatpush1.msra.mxu0 0.0
  %746 = vmatprep.subr.mxu0 0.0
  %747 = vmatpush1.msra.mxu0 0.0
  %748 = vmatprep.subr.mxu0 0.0
  %749 = vmatpush1.msra.mxu0 0.0
  %750 = vmatprep.subr.mxu0 0.0
  %751 = vmatpush1.msra.mxu0 0.0
  %752 = vmatprep.subr.mxu0 0.0
  %753 = vmatpush1.msra.mxu0 0.0
  %754 = vmatprep.subr.mxu0 0.0
  %755 = vmatpush1.msra.mxu0 0.0
  %756 = vmatprep.subr.mxu0 0.0
  %757 = vmatpush1.msra.mxu0 0.0
  %758 = vmatprep.subr.mxu0 0.0
  %759 = vmatpush1.msra.mxu0 0.0
  %760 = vmatprep.subr.mxu0 0.0
  %761 = vmatpush1.msra.mxu0 0.0
  %762 = vmatprep.subr.mxu0 0.0
  %763 = vmatpush1.msra.mxu0 0.0
  %764 = vmatprep.mubr.f32.mxu0 0.0
  %765 = vmatmul.mubr.f32.gmra.mrb[0].mxu0 %v698
  %v766 = vpop.f32.mrb[0].mxu0
  %v767 = vadd.f32 0.0, %v766
  %v768 = vpop.f32.mrb[0].mxu0
  %769 = vdwg.mxu0
  %770 = vrot.lane.b32.xlu0 %v184, 64
  %v771 = vpop.permute.xlu0 %770
  %v774 = vsel %vm187, %v541, 0
  %776 = vmatprep.subr.mxu0 0.0
  %777 = vmatpush1.msra.mxu0 %v771
  %778 = vmatprep.subr.mxu0 0.0
  %779 = vmatpush1.msra.mxu0 0.0
  %780 = vmatprep.subr.mxu0 0.0
  %781 = vmatpush1.msra.mxu0 0.0
  %782 = vmatprep.subr.mxu0 0.0
  %783 = vmatpush1.msra.mxu0 0.0
  %784 = vmatprep.subr.mxu0 0.0
  %785 = vmatpush1.msra.mxu0 0.0
  %786 = vmatprep.subr.mxu0 0.0
  %787 = vmatpush1.msra.mxu0 0.0
  %788 = vmatprep.subr.mxu0 0.0
  %789 = vmatpush1.msra.mxu0 0.0
  %790 = vmatprep.subr.mxu0 0.0
  %791 = vmatpush1.msra.mxu0 0.0
  %792 = vmatprep.subr.mxu0 0.0
  %793 = vmatpush1.msra.mxu0 0.0
  %794 = vmatprep.subr.mxu0 0.0
  %795 = vmatpush1.msra.mxu0 0.0
  %796 = vmatprep.subr.mxu0 0.0
  %797 = vmatpush1.msra.mxu0 0.0
  %798 = vmatprep.subr.mxu0 0.0
  %799 = vmatpush1.msra.mxu0 0.0
  %800 = vmatprep.subr.mxu0 0.0
  %801 = vmatpush1.msra.mxu0 0.0
  %802 = vmatprep.subr.mxu0 0.0
  %803 = vmatpush1.msra.mxu0 0.0
  %804 = vmatprep.subr.mxu0 0.0
  %805 = vmatpush1.msra.mxu0 0.0
  %806 = vmatprep.subr.mxu0 0.0
  %807 = vmatpush1.msra.mxu0 0.0
  %808 = vmatprep.subr.mxu0 0.0
  %809 = vmatpush1.msra.mxu0 0.0
  %810 = vmatprep.subr.mxu0 0.0
  %811 = vmatpush1.msra.mxu0 0.0
  %812 = vmatprep.subr.mxu0 0.0
  %813 = vmatpush1.msra.mxu0 0.0
  %814 = vmatprep.subr.mxu0 0.0
  %815 = vmatpush1.msra.mxu0 0.0
  %816 = vmatprep.subr.mxu0 0.0
  %817 = vmatpush1.msra.mxu0 0.0
  %818 = vmatprep.subr.mxu0 0.0
  %819 = vmatpush1.msra.mxu0 0.0
  %820 = vmatprep.subr.mxu0 0.0
  %821 = vmatpush1.msra.mxu0 0.0
  %822 = vmatprep.subr.mxu0 0.0
  %823 = vmatpush1.msra.mxu0 0.0
  %824 = vmatprep.subr.mxu0 0.0
  %825 = vmatpush1.msra.mxu0 0.0
  %826 = vmatprep.subr.mxu0 0.0
  %827 = vmatpush1.msra.mxu0 0.0
  %828 = vmatprep.subr.mxu0 0.0
  %829 = vmatpush1.msra.mxu0 0.0
  %830 = vmatprep.subr.mxu0 0.0
  %831 = vmatpush1.msra.mxu0 0.0
  %832 = vmatprep.subr.mxu0 0.0
  %833 = vmatpush1.msra.mxu0 0.0
  %834 = vmatprep.subr.mxu0 0.0
  %835 = vmatpush1.msra.mxu0 0.0
  %836 = vmatprep.subr.mxu0 0.0
  %837 = vmatpush1.msra.mxu0 0.0
  %838 = vmatprep.subr.mxu0 0.0
  %839 = vmatpush1.msra.mxu0 0.0
  %840 = vmatprep.mubr.f32.mxu0 0.0
  %841 = vmatmul.mubr.f32.gmra.mrb[0].mxu0 %v774
  %v842 = vpop.f32.mrb[0].mxu0
  %v843 = vadd.f32 0.0, %v842
  %v844 = vpop.f32.mrb[0].mxu0
  %845 = vdwg.mxu0
  %847 = vrot.lane.b32.xlu0 %v691, 8
  %v848 = vpop.permute.xlu0 %847
  %851 = vrot.lane.b32.xlu0 %v767, 16
  %v852 = vpop.permute.xlu0 %851
  %855 = vrot.lane.b32.xlu0 %v843, 24
  %v856 = vpop.permute.xlu0 %855
  %v858 = vsel %vm187, %v615, %v848
  %vm859 = vcmask 130048
  %v860 = vsel %vm859, %v858, %v852
  %vm861 = vcmask 195584
  %v862 = vsel %vm861, %v860, %v856
  %v863 = vld [vmem:[%s5] sm:$0xff]
  %v864 = vld [vmem:[%s5 + $0x8] sm:$0xff]
  %v865 = vld [vmem:[%s5 + $0x10] sm:$0xff]
  %v866 = vld [vmem:[%s5 + $0x18] sm:$0xff]
  %v868 = vsel %vm96, %v862, 0
  %870 = vmatprep.subr.mxu0 0.0
  %871 = vmatpush1.msra.mxu0 %v863
  %872 = vmatprep.subr.mxu0 0.0
  %873 = vmatpush1.msra.mxu0 %v864
  %874 = vmatprep.subr.mxu0 0.0
  %875 = vmatpush1.msra.mxu0 %v865
  %876 = vmatprep.subr.mxu0 0.0
  %877 = vmatpush1.msra.mxu0 %v866
  %878 = vmatprep.subr.mxu0 0.0
  %879 = vmatpush1.msra.mxu0 0.0
  %880 = vmatprep.subr.mxu0 0.0
  %881 = vmatpush1.msra.mxu0 0.0
  %882 = vmatprep.subr.mxu0 0.0
  %883 = vmatpush1.msra.mxu0 0.0
  %884 = vmatprep.subr.mxu0 0.0
  %885 = vmatpush1.msra.mxu0 0.0
  %886 = vmatprep.subr.mxu0 0.0
  %887 = vmatpush1.msra.mxu0 0.0
  %888 = vmatprep.subr.mxu0 0.0
  %889 = vmatpush1.msra.mxu0 0.0
  %890 = vmatprep.subr.mxu0 0.0
  %891 = vmatpush1.msra.mxu0 0.0
  %892 = vmatprep.subr.mxu0 0.0
  %893 = vmatpush1.msra.mxu0 0.0
  %894 = vmatprep.subr.mxu0 0.0
  %895 = vmatpush1.msra.mxu0 0.0
  %896 = vmatprep.subr.mxu0 0.0
  %897 = vmatpush1.msra.mxu0 0.0
  %898 = vmatprep.subr.mxu0 0.0
  %899 = vmatpush1.msra.mxu0 0.0
  %900 = vmatprep.subr.mxu0 0.0
  %901 = vmatpush1.msra.mxu0 0.0
  %902 = vmatprep.subr.mxu0 0.0
  %903 = vmatpush1.msra.mxu0 0.0
  %904 = vmatprep.subr.mxu0 0.0
  %905 = vmatpush1.msra.mxu0 0.0
  %906 = vmatprep.subr.mxu0 0.0
  %907 = vmatpush1.msra.mxu0 0.0
  %908 = vmatprep.subr.mxu0 0.0
  %909 = vmatpush1.msra.mxu0 0.0
  %910 = vmatprep.subr.mxu0 0.0
  %911 = vmatpush1.msra.mxu0 0.0
  %912 = vmatprep.subr.mxu0 0.0
  %913 = vmatpush1.msra.mxu0 0.0
  %914 = vmatprep.subr.mxu0 0.0
  %915 = vmatpush1.msra.mxu0 0.0
  %916 = vmatprep.subr.mxu0 0.0
  %917 = vmatpush1.msra.mxu0 0.0
  %918 = vmatprep.subr.mxu0 0.0
  %919 = vmatpush1.msra.mxu0 0.0
  %920 = vmatprep.subr.mxu0 0.0
  %921 = vmatpush1.msra.mxu0 0.0
  %922 = vmatprep.subr.mxu0 0.0
  %923 = vmatpush1.msra.mxu0 0.0
  %924 = vmatprep.subr.mxu0 0.0
  %925 = vmatpush1.msra.mxu0 0.0
  %926 = vmatprep.subr.mxu0 0.0
  %927 = vmatpush1.msra.mxu0 0.0
  %928 = vmatprep.subr.mxu0 0.0
  %929 = vmatpush1.msra.mxu0 0.0
  %930 = vmatprep.subr.mxu0 0.0
  %931 = vmatpush1.msra.mxu0 0.0
  %932 = vmatprep.subr.mxu0 0.0
  %933 = vmatpush1.msra.mxu0 0.0
  %934 = vmatprep.mubr.f32.mxu0 0.0
  %935 = vmatmul.mubr.f32.gmra.mrb[0].mxu0 %v868
  %v936 = vpop.f32.mrb[0].mxu0
  %v937 = vadd.f32 0.0, %v936
  %v938 = vpop.f32.mrb[0].mxu0
  %939 = vdwg.mxu0
  %941 = vrot.lane.b32.xlu0 %v175, 120
  %v942 = vpop.permute.xlu0 %941
  %943 = vrot.lane.b32.xlu0 %v175, 112
  %v944 = vpop.permute.xlu0 %943
  %945 = vrot.lane.b32.xlu0 %v175, 104
  %v946 = vpop.permute.xlu0 %945
  %947 = vrot.lane.b32.xlu0 %v175, 96
  %v948 = vpop.permute.xlu0 %947
  %v949 = vsel %vm187, %v175, 0
  %v951 = vsel %vm187, %v948, 0
  %953 = vmatprep.subr.mxu0 0.0
  %954 = vmatpush1.xpose.msra.mxu0 %v951
  %955 = vmatprep.subr.mxu0 0.0
  %956 = vmatpush1.xpose.msra.mxu0 0.0
  %957 = vmatprep.subr.mxu0 0.0
  %958 = vmatpush1.xpose.msra.mxu0 0.0
  %959 = vmatprep.subr.mxu0 0.0
  %960 = vmatpush1.xpose.msra.mxu0 0.0
  %961 = vmatprep.subr.mxu0 0.0
  %962 = vmatpush1.xpose.msra.mxu0 0.0
  %963 = vmatprep.subr.mxu0 0.0
  %964 = vmatpush1.xpose.msra.mxu0 0.0
  %965 = vmatprep.subr.mxu0 0.0
  %966 = vmatpush1.xpose.msra.mxu0 0.0
  %967 = vmatprep.subr.mxu0 0.0
  %968 = vmatpush1.xpose.msra.mxu0 0.0
  %969 = vmatprep.subr.mxu0 0.0
  %970 = vmatpush1.xpose.msra.mxu0 0.0
  %971 = vmatprep.subr.mxu0 0.0
  %972 = vmatpush1.xpose.msra.mxu0 0.0
  %973 = vmatprep.subr.mxu0 0.0
  %974 = vmatpush1.xpose.msra.mxu0 0.0
  %975 = vmatprep.subr.mxu0 0.0
  %976 = vmatpush1.xpose.msra.mxu0 0.0
  %977 = vmatprep.subr.mxu0 0.0
  %978 = vmatpush1.xpose.msra.mxu0 0.0
  %979 = vmatprep.subr.mxu0 0.0
  %980 = vmatpush1.xpose.msra.mxu0 0.0
  %981 = vmatprep.subr.mxu0 0.0
  %982 = vmatpush1.xpose.msra.mxu0 0.0
  %983 = vmatprep.subr.mxu0 0.0
  %984 = vmatpush1.xpose.msra.mxu0 0.0
  %985 = vmatprep.subr.mxu0 0.0
  %986 = vmatpush1.xpose.msra.mxu0 0.0
  %987 = vmatprep.subr.mxu0 0.0
  %988 = vmatpush1.xpose.msra.mxu0 0.0
  %989 = vmatprep.subr.mxu0 0.0
  %990 = vmatpush1.xpose.msra.mxu0 0.0
  %991 = vmatprep.subr.mxu0 0.0
  %992 = vmatpush1.xpose.msra.mxu0 0.0
  %993 = vmatprep.subr.mxu0 0.0
  %994 = vmatpush1.xpose.msra.mxu0 0.0
  %995 = vmatprep.subr.mxu0 0.0
  %996 = vmatpush1.xpose.msra.mxu0 0.0
  %997 = vmatprep.subr.mxu0 0.0
  %998 = vmatpush1.xpose.msra.mxu0 0.0
  %999 = vmatprep.subr.mxu0 0.0
  %1000 = vmatpush1.xpose.msra.mxu0 0.0
  %1001 = vmatprep.subr.mxu0 0.0
  %1002 = vmatpush1.xpose.msra.mxu0 0.0
  %1003 = vmatprep.subr.mxu0 0.0
  %1004 = vmatpush1.xpose.msra.mxu0 0.0
  %1005 = vmatprep.subr.mxu0 0.0
  %1006 = vmatpush1.xpose.msra.mxu0 0.0
  %1007 = vmatprep.subr.mxu0 0.0
  %1008 = vmatpush1.xpose.msra.mxu0 0.0
  %1009 = vmatprep.subr.mxu0 0.0
  %1010 = vmatpush1.xpose.msra.mxu0 0.0
  %1011 = vmatprep.subr.mxu0 0.0
  %1012 = vmatpush1.xpose.msra.mxu0 0.0
  %1013 = vmatprep.subr.mxu0 0.0
  %1014 = vmatpush1.xpose.msra.mxu0 0.0
  %1015 = vmatprep.subr.mxu0 0.0
  %1016 = vmatpush1.xpose.msra.mxu0 0.0
  %1017 = vmatprep.mubr.f32.mxu0 0.0
  %1018 = vmatmul.mubr.f32.gmra.mrb[0].mxu0 %v949
  %v1019 = vpop.f32.mrb[0].mxu0
  %v1020 = vadd.f32 0.0, %v1019
  %v1021 = vpop.f32.mrb[0].mxu0
  %1022 = vdwg.mxu0
  %1023 = vrot.lane.b32.xlu0 %v942, 96
  %v1024 = vpop.permute.xlu0 %1023
  %v1025 = vsel %vm187, %v942, 0
  %v1027 = vsel %vm187, %v1024, 0
  %1029 = vmatprep.subr.mxu0 0.0
  %1030 = vmatpush1.xpose.msra.mxu0 %v1027
  %1031 = vmatprep.subr.mxu0 0.0
  %1032 = vmatpush1.xpose.msra.mxu0 0.0
  %1033 = vmatprep.subr.mxu0 0.0
  %1034 = vmatpush1.xpose.msra.mxu0 0.0
  %1035 = vmatprep.subr.mxu0 0.0
  %1036 = vmatpush1.xpose.msra.mxu0 0.0
  %1037 = vmatprep.subr.mxu0 0.0
  %1038 = vmatpush1.xpose.msra.mxu0 0.0
  %1039 = vmatprep.subr.mxu0 0.0
  %1040 = vmatpush1.xpose.msra.mxu0 0.0
  %1041 = vmatprep.subr.mxu0 0.0
  %1042 = vmatpush1.xpose.msra.mxu0 0.0
  %1043 = vmatprep.subr.mxu0 0.0
  %1044 = vmatpush1.xpose.msra.mxu0 0.0
  %1045 = vmatprep.subr.mxu0 0.0
  %1046 = vmatpush1.xpose.msra.mxu0 0.0
  %1047 = vmatprep.subr.mxu0 0.0
  %1048 = vmatpush1.xpose.msra.mxu0 0.0
  %1049 = vmatprep.subr.mxu0 0.0
  %1050 = vmatpush1.xpose.msra.mxu0 0.0
  %1051 = vmatprep.subr.mxu0 0.0
  %1052 = vmatpush1.xpose.msra.mxu0 0.0
  %1053 = vmatprep.subr.mxu0 0.0
  %1054 = vmatpush1.xpose.msra.mxu0 0.0
  %1055 = vmatprep.subr.mxu0 0.0
  %1056 = vmatpush1.xpose.msra.mxu0 0.0
  %1057 = vmatprep.subr.mxu0 0.0
  %1058 = vmatpush1.xpose.msra.mxu0 0.0
  %1059 = vmatprep.subr.mxu0 0.0
  %1060 = vmatpush1.xpose.msra.mxu0 0.0
  %1061 = vmatprep.subr.mxu0 0.0
  %1062 = vmatpush1.xpose.msra.mxu0 0.0
  %1063 = vmatprep.subr.mxu0 0.0
  %1064 = vmatpush1.xpose.msra.mxu0 0.0
  %1065 = vmatprep.subr.mxu0 0.0
  %1066 = vmatpush1.xpose.msra.mxu0 0.0
  %1067 = vmatprep.subr.mxu0 0.0
  %1068 = vmatpush1.xpose.msra.mxu0 0.0
  %1069 = vmatprep.subr.mxu0 0.0
  %1070 = vmatpush1.xpose.msra.mxu0 0.0
  %1071 = vmatprep.subr.mxu0 0.0
  %1072 = vmatpush1.xpose.msra.mxu0 0.0
  %1073 = vmatprep.subr.mxu0 0.0
  %1074 = vmatpush1.xpose.msra.mxu0 0.0
  %1075 = vmatprep.subr.mxu0 0.0
  %1076 = vmatpush1.xpose.msra.mxu0 0.0
  %1077 = vmatprep.subr.mxu0 0.0
  %1078 = vmatpush1.xpose.msra.mxu0 0.0
  %1079 = vmatprep.subr.mxu0 0.0
  %1080 = vmatpush1.xpose.msra.mxu0 0.0
  %1081 = vmatprep.subr.mxu0 0.0
  %1082 = vmatpush1.xpose.msra.mxu0 0.0
  %1083 = vmatprep.subr.mxu0 0.0
  %1084 = vmatpush1.xpose.msra.mxu0 0.0
  %1085 = vmatprep.subr.mxu0 0.0
  %1086 = vmatpush1.xpose.msra.mxu0 0.0
  %1087 = vmatprep.subr.mxu0 0.0
  %1088 = vmatpush1.xpose.msra.mxu0 0.0
  %1089 = vmatprep.subr.mxu0 0.0
  %1090 = vmatpush1.xpose.msra.mxu0 0.0
  %1091 = vmatprep.subr.mxu0 0.0
  %1092 = vmatpush1.xpose.msra.mxu0 0.0
  %1093 = vmatprep.mubr.f32.mxu0 0.0
  %1094 = vmatmul.mubr.f32.gmra.mrb[0].mxu0 %v1025
  %v1095 = vpop.f32.mrb[0].mxu0
  %v1096 = vadd.f32 0.0, %v1095
  %v1097 = vpop.f32.mrb[0].mxu0
  %1098 = vdwg.mxu0
  %1099 = vrot.lane.b32.xlu0 %v944, 96
  %v1100 = vpop.permute.xlu0 %1099
  %v1101 = vsel %vm187, %v944, 0
  %v1103 = vsel %vm187, %v1100, 0
  %1105 = vmatprep.subr.mxu0 0.0
  %1106 = vmatpush1.xpose.msra.mxu0 %v1103
  %1107 = vmatprep.subr.mxu0 0.0
  %1108 = vmatpush1.xpose.msra.mxu0 0.0
  %1109 = vmatprep.subr.mxu0 0.0
  %1110 = vmatpush1.xpose.msra.mxu0 0.0
  %1111 = vmatprep.subr.mxu0 0.0
  %1112 = vmatpush1.xpose.msra.mxu0 0.0
  %1113 = vmatprep.subr.mxu0 0.0
  %1114 = vmatpush1.xpose.msra.mxu0 0.0
  %1115 = vmatprep.subr.mxu0 0.0
  %1116 = vmatpush1.xpose.msra.mxu0 0.0
  %1117 = vmatprep.subr.mxu0 0.0
  %1118 = vmatpush1.xpose.msra.mxu0 0.0
  %1119 = vmatprep.subr.mxu0 0.0
  %1120 = vmatpush1.xpose.msra.mxu0 0.0
  %1121 = vmatprep.subr.mxu0 0.0
  %1122 = vmatpush1.xpose.msra.mxu0 0.0
  %1123 = vmatprep.subr.mxu0 0.0
  %1124 = vmatpush1.xpose.msra.mxu0 0.0
  %1125 = vmatprep.subr.mxu0 0.0
  %1126 = vmatpush1.xpose.msra.mxu0 0.0
  %1127 = vmatprep.subr.mxu0 0.0
  %1128 = vmatpush1.xpose.msra.mxu0 0.0
  %1129 = vmatprep.subr.mxu0 0.0
  %1130 = vmatpush1.xpose.msra.mxu0 0.0
  %1131 = vmatprep.subr.mxu0 0.0
  %1132 = vmatpush1.xpose.msra.mxu0 0.0
  %1133 = vmatprep.subr.mxu0 0.0
  %1134 = vmatpush1.xpose.msra.mxu0 0.0
  %1135 = vmatprep.subr.mxu0 0.0
  %1136 = vmatpush1.xpose.msra.mxu0 0.0
  %1137 = vmatprep.subr.mxu0 0.0
  %1138 = vmatpush1.xpose.msra.mxu0 0.0
  %1139 = vmatprep.subr.mxu0 0.0
  %1140 = vmatpush1.xpose.msra.mxu0 0.0
  %1141 = vmatprep.subr.mxu0 0.0
  %1142 = vmatpush1.xpose.msra.mxu0 0.0
  %1143 = vmatprep.subr.mxu0 0.0
  %1144 = vmatpush1.xpose.msra.mxu0 0.0
  %1145 = vmatprep.subr.mxu0 0.0
  %1146 = vmatpush1.xpose.msra.mxu0 0.0
  %1147 = vmatprep.subr.mxu0 0.0
  %1148 = vmatpush1.xpose.msra.mxu0 0.0
  %1149 = vmatprep.subr.mxu0 0.0
  %1150 = vmatpush1.xpose.msra.mxu0 0.0
  %1151 = vmatprep.subr.mxu0 0.0
  %1152 = vmatpush1.xpose.msra.mxu0 0.0
  %1153 = vmatprep.subr.mxu0 0.0
  %1154 = vmatpush1.xpose.msra.mxu0 0.0
  %1155 = vmatprep.subr.mxu0 0.0
  %1156 = vmatpush1.xpose.msra.mxu0 0.0
  %1157 = vmatprep.subr.mxu0 0.0
  %1158 = vmatpush1.xpose.msra.mxu0 0.0
  %1159 = vmatprep.subr.mxu0 0.0
  %1160 = vmatpush1.xpose.msra.mxu0 0.0
  %1161 = vmatprep.subr.mxu0 0.0
  %1162 = vmatpush1.xpose.msra.mxu0 0.0
  %1163 = vmatprep.subr.mxu0 0.0
  %1164 = vmatpush1.xpose.msra.mxu0 0.0
  %1165 = vmatprep.subr.mxu0 0.0
  %1166 = vmatpush1.xpose.msra.mxu0 0.0
  %1167 = vmatprep.subr.mxu0 0.0
  %1168 = vmatpush1.xpose.msra.mxu0 0.0
  %1169 = vmatprep.mubr.f32.mxu0 0.0
  %1170 = vmatmul.mubr.f32.gmra.mrb[0].mxu0 %v1101
  %v1171 = vpop.f32.mrb[0].mxu0
  %v1172 = vadd.f32 0.0, %v1171
  %v1173 = vpop.f32.mrb[0].mxu0
  %1174 = vdwg.mxu0
  %1175 = vrot.lane.b32.xlu0 %v946, 96
  %v1176 = vpop.permute.xlu0 %1175
  %v1177 = vsel %vm187, %v946, 0
  %v1179 = vsel %vm187, %v1176, 0
  %1181 = vmatprep.subr.mxu0 0.0
  %1182 = vmatpush1.xpose.msra.mxu0 %v1179
  %1183 = vmatprep.subr.mxu0 0.0
  %1184 = vmatpush1.xpose.msra.mxu0 0.0
  %1185 = vmatprep.subr.mxu0 0.0
  %1186 = vmatpush1.xpose.msra.mxu0 0.0
  %1187 = vmatprep.subr.mxu0 0.0
  %1188 = vmatpush1.xpose.msra.mxu0 0.0
  %1189 = vmatprep.subr.mxu0 0.0
  %1190 = vmatpush1.xpose.msra.mxu0 0.0
  %1191 = vmatprep.subr.mxu0 0.0
  %1192 = vmatpush1.xpose.msra.mxu0 0.0
  %1193 = vmatprep.subr.mxu0 0.0
  %1194 = vmatpush1.xpose.msra.mxu0 0.0
  %1195 = vmatprep.subr.mxu0 0.0
  %1196 = vmatpush1.xpose.msra.mxu0 0.0
  %1197 = vmatprep.subr.mxu0 0.0
  %1198 = vmatpush1.xpose.msra.mxu0 0.0
  %1199 = vmatprep.subr.mxu0 0.0
  %1200 = vmatpush1.xpose.msra.mxu0 0.0
  %1201 = vmatprep.subr.mxu0 0.0
  %1202 = vmatpush1.xpose.msra.mxu0 0.0
  %1203 = vmatprep.subr.mxu0 0.0
  %1204 = vmatpush1.xpose.msra.mxu0 0.0
  %1205 = vmatprep.subr.mxu0 0.0
  %1206 = vmatpush1.xpose.msra.mxu0 0.0
  %1207 = vmatprep.subr.mxu0 0.0
  %1208 = vmatpush1.xpose.msra.mxu0 0.0
  %1209 = vmatprep.subr.mxu0 0.0
  %1210 = vmatpush1.xpose.msra.mxu0 0.0
  %1211 = vmatprep.subr.mxu0 0.0
  %1212 = vmatpush1.xpose.msra.mxu0 0.0
  %1213 = vmatprep.subr.mxu0 0.0
  %1214 = vmatpush1.xpose.msra.mxu0 0.0
  %1215 = vmatprep.subr.mxu0 0.0
  %1216 = vmatpush1.xpose.msra.mxu0 0.0
  %1217 = vmatprep.subr.mxu0 0.0
  %1218 = vmatpush1.xpose.msra.mxu0 0.0
  %1219 = vmatprep.subr.mxu0 0.0
  %1220 = vmatpush1.xpose.msra.mxu0 0.0
  %1221 = vmatprep.subr.mxu0 0.0
  %1222 = vmatpush1.xpose.msra.mxu0 0.0
  %1223 = vmatprep.subr.mxu0 0.0
  %1224 = vmatpush1.xpose.msra.mxu0 0.0
  %1225 = vmatprep.subr.mxu0 0.0
  %1226 = vmatpush1.xpose.msra.mxu0 0.0
  %1227 = vmatprep.subr.mxu0 0.0
  %1228 = vmatpush1.xpose.msra.mxu0 0.0
  %1229 = vmatprep.subr.mxu0 0.0
  %1230 = vmatpush1.xpose.msra.mxu0 0.0
  %1231 = vmatprep.subr.mxu0 0.0
  %1232 = vmatpush1.xpose.msra.mxu0 0.0
  %1233 = vmatprep.subr.mxu0 0.0
  %1234 = vmatpush1.xpose.msra.mxu0 0.0
  %1235 = vmatprep.subr.mxu0 0.0
  %1236 = vmatpush1.xpose.msra.mxu0 0.0
  %1237 = vmatprep.subr.mxu0 0.0
  %1238 = vmatpush1.xpose.msra.mxu0 0.0
  %1239 = vmatprep.subr.mxu0 0.0
  %1240 = vmatpush1.xpose.msra.mxu0 0.0
  %1241 = vmatprep.subr.mxu0 0.0
  %1242 = vmatpush1.xpose.msra.mxu0 0.0
  %1243 = vmatprep.subr.mxu0 0.0
  %1244 = vmatpush1.xpose.msra.mxu0 0.0
  %1245 = vmatprep.mubr.f32.mxu0 0.0
  %1246 = vmatmul.mubr.f32.gmra.mrb[0].mxu0 %v1177
  %v1247 = vpop.f32.mrb[0].mxu0
  %v1248 = vadd.f32 0.0, %v1247
  %v1249 = vpop.f32.mrb[0].mxu0
  %1250 = vdwg.mxu0
  %v1251 = vmul.f32 %v1020, 0.35355338
  %v1252 = vmul.f32 %v1096, 0.35355338
  %v1253 = vmul.f32 %v1172, 0.35355338
  %v1254 = vmul.f32 %v1248, 0.35355338
  %v1255 = vadd.f32 %v1251, %v84
  %v1256 = vadd.f32 %v1252, %v84
  %v1257 = vadd.f32 %v1253, %v84
  %v1258 = vadd.f32 %v1254, %v84
  %v1259 = vsel %vm187, %v1255, -inf
  %1260 = vmax.xlane.f32.xlu0 %v1259
  %v1261 = vpop.xlane.xlu0 %1260
  %v1262 = vsel %vm187, %v1256, -inf
  %1263 = vmax.xlane.f32.xlu0 %v1262
  %v1264 = vpop.xlane.xlu0 %1263
  %v1265 = vsel %vm187, %v1257, -inf
  %1266 = vmax.xlane.f32.xlu0 %v1265
  %v1267 = vpop.xlane.xlu0 %1266
  %v1268 = vsel %vm187, %v1258, -inf
  %1269 = vmax.xlane.f32.xlu0 %v1268
  %v1270 = vpop.xlane.xlu0 %1269
  %v1271 = vsub.f32 %v1255, %v1261
  %v1272 = vsub.f32 %v1256, %v1264
  %v1273 = vsub.f32 %v1257, %v1267
  %v1274 = vsub.f32 %v1258, %v1270
  %v1275 = vmul.f32 %v1271, 1.442695
  %v1276 = vpow.pop %v1275
  %v1277 = vmul.f32 %v1272, 1.442695
  %v1278 = vpow.pop %v1277
  %v1279 = vmul.f32 %v1273, 1.442695
  %v1280 = vpow.pop %v1279
  %v1281 = vmul.f32 %v1274, 1.442695
  %v1282 = vpow.pop %v1281
  %v1283 = vsel %vm187, %v1276, 0.0
  %1284 = vadd.xlane.f32.xlu0 %v1283
  %v1285 = vpop.xlane.xlu0 %1284
  %v1286 = vsel %vm187, %v1278, 0.0
  %1287 = vadd.xlane.f32.xlu0 %v1286
  %v1288 = vpop.xlane.xlu0 %1287
  %v1289 = vsel %vm187, %v1280, 0.0
  %1290 = vadd.xlane.f32.xlu0 %v1289
  %v1291 = vpop.xlane.xlu0 %1290
  %v1292 = vsel %vm187, %v1282, 0.0
  %1293 = vadd.xlane.f32.xlu0 %v1292
  %v1294 = vpop.xlane.xlu0 %1293
  %v1295 = vrcp.pop %v1285
  %v1296 = vmul.f32 %v1276, %v1295
  %v1297 = vrcp.pop %v1288
  %v1298 = vmul.f32 %v1278, %v1297
  %v1299 = vrcp.pop %v1291
  %v1300 = vmul.f32 %v1280, %v1299
  %v1301 = vrcp.pop %v1294
  %v1302 = vmul.f32 %v1282, %v1301
  %1303 = vrot.lane.b32.xlu0 %v175, 64
  %v1304 = vpop.permute.xlu0 %1303
  %v1307 = vsel %vm187, %v1296, 0
  %1309 = vmatprep.subr.mxu0 0.0
  %1310 = vmatpush1.msra.mxu0 %v1304
  %1311 = vmatprep.subr.mxu0 0.0
  %1312 = vmatpush1.msra.mxu0 0.0
  %1313 = vmatprep.subr.mxu0 0.0
  %1314 = vmatpush1.msra.mxu0 0.0
  %1315 = vmatprep.subr.mxu0 0.0
  %1316 = vmatpush1.msra.mxu0 0.0
  %1317 = vmatprep.subr.mxu0 0.0
  %1318 = vmatpush1.msra.mxu0 0.0
  %1319 = vmatprep.subr.mxu0 0.0
  %1320 = vmatpush1.msra.mxu0 0.0
  %1321 = vmatprep.subr.mxu0 0.0
  %1322 = vmatpush1.msra.mxu0 0.0
  %1323 = vmatprep.subr.mxu0 0.0
  %1324 = vmatpush1.msra.mxu0 0.0
  %1325 = vmatprep.subr.mxu0 0.0
  %1326 = vmatpush1.msra.mxu0 0.0
  %1327 = vmatprep.subr.mxu0 0.0
  %1328 = vmatpush1.msra.mxu0 0.0
  %1329 = vmatprep.subr.mxu0 0.0
  %1330 = vmatpush1.msra.mxu0 0.0
  %1331 = vmatprep.subr.mxu0 0.0
  %1332 = vmatpush1.msra.mxu0 0.0
  %1333 = vmatprep.subr.mxu0 0.0
  %1334 = vmatpush1.msra.mxu0 0.0
  %1335 = vmatprep.subr.mxu0 0.0
  %1336 = vmatpush1.msra.mxu0 0.0
  %1337 = vmatprep.subr.mxu0 0.0
  %1338 = vmatpush1.msra.mxu0 0.0
  %1339 = vmatprep.subr.mxu0 0.0
  %1340 = vmatpush1.msra.mxu0 0.0
  %1341 = vmatprep.subr.mxu0 0.0
  %1342 = vmatpush1.msra.mxu0 0.0
  %1343 = vmatprep.subr.mxu0 0.0
  %1344 = vmatpush1.msra.mxu0 0.0
  %1345 = vmatprep.subr.mxu0 0.0
  %1346 = vmatpush1.msra.mxu0 0.0
  %1347 = vmatprep.subr.mxu0 0.0
  %1348 = vmatpush1.msra.mxu0 0.0
  %1349 = vmatprep.subr.mxu0 0.0
  %1350 = vmatpush1.msra.mxu0 0.0
  %1351 = vmatprep.subr.mxu0 0.0
  %1352 = vmatpush1.msra.mxu0 0.0
  %1353 = vmatprep.subr.mxu0 0.0
  %1354 = vmatpush1.msra.mxu0 0.0
  %1355 = vmatprep.subr.mxu0 0.0
  %1356 = vmatpush1.msra.mxu0 0.0
  %1357 = vmatprep.subr.mxu0 0.0
  %1358 = vmatpush1.msra.mxu0 0.0
  %1359 = vmatprep.subr.mxu0 0.0
  %1360 = vmatpush1.msra.mxu0 0.0
  %1361 = vmatprep.subr.mxu0 0.0
  %1362 = vmatpush1.msra.mxu0 0.0
  %1363 = vmatprep.subr.mxu0 0.0
  %1364 = vmatpush1.msra.mxu0 0.0
  %1365 = vmatprep.subr.mxu0 0.0
  %1366 = vmatpush1.msra.mxu0 0.0
  %1367 = vmatprep.subr.mxu0 0.0
  %1368 = vmatpush1.msra.mxu0 0.0
  %1369 = vmatprep.subr.mxu0 0.0
  %1370 = vmatpush1.msra.mxu0 0.0
  %1371 = vmatprep.subr.mxu0 0.0
  %1372 = vmatpush1.msra.mxu0 0.0
  %1373 = vmatprep.mubr.f32.mxu0 0.0
  %1374 = vmatmul.mubr.f32.gmra.mrb[0].mxu0 %v1307
  %v1375 = vpop.f32.mrb[0].mxu0
  %v1376 = vadd.f32 0.0, %v1375
  %v1377 = vpop.f32.mrb[0].mxu0
  %1378 = vdwg.mxu0
  %1379 = vrot.lane.b32.xlu0 %v942, 64
  %v1380 = vpop.permute.xlu0 %1379
  %v1383 = vsel %vm187, %v1298, 0
  %1385 = vmatprep.subr.mxu0 0.0
  %1386 = vmatpush1.msra.mxu0 %v1380
  %1387 = vmatprep.subr.mxu0 0.0
  %1388 = vmatpush1.msra.mxu0 0.0
  %1389 = vmatprep.subr.mxu0 0.0
  %1390 = vmatpush1.msra.mxu0 0.0
  %1391 = vmatprep.subr.mxu0 0.0
  %1392 = vmatpush1.msra.mxu0 0.0
  %1393 = vmatprep.subr.mxu0 0.0
  %1394 = vmatpush1.msra.mxu0 0.0
  %1395 = vmatprep.subr.mxu0 0.0
  %1396 = vmatpush1.msra.mxu0 0.0
  %1397 = vmatprep.subr.mxu0 0.0
  %1398 = vmatpush1.msra.mxu0 0.0
  %1399 = vmatprep.subr.mxu0 0.0
  %1400 = vmatpush1.msra.mxu0 0.0
  %1401 = vmatprep.subr.mxu0 0.0
  %1402 = vmatpush1.msra.mxu0 0.0
  %1403 = vmatprep.subr.mxu0 0.0
  %1404 = vmatpush1.msra.mxu0 0.0
  %1405 = vmatprep.subr.mxu0 0.0
  %1406 = vmatpush1.msra.mxu0 0.0
  %1407 = vmatprep.subr.mxu0 0.0
  %1408 = vmatpush1.msra.mxu0 0.0
  %1409 = vmatprep.subr.mxu0 0.0
  %1410 = vmatpush1.msra.mxu0 0.0
  %1411 = vmatprep.subr.mxu0 0.0
  %1412 = vmatpush1.msra.mxu0 0.0
  %1413 = vmatprep.subr.mxu0 0.0
  %1414 = vmatpush1.msra.mxu0 0.0
  %1415 = vmatprep.subr.mxu0 0.0
  %1416 = vmatpush1.msra.mxu0 0.0
  %1417 = vmatprep.subr.mxu0 0.0
  %1418 = vmatpush1.msra.mxu0 0.0
  %1419 = vmatprep.subr.mxu0 0.0
  %1420 = vmatpush1.msra.mxu0 0.0
  %1421 = vmatprep.subr.mxu0 0.0
  %1422 = vmatpush1.msra.mxu0 0.0
  %1423 = vmatprep.subr.mxu0 0.0
  %1424 = vmatpush1.msra.mxu0 0.0
  %1425 = vmatprep.subr.mxu0 0.0
  %1426 = vmatpush1.msra.mxu0 0.0
  %1427 = vmatprep.subr.mxu0 0.0
  %1428 = vmatpush1.msra.mxu0 0.0
  %1429 = vmatprep.subr.mxu0 0.0
  %1430 = vmatpush1.msra.mxu0 0.0
  %1431 = vmatprep.subr.mxu0 0.0
  %1432 = vmatpush1.msra.mxu0 0.0
  %1433 = vmatprep.subr.mxu0 0.0
  %1434 = vmatpush1.msra.mxu0 0.0
  %1435 = vmatprep.subr.mxu0 0.0
  %1436 = vmatpush1.msra.mxu0 0.0
  %1437 = vmatprep.subr.mxu0 0.0
  %1438 = vmatpush1.msra.mxu0 0.0
  %1439 = vmatprep.subr.mxu0 0.0
  %1440 = vmatpush1.msra.mxu0 0.0
  %1441 = vmatprep.subr.mxu0 0.0
  %1442 = vmatpush1.msra.mxu0 0.0
  %1443 = vmatprep.subr.mxu0 0.0
  %1444 = vmatpush1.msra.mxu0 0.0
  %1445 = vmatprep.subr.mxu0 0.0
  %1446 = vmatpush1.msra.mxu0 0.0
  %1447 = vmatprep.subr.mxu0 0.0
  %1448 = vmatpush1.msra.mxu0 0.0
  %1449 = vmatprep.mubr.f32.mxu0 0.0
  %1450 = vmatmul.mubr.f32.gmra.mrb[0].mxu0 %v1383
  %v1451 = vpop.f32.mrb[0].mxu0
  %v1452 = vadd.f32 0.0, %v1451
  %v1453 = vpop.f32.mrb[0].mxu0
  %1454 = vdwg.mxu0
  %1455 = vrot.lane.b32.xlu0 %v944, 64
  %v1456 = vpop.permute.xlu0 %1455
  %v1459 = vsel %vm187, %v1300, 0
  %1461 = vmatprep.subr.mxu0 0.0
  %1462 = vmatpush1.msra.mxu0 %v1456
  %1463 = vmatprep.subr.mxu0 0.0
  %1464 = vmatpush1.msra.mxu0 0.0
  %1465 = vmatprep.subr.mxu0 0.0
  %1466 = vmatpush1.msra.mxu0 0.0
  %1467 = vmatprep.subr.mxu0 0.0
  %1468 = vmatpush1.msra.mxu0 0.0
  %1469 = vmatprep.subr.mxu0 0.0
  %1470 = vmatpush1.msra.mxu0 0.0
  %1471 = vmatprep.subr.mxu0 0.0
  %1472 = vmatpush1.msra.mxu0 0.0
  %1473 = vmatprep.subr.mxu0 0.0
  %1474 = vmatpush1.msra.mxu0 0.0
  %1475 = vmatprep.subr.mxu0 0.0
  %1476 = vmatpush1.msra.mxu0 0.0
  %1477 = vmatprep.subr.mxu0 0.0
  %1478 = vmatpush1.msra.mxu0 0.0
  %1479 = vmatprep.subr.mxu0 0.0
  %1480 = vmatpush1.msra.mxu0 0.0
  %1481 = vmatprep.subr.mxu0 0.0
  %1482 = vmatpush1.msra.mxu0 0.0
  %1483 = vmatprep.subr.mxu0 0.0
  %1484 = vmatpush1.msra.mxu0 0.0
  %1485 = vmatprep.subr.mxu0 0.0
  %1486 = vmatpush1.msra.mxu0 0.0
  %1487 = vmatprep.subr.mxu0 0.0
  %1488 = vmatpush1.msra.mxu0 0.0
  %1489 = vmatprep.subr.mxu0 0.0
  %1490 = vmatpush1.msra.mxu0 0.0
  %1491 = vmatprep.subr.mxu0 0.0
  %1492 = vmatpush1.msra.mxu0 0.0
  %1493 = vmatprep.subr.mxu0 0.0
  %1494 = vmatpush1.msra.mxu0 0.0
  %1495 = vmatprep.subr.mxu0 0.0
  %1496 = vmatpush1.msra.mxu0 0.0
  %1497 = vmatprep.subr.mxu0 0.0
  %1498 = vmatpush1.msra.mxu0 0.0
  %1499 = vmatprep.subr.mxu0 0.0
  %1500 = vmatpush1.msra.mxu0 0.0
  %1501 = vmatprep.subr.mxu0 0.0
  %1502 = vmatpush1.msra.mxu0 0.0
  %1503 = vmatprep.subr.mxu0 0.0
  %1504 = vmatpush1.msra.mxu0 0.0
  %1505 = vmatprep.subr.mxu0 0.0
  %1506 = vmatpush1.msra.mxu0 0.0
  %1507 = vmatprep.subr.mxu0 0.0
  %1508 = vmatpush1.msra.mxu0 0.0
  %1509 = vmatprep.subr.mxu0 0.0
  %1510 = vmatpush1.msra.mxu0 0.0
  %1511 = vmatprep.subr.mxu0 0.0
  %1512 = vmatpush1.msra.mxu0 0.0
  %1513 = vmatprep.subr.mxu0 0.0
  %1514 = vmatpush1.msra.mxu0 0.0
  %1515 = vmatprep.subr.mxu0 0.0
  %1516 = vmatpush1.msra.mxu0 0.0
  %1517 = vmatprep.subr.mxu0 0.0
  %1518 = vmatpush1.msra.mxu0 0.0
  %1519 = vmatprep.subr.mxu0 0.0
  %1520 = vmatpush1.msra.mxu0 0.0
  %1521 = vmatprep.subr.mxu0 0.0
  %1522 = vmatpush1.msra.mxu0 0.0
  %1523 = vmatprep.subr.mxu0 0.0
  %1524 = vmatpush1.msra.mxu0 0.0
  %1525 = vmatprep.mubr.f32.mxu0 0.0
  %1526 = vmatmul.mubr.f32.gmra.mrb[0].mxu0 %v1459
  %v1527 = vpop.f32.mrb[0].mxu0
  %v1528 = vadd.f32 0.0, %v1527
  %v1529 = vpop.f32.mrb[0].mxu0
  %1530 = vdwg.mxu0
  %1531 = vrot.lane.b32.xlu0 %v946, 64
  %v1532 = vpop.permute.xlu0 %1531
  %v1535 = vsel %vm187, %v1302, 0
  %1537 = vmatprep.subr.mxu0 0.0
  %1538 = vmatpush1.msra.mxu0 %v1532
  %1539 = vmatprep.subr.mxu0 0.0
  %1540 = vmatpush1.msra.mxu0 0.0
  %1541 = vmatprep.subr.mxu0 0.0
  %1542 = vmatpush1.msra.mxu0 0.0
  %1543 = vmatprep.subr.mxu0 0.0
  %1544 = vmatpush1.msra.mxu0 0.0
  %1545 = vmatprep.subr.mxu0 0.0
  %1546 = vmatpush1.msra.mxu0 0.0
  %1547 = vmatprep.subr.mxu0 0.0
  %1548 = vmatpush1.msra.mxu0 0.0
  %1549 = vmatprep.subr.mxu0 0.0
  %1550 = vmatpush1.msra.mxu0 0.0
  %1551 = vmatprep.subr.mxu0 0.0
  %1552 = vmatpush1.msra.mxu0 0.0
  %1553 = vmatprep.subr.mxu0 0.0
  %1554 = vmatpush1.msra.mxu0 0.0
  %1555 = vmatprep.subr.mxu0 0.0
  %1556 = vmatpush1.msra.mxu0 0.0
  %1557 = vmatprep.subr.mxu0 0.0
  %1558 = vmatpush1.msra.mxu0 0.0
  %1559 = vmatprep.subr.mxu0 0.0
  %1560 = vmatpush1.msra.mxu0 0.0
  %1561 = vmatprep.subr.mxu0 0.0
  %1562 = vmatpush1.msra.mxu0 0.0
  %1563 = vmatprep.subr.mxu0 0.0
  %1564 = vmatpush1.msra.mxu0 0.0
  %1565 = vmatprep.subr.mxu0 0.0
  %1566 = vmatpush1.msra.mxu0 0.0
  %1567 = vmatprep.subr.mxu0 0.0
  %1568 = vmatpush1.msra.mxu0 0.0
  %1569 = vmatprep.subr.mxu0 0.0
  %1570 = vmatpush1.msra.mxu0 0.0
  %1571 = vmatprep.subr.mxu0 0.0
  %1572 = vmatpush1.msra.mxu0 0.0
  %1573 = vmatprep.subr.mxu0 0.0
  %1574 = vmatpush1.msra.mxu0 0.0
  %1575 = vmatprep.subr.mxu0 0.0
  %1576 = vmatpush1.msra.mxu0 0.0
  %1577 = vmatprep.subr.mxu0 0.0
  %1578 = vmatpush1.msra.mxu0 0.0
  %1579 = vmatprep.subr.mxu0 0.0
  %1580 = vmatpush1.msra.mxu0 0.0
  %1581 = vmatprep.subr.mxu0 0.0
  %1582 = vmatpush1.msra.mxu0 0.0
  %1583 = vmatprep.subr.mxu0 0.0
  %1584 = vmatpush1.msra.mxu0 0.0
  %1585 = vmatprep.subr.mxu0 0.0
  %1586 = vmatpush1.msra.mxu0 0.0
  %1587 = vmatprep.subr.mxu0 0.0
  %1588 = vmatpush1.msra.mxu0 0.0
  %1589 = vmatprep.subr.mxu0 0.0
  %1590 = vmatpush1.msra.mxu0 0.0
  %1591 = vmatprep.subr.mxu0 0.0
  %1592 = vmatpush1.msra.mxu0 0.0
  %1593 = vmatprep.subr.mxu0 0.0
  %1594 = vmatpush1.msra.mxu0 0.0
  %1595 = vmatprep.subr.mxu0 0.0
  %1596 = vmatpush1.msra.mxu0 0.0
  %1597 = vmatprep.subr.mxu0 0.0
  %1598 = vmatpush1.msra.mxu0 0.0
  %1599 = vmatprep.subr.mxu0 0.0
  %1600 = vmatpush1.msra.mxu0 0.0
  %1601 = vmatprep.mubr.f32.mxu0 0.0
  %1602 = vmatmul.mubr.f32.gmra.mrb[0].mxu0 %v1535
  %v1603 = vpop.f32.mrb[0].mxu0
  %v1604 = vadd.f32 0.0, %v1603
  %v1605 = vpop.f32.mrb[0].mxu0
  %1606 = vdwg.mxu0
  %1608 = vrot.lane.b32.xlu0 %v1452, 8
  %v1609 = vpop.permute.xlu0 %1608
  %1612 = vrot.lane.b32.xlu0 %v1528, 16
  %v1613 = vpop.permute.xlu0 %1612
  %1616 = vrot.lane.b32.xlu0 %v1604, 24
  %v1617 = vpop.permute.xlu0 %1616
  %v1619 = vsel %vm187, %v1376, %v1609
  %v1620 = vsel %vm859, %v1619, %v1613
  %v1621 = vsel %vm861, %v1620, %v1617
  %v1622 = vld [vmem:[%s5] sm:$0xff]
  %v1623 = vld [vmem:[%s5 + $0x8] sm:$0xff]
  %v1624 = vld [vmem:[%s5 + $0x10] sm:$0xff]
  %v1625 = vld [vmem:[%s5 + $0x18] sm:$0xff]
  %v1627 = vsel %vm96, %v1621, 0
  %1629 = vmatprep.subr.mxu0 0.0
  %1630 = vmatpush1.msra.mxu0 %v1622
  %1631 = vmatprep.subr.mxu0 0.0
  %1632 = vmatpush1.msra.mxu0 %v1623
  %1633 = vmatprep.subr.mxu0 0.0
  %1634 = vmatpush1.msra.mxu0 %v1624
  %1635 = vmatprep.subr.mxu0 0.0
  %1636 = vmatpush1.msra.mxu0 %v1625
  %1637 = vmatprep.subr.mxu0 0.0
  %1638 = vmatpush1.msra.mxu0 0.0
  %1639 = vmatprep.subr.mxu0 0.0
  %1640 = vmatpush1.msra.mxu0 0.0
  %1641 = vmatprep.subr.mxu0 0.0
  %1642 = vmatpush1.msra.mxu0 0.0
  %1643 = vmatprep.subr.mxu0 0.0
  %1644 = vmatpush1.msra.mxu0 0.0
  %1645 = vmatprep.subr.mxu0 0.0
  %1646 = vmatpush1.msra.mxu0 0.0
  %1647 = vmatprep.subr.mxu0 0.0
  %1648 = vmatpush1.msra.mxu0 0.0
  %1649 = vmatprep.subr.mxu0 0.0
  %1650 = vmatpush1.msra.mxu0 0.0
  %1651 = vmatprep.subr.mxu0 0.0
  %1652 = vmatpush1.msra.mxu0 0.0
  %1653 = vmatprep.subr.mxu0 0.0
  %1654 = vmatpush1.msra.mxu0 0.0
  %1655 = vmatprep.subr.mxu0 0.0
  %1656 = vmatpush1.msra.mxu0 0.0
  %1657 = vmatprep.subr.mxu0 0.0
  %1658 = vmatpush1.msra.mxu0 0.0
  %1659 = vmatprep.subr.mxu0 0.0
  %1660 = vmatpush1.msra.mxu0 0.0
  %1661 = vmatprep.subr.mxu0 0.0
  %1662 = vmatpush1.msra.mxu0 0.0
  %1663 = vmatprep.subr.mxu0 0.0
  %1664 = vmatpush1.msra.mxu0 0.0
  %1665 = vmatprep.subr.mxu0 0.0
  %1666 = vmatpush1.msra.mxu0 0.0
  %1667 = vmatprep.subr.mxu0 0.0
  %1668 = vmatpush1.msra.mxu0 0.0
  %1669 = vmatprep.subr.mxu0 0.0
  %1670 = vmatpush1.msra.mxu0 0.0
  %1671 = vmatprep.subr.mxu0 0.0
  %1672 = vmatpush1.msra.mxu0 0.0
  %1673 = vmatprep.subr.mxu0 0.0
  %1674 = vmatpush1.msra.mxu0 0.0
  %1675 = vmatprep.subr.mxu0 0.0
  %1676 = vmatpush1.msra.mxu0 0.0
  %1677 = vmatprep.subr.mxu0 0.0
  %1678 = vmatpush1.msra.mxu0 0.0
  %1679 = vmatprep.subr.mxu0 0.0
  %1680 = vmatpush1.msra.mxu0 0.0
  %1681 = vmatprep.subr.mxu0 0.0
  %1682 = vmatpush1.msra.mxu0 0.0
  %1683 = vmatprep.subr.mxu0 0.0
  %1684 = vmatpush1.msra.mxu0 0.0
  %1685 = vmatprep.subr.mxu0 0.0
  %1686 = vmatpush1.msra.mxu0 0.0
  %1687 = vmatprep.subr.mxu0 0.0
  %1688 = vmatpush1.msra.mxu0 0.0
  %1689 = vmatprep.subr.mxu0 0.0
  %1690 = vmatpush1.msra.mxu0 0.0
  %1691 = vmatprep.subr.mxu0 0.0
  %1692 = vmatpush1.msra.mxu0 0.0
  %1693 = vmatprep.mubr.f32.mxu0 0.0
  %1694 = vmatmul.mubr.f32.gmra.mrb[0].mxu0 %v1627
  %v1695 = vpop.f32.mrb[0].mxu0
  %v1696 = vadd.f32 0.0, %v1695
  %v1697 = vpop.f32.mrb[0].mxu0
  %1698 = vdwg.mxu0
  %v1699 = vld [vmem:[%s6] sm:$0x1]
  %v1701 = vlaneseq
  %v1702 = vshrl.u32 %v1701, 7
  %v1703 = vsub.s32 0, %v1702
  %v1704 = vrot.slane %v1699, %v1703
  %v1706 = vadd.f32 %v937, %v1704
  %v1707 = vadd.f32 %v1696, %v1704
  %v1708 = vadd.f32 %v56, %v1706
  %v1709 = vadd.f32 %v57, %v1707
  %v1710 = vsel %vm96, %v1708, 0.0
  %1711 = vadd.xlane.f32.xlu0 %v1710
  %v1712 = vpop.xlane.xlu0 %1711
  %v1713 = vsel %vm96, %v1709, 0.0
  %1714 = vadd.xlane.f32.xlu0 %v1713
  %v1715 = vpop.xlane.xlu0 %1714
  %v1716 = vrcp.pop 32.0
  %v1717 = vmul.f32 %v1712, %v1716
  %v1718 = vmul.f32 %v1715, %v1716
  %v1719 = vsub.f32 %v1708, %v1717
  %v1720 = vsub.f32 %v1709, %v1718
  %v1721 = vmul.f32 %v1719, %v1719
  %v1722 = vmul.f32 %v1720, %v1720
  %v1723 = vsel %vm96, %v1721, 0.0
  %1724 = vadd.xlane.f32.xlu0 %v1723
  %v1725 = vpop.xlane.xlu0 %1724
  %v1726 = vsel %vm96, %v1722, 0.0
  %1727 = vadd.xlane.f32.xlu0 %v1726
  %v1728 = vpop.xlane.xlu0 %1727
  %v1729 = vmul.f32 %v1725, %v1716
  %v1730 = vmul.f32 %v1728, %v1716
  %v1731 = vld [vmem:[%s7] sm:$0x1]
  %v1732 = vadd.f32 %v1729, 1e-05
  %v1733 = vadd.f32 %v1730, 1e-05
  %v1734 = vrsqrt.pop %v1732
  %v1735 = vrsqrt.pop %v1733
  %v1736 = vmul.f32 %v1719, %v1734
  %v1737 = vmul.f32 %v1720, %v1735
  %v1739 = vlaneseq
  %v1740 = vshrl.u32 %v1739, 7
  %v1741 = vsub.s32 0, %v1740
  %v1742 = vrot.slane %v1731, %v1741
  %v1744 = vmul.f32 %v1742, %v1736
  %v1745 = vmul.f32 %v1742, %v1737
  %v1746 = vld [vmem:[%s8] sm:$0x1]
  %v1748 = vlaneseq
  %v1749 = vshrl.u32 %v1748, 7
  %v1750 = vsub.s32 0, %v1749
  %v1751 = vrot.slane %v1746, %v1750
  %v1753 = vadd.f32 %v1744, %v1751
  %v1754 = vadd.f32 %v1745, %v1751
  %v1755 = vld [vmem:[%s9] sm:$0xff]
  %v1756 = vld [vmem:[%s9 + $0x8] sm:$0xff]
  %v1757 = vld [vmem:[%s9 + $0x10] sm:$0xff]
  %v1758 = vld [vmem:[%s9 + $0x18] sm:$0xff]
  %v1759 = vld [vmem:[%s10] sm:$0x1]
  %v1761 = vlaneseq
  %v1762 = vshrl.u32 %v1761, 7
  %v1763 = vsub.s32 0, %v1762
  %v1764 = vrot.slane %v1759, %v1763
  %v1767 = vsel %vm96, %v1753, 0
  %v1770 = vsel %vm96, %v1754, 0
  %1772 = vmatprep.subr.mxu0 0.0
  %1773 = vmatpush1.msra.mxu0 %v1755
  %1774 = vmatprep.subr.mxu0 0.0
  %1775 = vmatpush1.msra.mxu0 %v1756
  %1776 = vmatprep.subr.mxu0 0.0
  %1777 = vmatpush1.msra.mxu0 %v1757
  %1778 = vmatprep.subr.mxu0 0.0
  %1779 = vmatpush1.msra.mxu0 %v1758
  %1780 = vmatprep.subr.mxu0 0.0
  %1781 = vmatpush1.msra.mxu0 0.0
  %1782 = vmatprep.subr.mxu0 0.0
  %1783 = vmatpush1.msra.mxu0 0.0
  %1784 = vmatprep.subr.mxu0 0.0
  %1785 = vmatpush1.msra.mxu0 0.0
  %1786 = vmatprep.subr.mxu0 0.0
  %1787 = vmatpush1.msra.mxu0 0.0
  %1788 = vmatprep.subr.mxu0 0.0
  %1789 = vmatpush1.msra.mxu0 0.0
  %1790 = vmatprep.subr.mxu0 0.0
  %1791 = vmatpush1.msra.mxu0 0.0
  %1792 = vmatprep.subr.mxu0 0.0
  %1793 = vmatpush1.msra.mxu0 0.0
  %1794 = vmatprep.subr.mxu0 0.0
  %1795 = vmatpush1.msra.mxu0 0.0
  %1796 = vmatprep.subr.mxu0 0.0
  %1797 = vmatpush1.msra.mxu0 0.0
  %1798 = vmatprep.subr.mxu0 0.0
  %1799 = vmatpush1.msra.mxu0 0.0
  %1800 = vmatprep.subr.mxu0 0.0
  %1801 = vmatpush1.msra.mxu0 0.0
  %1802 = vmatprep.subr.mxu0 0.0
  %1803 = vmatpush1.msra.mxu0 0.0
  %1804 = vmatprep.subr.mxu0 0.0
  %1805 = vmatpush1.msra.mxu0 0.0
  %1806 = vmatprep.subr.mxu0 0.0
  %1807 = vmatpush1.msra.mxu0 0.0
  %1808 = vmatprep.subr.mxu0 0.0
  %1809 = vmatpush1.msra.mxu0 0.0
  %1810 = vmatprep.subr.mxu0 0.0
  %1811 = vmatpush1.msra.mxu0 0.0
  %1812 = vmatprep.subr.mxu0 0.0
  %1813 = vmatpush1.msra.mxu0 0.0
  %1814 = vmatprep.subr.mxu0 0.0
  %1815 = vmatpush1.msra.mxu0 0.0
  %1816 = vmatprep.subr.mxu0 0.0
  %1817 = vmatpush1.msra.mxu0 0.0
  %1818 = vmatprep.subr.mxu0 0.0
  %1819 = vmatpush1.msra.mxu0 0.0
  %1820 = vmatprep.subr.mxu0 0.0
  %1821 = vmatpush1.msra.mxu0 0.0
  %1822 = vmatprep.subr.mxu0 0.0
  %1823 = vmatpush1.msra.mxu0 0.0
  %1824 = vmatprep.subr.mxu0 0.0
  %1825 = vmatpush1.msra.mxu0 0.0
  %1826 = vmatprep.subr.mxu0 0.0
  %1827 = vmatpush1.msra.mxu0 0.0
  %1828 = vmatprep.subr.mxu0 0.0
  %1829 = vmatpush1.msra.mxu0 0.0
  %1830 = vmatprep.subr.mxu0 0.0
  %1831 = vmatpush1.msra.mxu0 0.0
  %1832 = vmatprep.subr.mxu0 0.0
  %1833 = vmatpush1.msra.mxu0 0.0
  %1834 = vmatprep.subr.mxu0 0.0
  %1835 = vmatpush1.msra.mxu0 0.0
  %1836 = vmatprep.mubr.f32.mxu0 0.0
  %1837 = vmatmul.mubr.f32.gmra.mrb[0].mxu0 %v1767
  %v1838 = vpop.f32.mrb[0].mxu0
  %v1839 = vadd.f32 %v1764, %v1838
  %v1840 = vpop.f32.mrb[0].mxu0
  %1841 = vmatprep.mubr.f32.mxu0 0.0
  %1842 = vmatmul.mubr.f32.gmra.mrb[0].mxu0 %v1770
  %v1843 = vpop.f32.mrb[0].mxu0
  %v1844 = vadd.f32 %v1764, %v1843
  %v1845 = vpop.f32.mrb[0].mxu0
  %1846 = vdwg.mxu0
  %v1847 = vmul.f32 %v1839, 0.5
  %v1848 = vmul.f32 %v1844, 0.5
  %v1849 = vmul.f32 %v1839, 0.70710677
  %v1850 = vmul.f32 %v1844, 0.70710677
  %v1851 = verf.f32.pop %v1849
  %v1852 = verf.f32.pop %v1850
  %v1853 = vadd.f32 %v1851, 1.0
  %v1854 = vadd.f32 %v1852, 1.0
  %v1855 = vmul.f32 %v1847, %v1853
  %v1856 = vmul.f32 %v1848, %v1854
  %v1857 = vld [vmem:[%s11] sm:$0xff]
  %v1858 = vld [vmem:[%s11 + $0x8] sm:$0xff]
  %v1859 = vld [vmem:[%s11 + $0x10] sm:$0xff]
  %v1860 = vld [vmem:[%s11 + $0x18] sm:$0xff]
  %v1861 = vld [vmem:[%s11 + $0x20] sm:$0xff]
  %v1862 = vld [vmem:[%s11 + $0x28] sm:$0xff]
  %v1863 = vld [vmem:[%s11 + $0x30] sm:$0xff]
  %v1864 = vld [vmem:[%s11 + $0x38] sm:$0xff]
  %v1865 = vld [vmem:[%s11 + $0x40] sm:$0xff]
  %v1866 = vld [vmem:[%s11 + $0x48] sm:$0xff]
  %v1867 = vld [vmem:[%s11 + $0x50] sm:$0xff]
  %v1868 = vld [vmem:[%s11 + $0x58] sm:$0xff]
  %v1869 = vld [vmem:[%s11 + $0x60] sm:$0xff]
  %v1870 = vld [vmem:[%s11 + $0x68] sm:$0xff]
  %v1871 = vld [vmem:[%s11 + $0x70] sm:$0xff]
  %v1872 = vld [vmem:[%s11 + $0x78] sm:$0xff]
  %v1873 = vld [vmem:[%s12] sm:$0x1]
  %v1875 = vlaneseq
  %v1876 = vshrl.u32 %v1875, 7
  %v1877 = vsub.s32 0, %v1876
  %v1878 = vrot.slane %v1873, %v1877
  %1880 = vmatprep.subr.mxu0 0.0
  %1881 = vmatpush1.msra.mxu0 %v1857
  %1882 = vmatprep.subr.mxu0 0.0
  %1883 = vmatpush1.msra.mxu0 %v1858
  %1884 = vmatprep.subr.mxu0 0.0
  %1885 = vmatpush1.msra.mxu0 %v1859
  %1886 = vmatprep.subr.mxu0 0.0
  %1887 = vmatpush1.msra.mxu0 %v1860
  %1888 = vmatprep.subr.mxu0 0.0
  %1889 = vmatpush1.msra.mxu0 %v1861
  %1890 = vmatprep.subr.mxu0 0.0
  %1891 = vmatpush1.msra.mxu0 %v1862
  %1892 = vmatprep.subr.mxu0 0.0
  %1893 = vmatpush1.msra.mxu0 %v1863
  %1894 = vmatprep.subr.mxu0 0.0
  %1895 = vmatpush1.msra.mxu0 %v1864
  %1896 = vmatprep.subr.mxu0 0.0
  %1897 = vmatpush1.msra.mxu0 %v1865
  %1898 = vmatprep.subr.mxu0 0.0
  %1899 = vmatpush1.msra.mxu0 %v1866
  %1900 = vmatprep.subr.mxu0 0.0
  %1901 = vmatpush1.msra.mxu0 %v1867
  %1902 = vmatprep.subr.mxu0 0.0
  %1903 = vmatpush1.msra.mxu0 %v1868
  %1904 = vmatprep.subr.mxu0 0.0
  %1905 = vmatpush1.msra.mxu0 %v1869
  %1906 = vmatprep.subr.mxu0 0.0
  %1907 = vmatpush1.msra.mxu0 %v1870
  %1908 = vmatprep.subr.mxu0 0.0
  %1909 = vmatpush1.msra.mxu0 %v1871
  %1910 = vmatprep.subr.mxu0 0.0
  %1911 = vmatpush1.msra.mxu0 %v1872
  %1912 = vmatprep.subr.mxu0 0.0
  %1913 = vmatpush1.msra.mxu0 0.0
  %1914 = vmatprep.subr.mxu0 0.0
  %1915 = vmatpush1.msra.mxu0 0.0
  %1916 = vmatprep.subr.mxu0 0.0
  %1917 = vmatpush1.msra.mxu0 0.0
  %1918 = vmatprep.subr.mxu0 0.0
  %1919 = vmatpush1.msra.mxu0 0.0
  %1920 = vmatprep.subr.mxu0 0.0
  %1921 = vmatpush1.msra.mxu0 0.0
  %1922 = vmatprep.subr.mxu0 0.0
  %1923 = vmatpush1.msra.mxu0 0.0
  %1924 = vmatprep.subr.mxu0 0.0
  %1925 = vmatpush1.msra.mxu0 0.0
  %1926 = vmatprep.subr.mxu0 0.0
  %1927 = vmatpush1.msra.mxu0 0.0
  %1928 = vmatprep.subr.mxu0 0.0
  %1929 = vmatpush1.msra.mxu0 0.0
  %1930 = vmatprep.subr.mxu0 0.0
  %1931 = vmatpush1.msra.mxu0 0.0
  %1932 = vmatprep.subr.mxu0 0.0
  %1933 = vmatpush1.msra.mxu0 0.0
  %1934 = vmatprep.subr.mxu0 0.0
  %1935 = vmatpush1.msra.mxu0 0.0
  %1936 = vmatprep.subr.mxu0 0.0
  %1937 = vmatpush1.msra.mxu0 0.0
  %1938 = vmatprep.subr.mxu0 0.0
  %1939 = vmatpush1.msra.mxu0 0.0
  %1940 = vmatprep.subr.mxu0 0.0
  %1941 = vmatpush1.msra.mxu0 0.0
  %1942 = vmatprep.subr.mxu0 0.0
  %1943 = vmatpush1.msra.mxu0 0.0
  %1944 = vmatprep.mubr.f32.mxu0 0.0
  %1945 = vmatmul.mubr.f32.gmra.mrb[0].mxu0 %v1855
  %v1946 = vpop.f32.mrb[0].mxu0
  %v1947 = vadd.f32 %v1878, %v1946
  %v1948 = vpop.f32.mrb[0].mxu0
  %1949 = vmatprep.mubr.f32.mxu0 0.0
  %1950 = vmatmul.mubr.f32.gmra.mrb[0].mxu0 %v1856
  %v1951 = vpop.f32.mrb[0].mxu0
  %v1952 = vadd.f32 %v1878, %v1951
  %v1953 = vpop.f32.mrb[0].mxu0
  %1954 = vdwg.mxu0
  %v1955 = vadd.f32 %v1753, %v1947
  %v1956 = vadd.f32 %v1754, %v1952
  %v1957 = vsel %vm96, %v1955, 0.0
  %1958 = vadd.xlane.f32.xlu0 %v1957
  %v1959 = vpop.xlane.xlu0 %1958
  %v1960 = vsel %vm96, %v1956, 0.0
  %1961 = vadd.xlane.f32.xlu0 %v1960
  %v1962 = vpop.xlane.xlu0 %1961
  %v1963 = vmul.f32 %v1959, %v1716
  %v1964 = vmul.f32 %v1962, %v1716
  %v1965 = vsub.f32 %v1955, %v1963
  %v1966 = vsub.f32 %v1956, %v1964
  %v1967 = vmul.f32 %v1965, %v1965
  %v1968 = vmul.f32 %v1966, %v1966
  %v1969 = vsel %vm96, %v1967, 0.0
  %1970 = vadd.xlane.f32.xlu0 %v1969
  %v1971 = vpop.xlane.xlu0 %1970
  %v1972 = vsel %vm96, %v1968, 0.0
  %1973 = vadd.xlane.f32.xlu0 %v1972
  %v1974 = vpop.xlane.xlu0 %1973
  %v1975 = vmul.f32 %v1971, %v1716
  %v1976 = vmul.f32 %v1974, %v1716
  %v1977 = vld [vmem:[%s13] sm:$0x1]
  %v1978 = vadd.f32 %v1975, 1e-05
  %v1979 = vadd.f32 %v1976, 1e-05
  %v1980 = vrsqrt.pop %v1978
  %v1981 = vrsqrt.pop %v1979
  %v1982 = vmul.f32 %v1965, %v1980
  %v1983 = vmul.f32 %v1966, %v1981
  %v1985 = vlaneseq
  %v1986 = vshrl.u32 %v1985, 7
  %v1987 = vsub.s32 0, %v1986
  %v1988 = vrot.slane %v1977, %v1987
  %v1990 = vmul.f32 %v1988, %v1982
  %v1991 = vmul.f32 %v1988, %v1983
  %v1992 = vld [vmem:[%s14] sm:$0x1]
  %v1994 = vlaneseq
  %v1995 = vshrl.u32 %v1994, 7
  %v1996 = vsub.s32 0, %v1995
  %v1997 = vrot.slane %v1992, %v1996
  %v1999 = vadd.f32 %v1990, %v1997
  %v2000 = vadd.f32 %v1991, %v1997
  %s2001 = scalar_lea.vmem %s3, 32
  %v2002 = vld [vmem:[%s2001] sm:$0xff]
  %v2003 = vld [vmem:[%s2001 + $0x8] sm:$0xff]
  %v2004 = vld [vmem:[%s2001 + $0x10] sm:$0xff]
  %v2005 = vld [vmem:[%s2001 + $0x18] sm:$0xff]
  %s2006 = scalar_lea.vmem %s4, 1
  %v2007 = vld [vmem:[%s2006] sm:$0x1]
  %v2009 = vlaneseq
  %v2010 = vshrl.u32 %v2009, 7
  %v2011 = vsub.s32 0, %v2010
  %v2012 = vrot.slane %v2007, %v2011
  %v2015 = vsel %vm96, %v1999, 0
  %v2018 = vsel %vm96, %v2000, 0
  %2020 = vmatprep.subr.mxu0 0.0
  %2021 = vmatpush1.msra.mxu0 %v2002
  %2022 = vmatprep.subr.mxu0 0.0
  %2023 = vmatpush1.msra.mxu0 %v2003
  %2024 = vmatprep.subr.mxu0 0.0
  %2025 = vmatpush1.msra.mxu0 %v2004
  %2026 = vmatprep.subr.mxu0 0.0
  %2027 = vmatpush1.msra.mxu0 %v2005
  %2028 = vmatprep.subr.mxu0 0.0
  %2029 = vmatpush1.msra.mxu0 0.0
  %2030 = vmatprep.subr.mxu0 0.0
  %2031 = vmatpush1.msra.mxu0 0.0
  %2032 = vmatprep.subr.mxu0 0.0
  %2033 = vmatpush1.msra.mxu0 0.0
  %2034 = vmatprep.subr.mxu0 0.0
  %2035 = vmatpush1.msra.mxu0 0.0
  %2036 = vmatprep.subr.mxu0 0.0
  %2037 = vmatpush1.msra.mxu0 0.0
  %2038 = vmatprep.subr.mxu0 0.0
  %2039 = vmatpush1.msra.mxu0 0.0
  %2040 = vmatprep.subr.mxu0 0.0
  %2041 = vmatpush1.msra.mxu0 0.0
  %2042 = vmatprep.subr.mxu0 0.0
  %2043 = vmatpush1.msra.mxu0 0.0
  %2044 = vmatprep.subr.mxu0 0.0
  %2045 = vmatpush1.msra.mxu0 0.0
  %2046 = vmatprep.subr.mxu0 0.0
  %2047 = vmatpush1.msra.mxu0 0.0
  %2048 = vmatprep.subr.mxu0 0.0
  %2049 = vmatpush1.msra.mxu0 0.0
  %2050 = vmatprep.subr.mxu0 0.0
  %2051 = vmatpush1.msra.mxu0 0.0
  %2052 = vmatprep.subr.mxu0 0.0
  %2053 = vmatpush1.msra.mxu0 0.0
  %2054 = vmatprep.subr.mxu0 0.0
  %2055 = vmatpush1.msra.mxu0 0.0
  %2056 = vmatprep.subr.mxu0 0.0
  %2057 = vmatpush1.msra.mxu0 0.0
  %2058 = vmatprep.subr.mxu0 0.0
  %2059 = vmatpush1.msra.mxu0 0.0
  %2060 = vmatprep.subr.mxu0 0.0
  %2061 = vmatpush1.msra.mxu0 0.0
  %2062 = vmatprep.subr.mxu0 0.0
  %2063 = vmatpush1.msra.mxu0 0.0
  %2064 = vmatprep.subr.mxu0 0.0
  %2065 = vmatpush1.msra.mxu0 0.0
  %2066 = vmatprep.subr.mxu0 0.0
  %2067 = vmatpush1.msra.mxu0 0.0
  %2068 = vmatprep.subr.mxu0 0.0
  %2069 = vmatpush1.msra.mxu0 0.0
  %2070 = vmatprep.subr.mxu0 0.0
  %2071 = vmatpush1.msra.mxu0 0.0
  %2072 = vmatprep.subr.mxu0 0.0
  %2073 = vmatpush1.msra.mxu0 0.0
  %2074 = vmatprep.subr.mxu0 0.0
  %2075 = vmatpush1.msra.mxu0 0.0
  %2076 = vmatprep.subr.mxu0 0.0
  %2077 = vmatpush1.msra.mxu0 0.0
  %2078 = vmatprep.subr.mxu0 0.0
  %2079 = vmatpush1.msra.mxu0 0.0
  %2080 = vmatprep.subr.mxu0 0.0
  %2081 = vmatpush1.msra.mxu0 0.0
  %2082 = vmatprep.subr.mxu0 0.0
  %2083 = vmatpush1.msra.mxu0 0.0
  %2084 = vmatprep.mubr.f32.mxu0 0.0
  %2085 = vmatmul.mubr.f32.gmra.mrb[0].mxu0 %v2015
  %v2086 = vpop.f32.mrb[0].mxu0
  %v2087 = vadd.f32 %v2012, %v2086
  %v2088 = vpop.f32.mrb[0].mxu0
  %2089 = vmatprep.mubr.f32.mxu0 0.0
  %2090 = vmatmul.mubr.f32.gmra.mrb[0].mxu0 %v2018
  %v2091 = vpop.f32.mrb[0].mxu0
  %v2092 = vadd.f32 %v2012, %v2091
  %v2093 = vpop.f32.mrb[0].mxu0
  %2094 = vdwg.mxu0
  %2096 = vrot.lane.b32.xlu0 %v2087, 120
  %v2097 = vpop.permute.xlu0 %2096
  %2098 = vrot.lane.b32.xlu0 %v2087, 112
  %v2099 = vpop.permute.xlu0 %2098
  %2100 = vrot.lane.b32.xlu0 %v2087, 104
  %v2101 = vpop.permute.xlu0 %2100
  %2102 = vrot.lane.b32.xlu0 %v2087, 96
  %v2103 = vpop.permute.xlu0 %2102
  %v2104 = vsel %vm187, %v2087, 0
  %v2106 = vsel %vm187, %v2103, 0
  %2108 = vmatprep.subr.mxu0 0.0
  %2109 = vmatpush1.xpose.msra.mxu0 %v2106
  %2110 = vmatprep.subr.mxu0 0.0
  %2111 = vmatpush1.xpose.msra.mxu0 0.0
  %2112 = vmatprep.subr.mxu0 0.0
  %2113 = vmatpush1.xpose.msra.mxu0 0.0
  %2114 = vmatprep.subr.mxu0 0.0
  %2115 = vmatpush1.xpose.msra.mxu0 0.0
  %2116 = vmatprep.subr.mxu0 0.0
  %2117 = vmatpush1.xpose.msra.mxu0 0.0
  %2118 = vmatprep.subr.mxu0 0.0
  %2119 = vmatpush1.xpose.msra.mxu0 0.0
  %2120 = vmatprep.subr.mxu0 0.0
  %2121 = vmatpush1.xpose.msra.mxu0 0.0
  %2122 = vmatprep.subr.mxu0 0.0
  %2123 = vmatpush1.xpose.msra.mxu0 0.0
  %2124 = vmatprep.subr.mxu0 0.0
  %2125 = vmatpush1.xpose.msra.mxu0 0.0
  %2126 = vmatprep.subr.mxu0 0.0
  %2127 = vmatpush1.xpose.msra.mxu0 0.0
  %2128 = vmatprep.subr.mxu0 0.0
  %2129 = vmatpush1.xpose.msra.mxu0 0.0
  %2130 = vmatprep.subr.mxu0 0.0
  %2131 = vmatpush1.xpose.msra.mxu0 0.0
  %2132 = vmatprep.subr.mxu0 0.0
  %2133 = vmatpush1.xpose.msra.mxu0 0.0
  %2134 = vmatprep.subr.mxu0 0.0
  %2135 = vmatpush1.xpose.msra.mxu0 0.0
  %2136 = vmatprep.subr.mxu0 0.0
  %2137 = vmatpush1.xpose.msra.mxu0 0.0
  %2138 = vmatprep.subr.mxu0 0.0
  %2139 = vmatpush1.xpose.msra.mxu0 0.0
  %2140 = vmatprep.subr.mxu0 0.0
  %2141 = vmatpush1.xpose.msra.mxu0 0.0
  %2142 = vmatprep.subr.mxu0 0.0
  %2143 = vmatpush1.xpose.msra.mxu0 0.0
  %2144 = vmatprep.subr.mxu0 0.0
  %2145 = vmatpush1.xpose.msra.mxu0 0.0
  %2146 = vmatprep.subr.mxu0 0.0
  %2147 = vmatpush1.xpose.msra.mxu0 0.0
  %2148 = vmatprep.subr.mxu0 0.0
  %2149 = vmatpush1.xpose.msra.mxu0 0.0
  %2150 = vmatprep.subr.mxu0 0.0
  %2151 = vmatpush1.xpose.msra.mxu0 0.0
  %2152 = vmatprep.subr.mxu0 0.0
  %2153 = vmatpush1.xpose.msra.mxu0 0.0
  %2154 = vmatprep.subr.mxu0 0.0
  %2155 = vmatpush1.xpose.msra.mxu0 0.0
  %2156 = vmatprep.subr.mxu0 0.0
  %2157 = vmatpush1.xpose.msra.mxu0 0.0
  %2158 = vmatprep.subr.mxu0 0.0
  %2159 = vmatpush1.xpose.msra.mxu0 0.0
  %2160 = vmatprep.subr.mxu0 0.0
  %2161 = vmatpush1.xpose.msra.mxu0 0.0
  %2162 = vmatprep.subr.mxu0 0.0
  %2163 = vmatpush1.xpose.msra.mxu0 0.0
  %2164 = vmatprep.subr.mxu0 0.0
  %2165 = vmatpush1.xpose.msra.mxu0 0.0
  %2166 = vmatprep.subr.mxu0 0.0
  %2167 = vmatpush1.xpose.msra.mxu0 0.0
  %2168 = vmatprep.subr.mxu0 0.0
  %2169 = vmatpush1.xpose.msra.mxu0 0.0
  %2170 = vmatprep.subr.mxu0 0.0
  %2171 = vmatpush1.xpose.msra.mxu0 0.0
  %2172 = vmatprep.mubr.f32.mxu0 0.0
  %2173 = vmatmul.mubr.f32.gmra.mrb[0].mxu0 %v2104
  %v2174 = vpop.f32.mrb[0].mxu0
  %v2175 = vadd.f32 0.0, %v2174
  %v2176 = vpop.f32.mrb[0].mxu0
  %2177 = vdwg.mxu0
  %2178 = vrot.lane.b32.xlu0 %v2097, 96
  %v2179 = vpop.permute.xlu0 %2178
  %v2180 = vsel %vm187, %v2097, 0
  %v2182 = vsel %vm187, %v2179, 0
  %2184 = vmatprep.subr.mxu0 0.0
  %2185 = vmatpush1.xpose.msra.mxu0 %v2182
  %2186 = vmatprep.subr.mxu0 0.0
  %2187 = vmatpush1.xpose.msra.mxu0 0.0
  %2188 = vmatprep.subr.mxu0 0.0
  %2189 = vmatpush1.xpose.msra.mxu0 0.0
  %2190 = vmatprep.subr.mxu0 0.0
  %2191 = vmatpush1.xpose.msra.mxu0 0.0
  %2192 = vmatprep.subr.mxu0 0.0
  %2193 = vmatpush1.xpose.msra.mxu0 0.0
  %2194 = vmatprep.subr.mxu0 0.0
  %2195 = vmatpush1.xpose.msra.mxu0 0.0
  %2196 = vmatprep.subr.mxu0 0.0
  %2197 = vmatpush1.xpose.msra.mxu0 0.0
  %2198 = vmatprep.subr.mxu0 0.0
  %2199 = vmatpush1.xpose.msra.mxu0 0.0
  %2200 = vmatprep.subr.mxu0 0.0
  %2201 = vmatpush1.xpose.msra.mxu0 0.0
  %2202 = vmatprep.subr.mxu0 0.0
  %2203 = vmatpush1.xpose.msra.mxu0 0.0
  %2204 = vmatprep.subr.mxu0 0.0
  %2205 = vmatpush1.xpose.msra.mxu0 0.0
  %2206 = vmatprep.subr.mxu0 0.0
  %2207 = vmatpush1.xpose.msra.mxu0 0.0
  %2208 = vmatprep.subr.mxu0 0.0
  %2209 = vmatpush1.xpose.msra.mxu0 0.0
  %2210 = vmatprep.subr.mxu0 0.0
  %2211 = vmatpush1.xpose.msra.mxu0 0.0
  %2212 = vmatprep.subr.mxu0 0.0
  %2213 = vmatpush1.xpose.msra.mxu0 0.0
  %2214 = vmatprep.subr.mxu0 0.0
  %2215 = vmatpush1.xpose.msra.mxu0 0.0
  %2216 = vmatprep.subr.mxu0 0.0
  %2217 = vmatpush1.xpose.msra.mxu0 0.0
  %2218 = vmatprep.subr.mxu0 0.0
  %2219 = vmatpush1.xpose.msra.mxu0 0.0
  %2220 = vmatprep.subr.mxu0 0.0
  %2221 = vmatpush1.xpose.msra.mxu0 0.0
  %2222 = vmatprep.subr.mxu0 0.0
  %2223 = vmatpush1.xpose.msra.mxu0 0.0
  %2224 = vmatprep.subr.mxu0 0.0
  %2225 = vmatpush1.xpose.msra.mxu0 0.0
  %2226 = vmatprep.subr.mxu0 0.0
  %2227 = vmatpush1.xpose.msra.mxu0 0.0
  %2228 = vmatprep.subr.mxu0 0.0
  %2229 = vmatpush1.xpose.msra.mxu0 0.0
  %2230 = vmatprep.subr.mxu0 0.0
  %2231 = vmatpush1.xpose.msra.mxu0 0.0
  %2232 = vmatprep.subr.mxu0 0.0
  %2233 = vmatpush1.xpose.msra.mxu0 0.0
  %2234 = vmatprep.subr.mxu0 0.0
  %2235 = vmatpush1.xpose.msra.mxu0 0.0
  %2236 = vmatprep.subr.mxu0 0.0
  %2237 = vmatpush1.xpose.msra.mxu0 0.0
  %2238 = vmatprep.subr.mxu0 0.0
  %2239 = vmatpush1.xpose.msra.mxu0 0.0
  %2240 = vmatprep.subr.mxu0 0.0
  %2241 = vmatpush1.xpose.msra.mxu0 0.0
  %2242 = vmatprep.subr.mxu0 0.0
  %2243 = vmatpush1.xpose.msra.mxu0 0.0
  %2244 = vmatprep.subr.mxu0 0.0
  %2245 = vmatpush1.xpose.msra.mxu0 0.0
  %2246 = vmatprep.subr.mxu0 0.0
  %2247 = vmatpush1.xpose.msra.mxu0 0.0
  %2248 = vmatprep.mubr.f32.mxu0 0.0
  %2249 = vmatmul.mubr.f32.gmra.mrb[0].mxu0 %v2180
  %v2250 = vpop.f32.mrb[0].mxu0
  %v2251 = vadd.f32 0.0, %v2250
  %v2252 = vpop.f32.mrb[0].mxu0
  %2253 = vdwg.mxu0
  %2254 = vrot.lane.b32.xlu0 %v2099, 96
  %v2255 = vpop.permute.xlu0 %2254
  %v2256 = vsel %vm187, %v2099, 0
  %v2258 = vsel %vm187, %v2255, 0
  %2260 = vmatprep.subr.mxu0 0.0
  %2261 = vmatpush1.xpose.msra.mxu0 %v2258
  %2262 = vmatprep.subr.mxu0 0.0
  %2263 = vmatpush1.xpose.msra.mxu0 0.0
  %2264 = vmatprep.subr.mxu0 0.0
  %2265 = vmatpush1.xpose.msra.mxu0 0.0
  %2266 = vmatprep.subr.mxu0 0.0
  %2267 = vmatpush1.xpose.msra.mxu0 0.0
  %2268 = vmatprep.subr.mxu0 0.0
  %2269 = vmatpush1.xpose.msra.mxu0 0.0
  %2270 = vmatprep.subr.mxu0 0.0
  %2271 = vmatpush1.xpose.msra.mxu0 0.0
  %2272 = vmatprep.subr.mxu0 0.0
  %2273 = vmatpush1.xpose.msra.mxu0 0.0
  %2274 = vmatprep.subr.mxu0 0.0
  %2275 = vmatpush1.xpose.msra.mxu0 0.0
  %2276 = vmatprep.subr.mxu0 0.0
  %2277 = vmatpush1.xpose.msra.mxu0 0.0
  %2278 = vmatprep.subr.mxu0 0.0
  %2279 = vmatpush1.xpose.msra.mxu0 0.0
  %2280 = vmatprep.subr.mxu0 0.0
  %2281 = vmatpush1.xpose.msra.mxu0 0.0
  %2282 = vmatprep.subr.mxu0 0.0
  %2283 = vmatpush1.xpose.msra.mxu0 0.0
  %2284 = vmatprep.subr.mxu0 0.0
  %2285 = vmatpush1.xpose.msra.mxu0 0.0
  %2286 = vmatprep.subr.mxu0 0.0
  %2287 = vmatpush1.xpose.msra.mxu0 0.0
  %2288 = vmatprep.subr.mxu0 0.0
  %2289 = vmatpush1.xpose.msra.mxu0 0.0
  %2290 = vmatprep.subr.mxu0 0.0
  %2291 = vmatpush1.xpose.msra.mxu0 0.0
  %2292 = vmatprep.subr.mxu0 0.0
  %2293 = vmatpush1.xpose.msra.mxu0 0.0
  %2294 = vmatprep.subr.mxu0 0.0
  %2295 = vmatpush1.xpose.msra.mxu0 0.0
  %2296 = vmatprep.subr.mxu0 0.0
  %2297 = vmatpush1.xpose.msra.mxu0 0.0
  %2298 = vmatprep.subr.mxu0 0.0
  %2299 = vmatpush1.xpose.msra.mxu0 0.0
  %2300 = vmatprep.subr.mxu0 0.0
  %2301 = vmatpush1.xpose.msra.mxu0 0.0
  %2302 = vmatprep.subr.mxu0 0.0
  %2303 = vmatpush1.xpose.msra.mxu0 0.0
  %2304 = vmatprep.subr.mxu0 0.0
  %2305 = vmatpush1.xpose.msra.mxu0 0.0
  %2306 = vmatprep.subr.mxu0 0.0
  %2307 = vmatpush1.xpose.msra.mxu0 0.0
  %2308 = vmatprep.subr.mxu0 0.0
  %2309 = vmatpush1.xpose.msra.mxu0 0.0
  %2310 = vmatprep.subr.mxu0 0.0
  %2311 = vmatpush1.xpose.msra.mxu0 0.0
  %2312 = vmatprep.subr.mxu0 0.0
  %2313 = vmatpush1.xpose.msra.mxu0 0.0
  %2314 = vmatprep.subr.mxu0 0.0
  %2315 = vmatpush1.xpose.msra.mxu0 0.0
  %2316 = vmatprep.subr.mxu0 0.0
  %2317 = vmatpush1.xpose.msra.mxu0 0.0
  %2318 = vmatprep.subr.mxu0 0.0
  %2319 = vmatpush1.xpose.msra.mxu0 0.0
  %2320 = vmatprep.subr.mxu0 0.0
  %2321 = vmatpush1.xpose.msra.mxu0 0.0
  %2322 = vmatprep.subr.mxu0 0.0
  %2323 = vmatpush1.xpose.msra.mxu0 0.0
  %2324 = vmatprep.mubr.f32.mxu0 0.0
  %2325 = vmatmul.mubr.f32.gmra.mrb[0].mxu0 %v2256
  %v2326 = vpop.f32.mrb[0].mxu0
  %v2327 = vadd.f32 0.0, %v2326
  %v2328 = vpop.f32.mrb[0].mxu0
  %2329 = vdwg.mxu0
  %2330 = vrot.lane.b32.xlu0 %v2101, 96
  %v2331 = vpop.permute.xlu0 %2330
  %v2332 = vsel %vm187, %v2101, 0
  %v2334 = vsel %vm187, %v2331, 0
  %2336 = vmatprep.subr.mxu0 0.0
  %2337 = vmatpush1.xpose.msra.mxu0 %v2334
  %2338 = vmatprep.subr.mxu0 0.0
  %2339 = vmatpush1.xpose.msra.mxu0 0.0
  %2340 = vmatprep.subr.mxu0 0.0
  %2341 = vmatpush1.xpose.msra.mxu0 0.0
  %2342 = vmatprep.subr.mxu0 0.0
  %2343 = vmatpush1.xpose.msra.mxu0 0.0
  %2344 = vmatprep.subr.mxu0 0.0
  %2345 = vmatpush1.xpose.msra.mxu0 0.0
  %2346 = vmatprep.subr.mxu0 0.0
  %2347 = vmatpush1.xpose.msra.mxu0 0.0
  %2348 = vmatprep.subr.mxu0 0.0
  %2349 = vmatpush1.xpose.msra.mxu0 0.0
  %2350 = vmatprep.subr.mxu0 0.0
  %2351 = vmatpush1.xpose.msra.mxu0 0.0
  %2352 = vmatprep.subr.mxu0 0.0
  %2353 = vmatpush1.xpose.msra.mxu0 0.0
  %2354 = vmatprep.subr.mxu0 0.0
  %2355 = vmatpush1.xpose.msra.mxu0 0.0
  %2356 = vmatprep.subr.mxu0 0.0
  %2357 = vmatpush1.xpose.msra.mxu0 0.0
  %2358 = vmatprep.subr.mxu0 0.0
  %2359 = vmatpush1.xpose.msra.mxu0 0.0
  %2360 = vmatprep.subr.mxu0 0.0
  %2361 = vmatpush1.xpose.msra.mxu0 0.0
  %2362 = vmatprep.subr.mxu0 0.0
  %2363 = vmatpush1.xpose.msra.mxu0 0.0
  %2364 = vmatprep.subr.mxu0 0.0
  %2365 = vmatpush1.xpose.msra.mxu0 0.0
  %2366 = vmatprep.subr.mxu0 0.0
  %2367 = vmatpush1.xpose.msra.mxu0 0.0
  %2368 = vmatprep.subr.mxu0 0.0
  %2369 = vmatpush1.xpose.msra.mxu0 0.0
  %2370 = vmatprep.subr.mxu0 0.0
  %2371 = vmatpush1.xpose.msra.mxu0 0.0
  %2372 = vmatprep.subr.mxu0 0.0
  %2373 = vmatpush1.xpose.msra.mxu0 0.0
  %2374 = vmatprep.subr.mxu0 0.0
  %2375 = vmatpush1.xpose.msra.mxu0 0.0
  %2376 = vmatprep.subr.mxu0 0.0
  %2377 = vmatpush1.xpose.msra.mxu0 0.0
  %2378 = vmatprep.subr.mxu0 0.0
  %2379 = vmatpush1.xpose.msra.mxu0 0.0
  %2380 = vmatprep.subr.mxu0 0.0
  %2381 = vmatpush1.xpose.msra.mxu0 0.0
  %2382 = vmatprep.subr.mxu0 0.0
  %2383 = vmatpush1.xpose.msra.mxu0 0.0
  %2384 = vmatprep.subr.mxu0 0.0
  %2385 = vmatpush1.xpose.msra.mxu0 0.0
  %2386 = vmatprep.subr.mxu0 0.0
  %2387 = vmatpush1.xpose.msra.mxu0 0.0
  %2388 = vmatprep.subr.mxu0 0.0
  %2389 = vmatpush1.xpose.msra.mxu0 0.0
  %2390 = vmatprep.subr.mxu0 0.0
  %2391 = vmatpush1.xpose.msra.mxu0 0.0
  %2392 = vmatprep.subr.mxu0 0.0
  %2393 = vmatpush1.xpose.msra.mxu0 0.0
  %2394 = vmatprep.subr.mxu0 0.0
  %2395 = vmatpush1.xpose.msra.mxu0 0.0
  %2396 = vmatprep.subr.mxu0 0.0
  %2397 = vmatpush1.xpose.msra.mxu0 0.0
  %2398 = vmatprep.subr.mxu0 0.0
  %2399 = vmatpush1.xpose.msra.mxu0 0.0
  %2400 = vmatprep.mubr.f32.mxu0 0.0
  %2401 = vmatmul.mubr.f32.gmra.mrb[0].mxu0 %v2332
  %v2402 = vpop.f32.mrb[0].mxu0
  %v2403 = vadd.f32 0.0, %v2402
  %v2404 = vpop.f32.mrb[0].mxu0
  %2405 = vdwg.mxu0
  %v2406 = vmul.f32 %v2175, 0.35355338
  %v2407 = vmul.f32 %v2251, 0.35355338
  %v2408 = vmul.f32 %v2327, 0.35355338
  %v2409 = vmul.f32 %v2403, 0.35355338
  %v2410 = vadd.f32 %v2406, %v75
  %v2411 = vadd.f32 %v2407, %v75
  %v2412 = vadd.f32 %v2408, %v75
  %v2413 = vadd.f32 %v2409, %v75
  %v2414 = vsel %vm187, %v2410, -inf
  %2415 = vmax.xlane.f32.xlu0 %v2414
  %v2416 = vpop.xlane.xlu0 %2415
  %v2417 = vsel %vm187, %v2411, -inf
  %2418 = vmax.xlane.f32.xlu0 %v2417
  %v2419 = vpop.xlane.xlu0 %2418
  %v2420 = vsel %vm187, %v2412, -inf
  %2421 = vmax.xlane.f32.xlu0 %v2420
  %v2422 = vpop.xlane.xlu0 %2421
  %v2423 = vsel %vm187, %v2413, -inf
  %2424 = vmax.xlane.f32.xlu0 %v2423
  %v2425 = vpop.xlane.xlu0 %2424
  %v2426 = vsub.f32 %v2410, %v2416
  %v2427 = vsub.f32 %v2411, %v2419
  %v2428 = vsub.f32 %v2412, %v2422
  %v2429 = vsub.f32 %v2413, %v2425
  %v2430 = vmul.f32 %v2426, 1.442695
  %v2431 = vpow.pop %v2430
  %v2432 = vmul.f32 %v2427, 1.442695
  %v2433 = vpow.pop %v2432
  %v2434 = vmul.f32 %v2428, 1.442695
  %v2435 = vpow.pop %v2434
  %v2436 = vmul.f32 %v2429, 1.442695
  %v2437 = vpow.pop %v2436
  %v2438 = vsel %vm187, %v2431, 0.0
  %2439 = vadd.xlane.f32.xlu0 %v2438
  %v2440 = vpop.xlane.xlu0 %2439
  %v2441 = vsel %vm187, %v2433, 0.0
  %2442 = vadd.xlane.f32.xlu0 %v2441
  %v2443 = vpop.xlane.xlu0 %2442
  %v2444 = vsel %vm187, %v2435, 0.0
  %2445 = vadd.xlane.f32.xlu0 %v2444
  %v2446 = vpop.xlane.xlu0 %2445
  %v2447 = vsel %vm187, %v2437, 0.0
  %2448 = vadd.xlane.f32.xlu0 %v2447
  %v2449 = vpop.xlane.xlu0 %2448
  %v2450 = vrcp.pop %v2440
  %v2451 = vmul.f32 %v2431, %v2450
  %v2452 = vrcp.pop %v2443
  %v2453 = vmul.f32 %v2433, %v2452
  %v2454 = vrcp.pop %v2446
  %v2455 = vmul.f32 %v2435, %v2454
  %v2456 = vrcp.pop %v2449
  %v2457 = vmul.f32 %v2437, %v2456
  %2458 = vrot.lane.b32.xlu0 %v2087, 64
  %v2459 = vpop.permute.xlu0 %2458
  %v2462 = vsel %vm187, %v2451, 0
  %2464 = vmatprep.subr.mxu0 0.0
  %2465 = vmatpush1.msra.mxu0 %v2459
  %2466 = vmatprep.subr.mxu0 0.0
  %2467 = vmatpush1.msra.mxu0 0.0
  %2468 = vmatprep.subr.mxu0 0.0
  %2469 = vmatpush1.msra.mxu0 0.0
  %2470 = vmatprep.subr.mxu0 0.0
  %2471 = vmatpush1.msra.mxu0 0.0
  %2472 = vmatprep.subr.mxu0 0.0
  %2473 = vmatpush1.msra.mxu0 0.0
  %2474 = vmatprep.subr.mxu0 0.0
  %2475 = vmatpush1.msra.mxu0 0.0
  %2476 = vmatprep.subr.mxu0 0.0
  %2477 = vmatpush1.msra.mxu0 0.0
  %2478 = vmatprep.subr.mxu0 0.0
  %2479 = vmatpush1.msra.mxu0 0.0
  %2480 = vmatprep.subr.mxu0 0.0
  %2481 = vmatpush1.msra.mxu0 0.0
  %2482 = vmatprep.subr.mxu0 0.0
  %2483 = vmatpush1.msra.mxu0 0.0
  %2484 = vmatprep.subr.mxu0 0.0
  %2485 = vmatpush1.msra.mxu0 0.0
  %2486 = vmatprep.subr.mxu0 0.0
  %2487 = vmatpush1.msra.mxu0 0.0
  %2488 = vmatprep.subr.mxu0 0.0
  %2489 = vmatpush1.msra.mxu0 0.0
  %2490 = vmatprep.subr.mxu0 0.0
  %2491 = vmatpush1.msra.mxu0 0.0
  %2492 = vmatprep.subr.mxu0 0.0
  %2493 = vmatpush1.msra.mxu0 0.0
  %2494 = vmatprep.subr.mxu0 0.0
  %2495 = vmatpush1.msra.mxu0 0.0
  %2496 = vmatprep.subr.mxu0 0.0
  %2497 = vmatpush1.msra.mxu0 0.0
  %2498 = vmatprep.subr.mxu0 0.0
  %2499 = vmatpush1.msra.mxu0 0.0
  %2500 = vmatprep.subr.mxu0 0.0
  %2501 = vmatpush1.msra.mxu0 0.0
  %2502 = vmatprep.subr.mxu0 0.0
  %2503 = vmatpush1.msra.mxu0 0.0
  %2504 = vmatprep.subr.mxu0 0.0
  %2505 = vmatpush1.msra.mxu0 0.0
  %2506 = vmatprep.subr.mxu0 0.0
  %2507 = vmatpush1.msra.mxu0 0.0
  %2508 = vmatprep.subr.mxu0 0.0
  %2509 = vmatpush1.msra.mxu0 0.0
  %2510 = vmatprep.subr.mxu0 0.0
  %2511 = vmatpush1.msra.mxu0 0.0
  %2512 = vmatprep.subr.mxu0 0.0
  %2513 = vmatpush1.msra.mxu0 0.0
  %2514 = vmatprep.subr.mxu0 0.0
  %2515 = vmatpush1.msra.mxu0 0.0
  %2516 = vmatprep.subr.mxu0 0.0
  %2517 = vmatpush1.msra.mxu0 0.0
  %2518 = vmatprep.subr.mxu0 0.0
  %2519 = vmatpush1.msra.mxu0 0.0
  %2520 = vmatprep.subr.mxu0 0.0
  %2521 = vmatpush1.msra.mxu0 0.0
  %2522 = vmatprep.subr.mxu0 0.0
  %2523 = vmatpush1.msra.mxu0 0.0
  %2524 = vmatprep.subr.mxu0 0.0
  %2525 = vmatpush1.msra.mxu0 0.0
  %2526 = vmatprep.subr.mxu0 0.0
  %2527 = vmatpush1.msra.mxu0 0.0
  %2528 = vmatprep.mubr.f32.mxu0 0.0
  %2529 = vmatmul.mubr.f32.gmra.mrb[0].mxu0 %v2462
  %v2530 = vpop.f32.mrb[0].mxu0
  %v2531 = vadd.f32 0.0, %v2530
  %v2532 = vpop.f32.mrb[0].mxu0
  %2533 = vdwg.mxu0
  %2534 = vrot.lane.b32.xlu0 %v2097, 64
  %v2535 = vpop.permute.xlu0 %2534
  %v2538 = vsel %vm187, %v2453, 0
  %2540 = vmatprep.subr.mxu0 0.0
  %2541 = vmatpush1.msra.mxu0 %v2535
  %2542 = vmatprep.subr.mxu0 0.0
  %2543 = vmatpush1.msra.mxu0 0.0
  %2544 = vmatprep.subr.mxu0 0.0
  %2545 = vmatpush1.msra.mxu0 0.0
  %2546 = vmatprep.subr.mxu0 0.0
  %2547 = vmatpush1.msra.mxu0 0.0
  %2548 = vmatprep.subr.mxu0 0.0
  %2549 = vmatpush1.msra.mxu0 0.0
  %2550 = vmatprep.subr.mxu0 0.0
  %2551 = vmatpush1.msra.mxu0 0.0
  %2552 = vmatprep.subr.mxu0 0.0
  %2553 = vmatpush1.msra.mxu0 0.0
  %2554 = vmatprep.subr.mxu0 0.0
  %2555 = vmatpush1.msra.mxu0 0.0
  %2556 = vmatprep.subr.mxu0 0.0
  %2557 = vmatpush1.msra.mxu0 0.0
  %2558 = vmatprep.subr.mxu0 0.0
  %2559 = vmatpush1.msra.mxu0 0.0
  %2560 = vmatprep.subr.mxu0 0.0
  %2561 = vmatpush1.msra.mxu0 0.0
  %2562 = vmatprep.subr.mxu0 0.0
  %2563 = vmatpush1.msra.mxu0 0.0
  %2564 = vmatprep.subr.mxu0 0.0
  %2565 = vmatpush1.msra.mxu0 0.0
  %2566 = vmatprep.subr.mxu0 0.0
  %2567 = vmatpush1.msra.mxu0 0.0
  %2568 = vmatprep.subr.mxu0 0.0
  %2569 = vmatpush1.msra.mxu0 0.0
  %2570 = vmatprep.subr.mxu0 0.0
  %2571 = vmatpush1.msra.mxu0 0.0
  %2572 = vmatprep.subr.mxu0 0.0
  %2573 = vmatpush1.msra.mxu0 0.0
  %2574 = vmatprep.subr.mxu0 0.0
  %2575 = vmatpush1.msra.mxu0 0.0
  %2576 = vmatprep.subr.mxu0 0.0
  %2577 = vmatpush1.msra.mxu0 0.0
  %2578 = vmatprep.subr.mxu0 0.0
  %2579 = vmatpush1.msra.mxu0 0.0
  %2580 = vmatprep.subr.mxu0 0.0
  %2581 = vmatpush1.msra.mxu0 0.0
  %2582 = vmatprep.subr.mxu0 0.0
  %2583 = vmatpush1.msra.mxu0 0.0
  %2584 = vmatprep.subr.mxu0 0.0
  %2585 = vmatpush1.msra.mxu0 0.0
  %2586 = vmatprep.subr.mxu0 0.0
  %2587 = vmatpush1.msra.mxu0 0.0
  %2588 = vmatprep.subr.mxu0 0.0
  %2589 = vmatpush1.msra.mxu0 0.0
  %2590 = vmatprep.subr.mxu0 0.0
  %2591 = vmatpush1.msra.mxu0 0.0
  %2592 = vmatprep.subr.mxu0 0.0
  %2593 = vmatpush1.msra.mxu0 0.0
  %2594 = vmatprep.subr.mxu0 0.0
  %2595 = vmatpush1.msra.mxu0 0.0
  %2596 = vmatprep.subr.mxu0 0.0
  %2597 = vmatpush1.msra.mxu0 0.0
  %2598 = vmatprep.subr.mxu0 0.0
  %2599 = vmatpush1.msra.mxu0 0.0
  %2600 = vmatprep.subr.mxu0 0.0
  %2601 = vmatpush1.msra.mxu0 0.0
  %2602 = vmatprep.subr.mxu0 0.0
  %2603 = vmatpush1.msra.mxu0 0.0
  %2604 = vmatprep.mubr.f32.mxu0 0.0
  %2605 = vmatmul.mubr.f32.gmra.mrb[0].mxu0 %v2538
  %v2606 = vpop.f32.mrb[0].mxu0
  %v2607 = vadd.f32 0.0, %v2606
  %v2608 = vpop.f32.mrb[0].mxu0
  %2609 = vdwg.mxu0
  %2610 = vrot.lane.b32.xlu0 %v2099, 64
  %v2611 = vpop.permute.xlu0 %2610
  %v2614 = vsel %vm187, %v2455, 0
  %2616 = vmatprep.subr.mxu0 0.0
  %2617 = vmatpush1.msra.mxu0 %v2611
  %2618 = vmatprep.subr.mxu0 0.0
  %2619 = vmatpush1.msra.mxu0 0.0
  %2620 = vmatprep.subr.mxu0 0.0
  %2621 = vmatpush1.msra.mxu0 0.0
  %2622 = vmatprep.subr.mxu0 0.0
  %2623 = vmatpush1.msra.mxu0 0.0
  %2624 = vmatprep.subr.mxu0 0.0
  %2625 = vmatpush1.msra.mxu0 0.0
  %2626 = vmatprep.subr.mxu0 0.0
  %2627 = vmatpush1.msra.mxu0 0.0
  %2628 = vmatprep.subr.mxu0 0.0
  %2629 = vmatpush1.msra.mxu0 0.0
  %2630 = vmatprep.subr.mxu0 0.0
  %2631 = vmatpush1.msra.mxu0 0.0
  %2632 = vmatprep.subr.mxu0 0.0
  %2633 = vmatpush1.msra.mxu0 0.0
  %2634 = vmatprep.subr.mxu0 0.0
  %2635 = vmatpush1.msra.mxu0 0.0
  %2636 = vmatprep.subr.mxu0 0.0
  %2637 = vmatpush1.msra.mxu0 0.0
  %2638 = vmatprep.subr.mxu0 0.0
  %2639 = vmatpush1.msra.mxu0 0.0
  %2640 = vmatprep.subr.mxu0 0.0
  %2641 = vmatpush1.msra.mxu0 0.0
  %2642 = vmatprep.subr.mxu0 0.0
  %2643 = vmatpush1.msra.mxu0 0.0
  %2644 = vmatprep.subr.mxu0 0.0
  %2645 = vmatpush1.msra.mxu0 0.0
  %2646 = vmatprep.subr.mxu0 0.0
  %2647 = vmatpush1.msra.mxu0 0.0
  %2648 = vmatprep.subr.mxu0 0.0
  %2649 = vmatpush1.msra.mxu0 0.0
  %2650 = vmatprep.subr.mxu0 0.0
  %2651 = vmatpush1.msra.mxu0 0.0
  %2652 = vmatprep.subr.mxu0 0.0
  %2653 = vmatpush1.msra.mxu0 0.0
  %2654 = vmatprep.subr.mxu0 0.0
  %2655 = vmatpush1.msra.mxu0 0.0
  %2656 = vmatprep.subr.mxu0 0.0
  %2657 = vmatpush1.msra.mxu0 0.0
  %2658 = vmatprep.subr.mxu0 0.0
  %2659 = vmatpush1.msra.mxu0 0.0
  %2660 = vmatprep.subr.mxu0 0.0
  %2661 = vmatpush1.msra.mxu0 0.0
  %2662 = vmatprep.subr.mxu0 0.0
  %2663 = vmatpush1.msra.mxu0 0.0
  %2664 = vmatprep.subr.mxu0 0.0
  %2665 = vmatpush1.msra.mxu0 0.0
  %2666 = vmatprep.subr.mxu0 0.0
  %2667 = vmatpush1.msra.mxu0 0.0
  %2668 = vmatprep.subr.mxu0 0.0
  %2669 = vmatpush1.msra.mxu0 0.0
  %2670 = vmatprep.subr.mxu0 0.0
  %2671 = vmatpush1.msra.mxu0 0.0
  %2672 = vmatprep.subr.mxu0 0.0
  %2673 = vmatpush1.msra.mxu0 0.0
  %2674 = vmatprep.subr.mxu0 0.0
  %2675 = vmatpush1.msra.mxu0 0.0
  %2676 = vmatprep.subr.mxu0 0.0
  %2677 = vmatpush1.msra.mxu0 0.0
  %2678 = vmatprep.subr.mxu0 0.0
  %2679 = vmatpush1.msra.mxu0 0.0
  %2680 = vmatprep.mubr.f32.mxu0 0.0
  %2681 = vmatmul.mubr.f32.gmra.mrb[0].mxu0 %v2614
  %v2682 = vpop.f32.mrb[0].mxu0
  %v2683 = vadd.f32 0.0, %v2682
  %v2684 = vpop.f32.mrb[0].mxu0
  %2685 = vdwg.mxu0
  %2686 = vrot.lane.b32.xlu0 %v2101, 64
  %v2687 = vpop.permute.xlu0 %2686
  %v2690 = vsel %vm187, %v2457, 0
  %2692 = vmatprep.subr.mxu0 0.0
  %2693 = vmatpush1.msra.mxu0 %v2687
  %2694 = vmatprep.subr.mxu0 0.0
  %2695 = vmatpush1.msra.mxu0 0.0
  %2696 = vmatprep.subr.mxu0 0.0
  %2697 = vmatpush1.msra.mxu0 0.0
  %2698 = vmatprep.subr.mxu0 0.0
  %2699 = vmatpush1.msra.mxu0 0.0
  %2700 = vmatprep.subr.mxu0 0.0
  %2701 = vmatpush1.msra.mxu0 0.0
  %2702 = vmatprep.subr.mxu0 0.0
  %2703 = vmatpush1.msra.mxu0 0.0
  %2704 = vmatprep.subr.mxu0 0.0
  %2705 = vmatpush1.msra.mxu0 0.0
  %2706 = vmatprep.subr.mxu0 0.0
  %2707 = vmatpush1.msra.mxu0 0.0
  %2708 = vmatprep.subr.mxu0 0.0
  %2709 = vmatpush1.msra.mxu0 0.0
  %2710 = vmatprep.subr.mxu0 0.0
  %2711 = vmatpush1.msra.mxu0 0.0
  %2712 = vmatprep.subr.mxu0 0.0
  %2713 = vmatpush1.msra.mxu0 0.0
  %2714 = vmatprep.subr.mxu0 0.0
  %2715 = vmatpush1.msra.mxu0 0.0
  %2716 = vmatprep.subr.mxu0 0.0
  %2717 = vmatpush1.msra.mxu0 0.0
  %2718 = vmatprep.subr.mxu0 0.0
  %2719 = vmatpush1.msra.mxu0 0.0
  %2720 = vmatprep.subr.mxu0 0.0
  %2721 = vmatpush1.msra.mxu0 0.0
  %2722 = vmatprep.subr.mxu0 0.0
  %2723 = vmatpush1.msra.mxu0 0.0
  %2724 = vmatprep.subr.mxu0 0.0
  %2725 = vmatpush1.msra.mxu0 0.0
  %2726 = vmatprep.subr.mxu0 0.0
  %2727 = vmatpush1.msra.mxu0 0.0
  %2728 = vmatprep.subr.mxu0 0.0
  %2729 = vmatpush1.msra.mxu0 0.0
  %2730 = vmatprep.subr.mxu0 0.0
  %2731 = vmatpush1.msra.mxu0 0.0
  %2732 = vmatprep.subr.mxu0 0.0
  %2733 = vmatpush1.msra.mxu0 0.0
  %2734 = vmatprep.subr.mxu0 0.0
  %2735 = vmatpush1.msra.mxu0 0.0
  %2736 = vmatprep.subr.mxu0 0.0
  %2737 = vmatpush1.msra.mxu0 0.0
  %2738 = vmatprep.subr.mxu0 0.0
  %2739 = vmatpush1.msra.mxu0 0.0
  %2740 = vmatprep.subr.mxu0 0.0
  %2741 = vmatpush1.msra.mxu0 0.0
  %2742 = vmatprep.subr.mxu0 0.0
  %2743 = vmatpush1.msra.mxu0 0.0
  %2744 = vmatprep.subr.mxu0 0.0
  %2745 = vmatpush1.msra.mxu0 0.0
  %2746 = vmatprep.subr.mxu0 0.0
  %2747 = vmatpush1.msra.mxu0 0.0
  %2748 = vmatprep.subr.mxu0 0.0
  %2749 = vmatpush1.msra.mxu0 0.0
  %2750 = vmatprep.subr.mxu0 0.0
  %2751 = vmatpush1.msra.mxu0 0.0
  %2752 = vmatprep.subr.mxu0 0.0
  %2753 = vmatpush1.msra.mxu0 0.0
  %2754 = vmatprep.subr.mxu0 0.0
  %2755 = vmatpush1.msra.mxu0 0.0
  %2756 = vmatprep.mubr.f32.mxu0 0.0
  %2757 = vmatmul.mubr.f32.gmra.mrb[0].mxu0 %v2690
  %v2758 = vpop.f32.mrb[0].mxu0
  %v2759 = vadd.f32 0.0, %v2758
  %v2760 = vpop.f32.mrb[0].mxu0
  %2761 = vdwg.mxu0
  %2763 = vrot.lane.b32.xlu0 %v2607, 8
  %v2764 = vpop.permute.xlu0 %2763
  %2767 = vrot.lane.b32.xlu0 %v2683, 16
  %v2768 = vpop.permute.xlu0 %2767
  %2771 = vrot.lane.b32.xlu0 %v2759, 24
  %v2772 = vpop.permute.xlu0 %2771
  %v2774 = vsel %vm187, %v2531, %v2764
  %v2775 = vsel %vm859, %v2774, %v2768
  %v2776 = vsel %vm861, %v2775, %v2772
  %s2777 = scalar_lea.vmem %s5, 32
  %v2778 = vld [vmem:[%s2777] sm:$0xff]
  %v2779 = vld [vmem:[%s2777 + $0x8] sm:$0xff]
  %v2780 = vld [vmem:[%s2777 + $0x10] sm:$0xff]
  %v2781 = vld [vmem:[%s2777 + $0x18] sm:$0xff]
  %v2783 = vsel %vm96, %v2776, 0
  %2785 = vmatprep.subr.mxu0 0.0
  %2786 = vmatpush1.msra.mxu0 %v2778
  %2787 = vmatprep.subr.mxu0 0.0
  %2788 = vmatpush1.msra.mxu0 %v2779
  %2789 = vmatprep.subr.mxu0 0.0
  %2790 = vmatpush1.msra.mxu0 %v2780
  %2791 = vmatprep.subr.mxu0 0.0
  %2792 = vmatpush1.msra.mxu0 %v2781
  %2793 = vmatprep.subr.mxu0 0.0
  %2794 = vmatpush1.msra.mxu0 0.0
  %2795 = vmatprep.subr.mxu0 0.0
  %2796 = vmatpush1.msra.mxu0 0.0
  %2797 = vmatprep.subr.mxu0 0.0
  %2798 = vmatpush1.msra.mxu0 0.0
  %2799 = vmatprep.subr.mxu0 0.0
  %2800 = vmatpush1.msra.mxu0 0.0
  %2801 = vmatprep.subr.mxu0 0.0
  %2802 = vmatpush1.msra.mxu0 0.0
  %2803 = vmatprep.subr.mxu0 0.0
  %2804 = vmatpush1.msra.mxu0 0.0
  %2805 = vmatprep.subr.mxu0 0.0
  %2806 = vmatpush1.msra.mxu0 0.0
  %2807 = vmatprep.subr.mxu0 0.0
  %2808 = vmatpush1.msra.mxu0 0.0
  %2809 = vmatprep.subr.mxu0 0.0
  %2810 = vmatpush1.msra.mxu0 0.0
  %2811 = vmatprep.subr.mxu0 0.0
  %2812 = vmatpush1.msra.mxu0 0.0
  %2813 = vmatprep.subr.mxu0 0.0
  %2814 = vmatpush1.msra.mxu0 0.0
  %2815 = vmatprep.subr.mxu0 0.0
  %2816 = vmatpush1.msra.mxu0 0.0
  %2817 = vmatprep.subr.mxu0 0.0
  %2818 = vmatpush1.msra.mxu0 0.0
  %2819 = vmatprep.subr.mxu0 0.0
  %2820 = vmatpush1.msra.mxu0 0.0
  %2821 = vmatprep.subr.mxu0 0.0
  %2822 = vmatpush1.msra.mxu0 0.0
  %2823 = vmatprep.subr.mxu0 0.0
  %2824 = vmatpush1.msra.mxu0 0.0
  %2825 = vmatprep.subr.mxu0 0.0
  %2826 = vmatpush1.msra.mxu0 0.0
  %2827 = vmatprep.subr.mxu0 0.0
  %2828 = vmatpush1.msra.mxu0 0.0
  %2829 = vmatprep.subr.mxu0 0.0
  %2830 = vmatpush1.msra.mxu0 0.0
  %2831 = vmatprep.subr.mxu0 0.0
  %2832 = vmatpush1.msra.mxu0 0.0
  %2833 = vmatprep.subr.mxu0 0.0
  %2834 = vmatpush1.msra.mxu0 0.0
  %2835 = vmatprep.subr.mxu0 0.0
  %2836 = vmatpush1.msra.mxu0 0.0
  %2837 = vmatprep.subr.mxu0 0.0
  %2838 = vmatpush1.msra.mxu0 0.0
  %2839 = vmatprep.subr.mxu0 0.0
  %2840 = vmatpush1.msra.mxu0 0.0
  %2841 = vmatprep.subr.mxu0 0.0
  %2842 = vmatpush1.msra.mxu0 0.0
  %2843 = vmatprep.subr.mxu0 0.0
  %2844 = vmatpush1.msra.mxu0 0.0
  %2845 = vmatprep.subr.mxu0 0.0
  %2846 = vmatpush1.msra.mxu0 0.0
  %2847 = vmatprep.subr.mxu0 0.0
  %2848 = vmatpush1.msra.mxu0 0.0
  %2849 = vmatprep.mubr.f32.mxu0 0.0
  %2850 = vmatmul.mubr.f32.gmra.mrb[0].mxu0 %v2783
  %v2851 = vpop.f32.mrb[0].mxu0
  %v2852 = vadd.f32 0.0, %v2851
  %v2853 = vpop.f32.mrb[0].mxu0
  %2854 = vdwg.mxu0
  %2856 = vrot.lane.b32.xlu0 %v2092, 120
  %v2857 = vpop.permute.xlu0 %2856
  %2858 = vrot.lane.b32.xlu0 %v2092, 112
  %v2859 = vpop.permute.xlu0 %2858
  %2860 = vrot.lane.b32.xlu0 %v2092, 104
  %v2861 = vpop.permute.xlu0 %2860
  %2862 = vrot.lane.b32.xlu0 %v2092, 96
  %v2863 = vpop.permute.xlu0 %2862
  %v2864 = vsel %vm187, %v2092, 0
  %v2866 = vsel %vm187, %v2863, 0
  %2868 = vmatprep.subr.mxu0 0.0
  %2869 = vmatpush1.xpose.msra.mxu0 %v2866
  %2870 = vmatprep.subr.mxu0 0.0
  %2871 = vmatpush1.xpose.msra.mxu0 0.0
  %2872 = vmatprep.subr.mxu0 0.0
  %2873 = vmatpush1.xpose.msra.mxu0 0.0
  %2874 = vmatprep.subr.mxu0 0.0
  %2875 = vmatpush1.xpose.msra.mxu0 0.0
  %2876 = vmatprep.subr.mxu0 0.0
  %2877 = vmatpush1.xpose.msra.mxu0 0.0
  %2878 = vmatprep.subr.mxu0 0.0
  %2879 = vmatpush1.xpose.msra.mxu0 0.0
  %2880 = vmatprep.subr.mxu0 0.0
  %2881 = vmatpush1.xpose.msra.mxu0 0.0
  %2882 = vmatprep.subr.mxu0 0.0
  %2883 = vmatpush1.xpose.msra.mxu0 0.0
  %2884 = vmatprep.subr.mxu0 0.0
  %2885 = vmatpush1.xpose.msra.mxu0 0.0
  %2886 = vmatprep.subr.mxu0 0.0
  %2887 = vmatpush1.xpose.msra.mxu0 0.0
  %2888 = vmatprep.subr.mxu0 0.0
  %2889 = vmatpush1.xpose.msra.mxu0 0.0
  %2890 = vmatprep.subr.mxu0 0.0
  %2891 = vmatpush1.xpose.msra.mxu0 0.0
  %2892 = vmatprep.subr.mxu0 0.0
  %2893 = vmatpush1.xpose.msra.mxu0 0.0
  %2894 = vmatprep.subr.mxu0 0.0
  %2895 = vmatpush1.xpose.msra.mxu0 0.0
  %2896 = vmatprep.subr.mxu0 0.0
  %2897 = vmatpush1.xpose.msra.mxu0 0.0
  %2898 = vmatprep.subr.mxu0 0.0
  %2899 = vmatpush1.xpose.msra.mxu0 0.0
  %2900 = vmatprep.subr.mxu0 0.0
  %2901 = vmatpush1.xpose.msra.mxu0 0.0
  %2902 = vmatprep.subr.mxu0 0.0
  %2903 = vmatpush1.xpose.msra.mxu0 0.0
  %2904 = vmatprep.subr.mxu0 0.0
  %2905 = vmatpush1.xpose.msra.mxu0 0.0
  %2906 = vmatprep.subr.mxu0 0.0
  %2907 = vmatpush1.xpose.msra.mxu0 0.0
  %2908 = vmatprep.subr.mxu0 0.0
  %2909 = vmatpush1.xpose.msra.mxu0 0.0
  %2910 = vmatprep.subr.mxu0 0.0
  %2911 = vmatpush1.xpose.msra.mxu0 0.0
  %2912 = vmatprep.subr.mxu0 0.0
  %2913 = vmatpush1.xpose.msra.mxu0 0.0
  %2914 = vmatprep.subr.mxu0 0.0
  %2915 = vmatpush1.xpose.msra.mxu0 0.0
  %2916 = vmatprep.subr.mxu0 0.0
  %2917 = vmatpush1.xpose.msra.mxu0 0.0
  %2918 = vmatprep.subr.mxu0 0.0
  %2919 = vmatpush1.xpose.msra.mxu0 0.0
  %2920 = vmatprep.subr.mxu0 0.0
  %2921 = vmatpush1.xpose.msra.mxu0 0.0
  %2922 = vmatprep.subr.mxu0 0.0
  %2923 = vmatpush1.xpose.msra.mxu0 0.0
  %2924 = vmatprep.subr.mxu0 0.0
  %2925 = vmatpush1.xpose.msra.mxu0 0.0
  %2926 = vmatprep.subr.mxu0 0.0
  %2927 = vmatpush1.xpose.msra.mxu0 0.0
  %2928 = vmatprep.subr.mxu0 0.0
  %2929 = vmatpush1.xpose.msra.mxu0 0.0
  %2930 = vmatprep.subr.mxu0 0.0
  %2931 = vmatpush1.xpose.msra.mxu0 0.0
  %2932 = vmatprep.mubr.f32.mxu0 0.0
  %2933 = vmatmul.mubr.f32.gmra.mrb[0].mxu0 %v2864
  %v2934 = vpop.f32.mrb[0].mxu0
  %v2935 = vadd.f32 0.0, %v2934
  %v2936 = vpop.f32.mrb[0].mxu0
  %2937 = vdwg.mxu0
  %2938 = vrot.lane.b32.xlu0 %v2857, 96
  %v2939 = vpop.permute.xlu0 %2938
  %v2940 = vsel %vm187, %v2857, 0
  %v2942 = vsel %vm187, %v2939, 0
  %2944 = vmatprep.subr.mxu0 0.0
  %2945 = vmatpush1.xpose.msra.mxu0 %v2942
  %2946 = vmatprep.subr.mxu0 0.0
  %2947 = vmatpush1.xpose.msra.mxu0 0.0
  %2948 = vmatprep.subr.mxu0 0.0
  %2949 = vmatpush1.xpose.msra.mxu0 0.0
  %2950 = vmatprep.subr.mxu0 0.0
  %2951 = vmatpush1.xpose.msra.mxu0 0.0
  %2952 = vmatprep.subr.mxu0 0.0
  %2953 = vmatpush1.xpose.msra.mxu0 0.0
  %2954 = vmatprep.subr.mxu0 0.0
  %2955 = vmatpush1.xpose.msra.mxu0 0.0
  %2956 = vmatprep.subr.mxu0 0.0
  %2957 = vmatpush1.xpose.msra.mxu0 0.0
  %2958 = vmatprep.subr.mxu0 0.0
  %2959 = vmatpush1.xpose.msra.mxu0 0.0
  %2960 = vmatprep.subr.mxu0 0.0
  %2961 = vmatpush1.xpose.msra.mxu0 0.0
  %2962 = vmatprep.subr.mxu0 0.0
  %2963 = vmatpush1.xpose.msra.mxu0 0.0
  %2964 = vmatprep.subr.mxu0 0.0
  %2965 = vmatpush1.xpose.msra.mxu0 0.0
  %2966 = vmatprep.subr.mxu0 0.0
  %2967 = vmatpush1.xpose.msra.mxu0 0.0
  %2968 = vmatprep.subr.mxu0 0.0
  %2969 = vmatpush1.xpose.msra.mxu0 0.0
  %2970 = vmatprep.subr.mxu0 0.0
  %2971 = vmatpush1.xpose.msra.mxu0 0.0
  %2972 = vmatprep.subr.mxu0 0.0
  %2973 = vmatpush1.xpose.msra.mxu0 0.0
  %2974 = vmatprep.subr.mxu0 0.0
  %2975 = vmatpush1.xpose.msra.mxu0 0.0
  %2976 = vmatprep.subr.mxu0 0.0
  %2977 = vmatpush1.xpose.msra.mxu0 0.0
  %2978 = vmatprep.subr.mxu0 0.0
  %2979 = vmatpush1.xpose.msra.mxu0 0.0
  %2980 = vmatprep.subr.mxu0 0.0
  %2981 = vmatpush1.xpose.msra.mxu0 0.0
  %2982 = vmatprep.subr.mxu0 0.0
  %2983 = vmatpush1.xpose.msra.mxu0 0.0
  %2984 = vmatprep.subr.mxu0 0.0
  %2985 = vmatpush1.xpose.msra.mxu0 0.0
  %2986 = vmatprep.subr.mxu0 0.0
  %2987 = vmatpush1.xpose.msra.mxu0 0.0
  %2988 = vmatprep.subr.mxu0 0.0
  %2989 = vmatpush1.xpose.msra.mxu0 0.0
  %2990 = vmatprep.subr.mxu0 0.0
  %2991 = vmatpush1.xpose.msra.mxu0 0.0
  %2992 = vmatprep.subr.mxu0 0.0
  %2993 = vmatpush1.xpose.msra.mxu0 0.0
  %2994 = vmatprep.subr.mxu0 0.0
  %2995 = vmatpush1.xpose.msra.mxu0 0.0
  %2996 = vmatprep.subr.mxu0 0.0
  %2997 = vmatpush1.xpose.msra.mxu0 0.0
  %2998 = vmatprep.subr.mxu0 0.0
  %2999 = vmatpush1.xpose.msra.mxu0 0.0
  %3000 = vmatprep.subr.mxu0 0.0
  %3001 = vmatpush1.xpose.msra.mxu0 0.0
  %3002 = vmatprep.subr.mxu0 0.0
  %3003 = vmatpush1.xpose.msra.mxu0 0.0
  %3004 = vmatprep.subr.mxu0 0.0
  %3005 = vmatpush1.xpose.msra.mxu0 0.0
  %3006 = vmatprep.subr.mxu0 0.0
  %3007 = vmatpush1.xpose.msra.mxu0 0.0
  %3008 = vmatprep.mubr.f32.mxu0 0.0
  %3009 = vmatmul.mubr.f32.gmra.mrb[0].mxu0 %v2940
  %v3010 = vpop.f32.mrb[0].mxu0
  %v3011 = vadd.f32 0.0, %v3010
  %v3012 = vpop.f32.mrb[0].mxu0
  %3013 = vdwg.mxu0
  %3014 = vrot.lane.b32.xlu0 %v2859, 96
  %v3015 = vpop.permute.xlu0 %3014
  %v3016 = vsel %vm187, %v2859, 0
  %v3018 = vsel %vm187, %v3015, 0
  %3020 = vmatprep.subr.mxu0 0.0
  %3021 = vmatpush1.xpose.msra.mxu0 %v3018
  %3022 = vmatprep.subr.mxu0 0.0
  %3023 = vmatpush1.xpose.msra.mxu0 0.0
  %3024 = vmatprep.subr.mxu0 0.0
  %3025 = vmatpush1.xpose.msra.mxu0 0.0
  %3026 = vmatprep.subr.mxu0 0.0
  %3027 = vmatpush1.xpose.msra.mxu0 0.0
  %3028 = vmatprep.subr.mxu0 0.0
  %3029 = vmatpush1.xpose.msra.mxu0 0.0
  %3030 = vmatprep.subr.mxu0 0.0
  %3031 = vmatpush1.xpose.msra.mxu0 0.0
  %3032 = vmatprep.subr.mxu0 0.0
  %3033 = vmatpush1.xpose.msra.mxu0 0.0
  %3034 = vmatprep.subr.mxu0 0.0
  %3035 = vmatpush1.xpose.msra.mxu0 0.0
  %3036 = vmatprep.subr.mxu0 0.0
  %3037 = vmatpush1.xpose.msra.mxu0 0.0
  %3038 = vmatprep.subr.mxu0 0.0
  %3039 = vmatpush1.xpose.msra.mxu0 0.0
  %3040 = vmatprep.subr.mxu0 0.0
  %3041 = vmatpush1.xpose.msra.mxu0 0.0
  %3042 = vmatprep.subr.mxu0 0.0
  %3043 = vmatpush1.xpose.msra.mxu0 0.0
  %3044 = vmatprep.subr.mxu0 0.0
  %3045 = vmatpush1.xpose.msra.mxu0 0.0
  %3046 = vmatprep.subr.mxu0 0.0
  %3047 = vmatpush1.xpose.msra.mxu0 0.0
  %3048 = vmatprep.subr.mxu0 0.0
  %3049 = vmatpush1.xpose.msra.mxu0 0.0
  %3050 = vmatprep.subr.mxu0 0.0
  %3051 = vmatpush1.xpose.msra.mxu0 0.0
  %3052 = vmatprep.subr.mxu0 0.0
  %3053 = vmatpush1.xpose.msra.mxu0 0.0
  %3054 = vmatprep.subr.mxu0 0.0
  %3055 = vmatpush1.xpose.msra.mxu0 0.0
  %3056 = vmatprep.subr.mxu0 0.0
  %3057 = vmatpush1.xpose.msra.mxu0 0.0
  %3058 = vmatprep.subr.mxu0 0.0
  %3059 = vmatpush1.xpose.msra.mxu0 0.0
  %3060 = vmatprep.subr.mxu0 0.0
  %3061 = vmatpush1.xpose.msra.mxu0 0.0
  %3062 = vmatprep.subr.mxu0 0.0
  %3063 = vmatpush1.xpose.msra.mxu0 0.0
  %3064 = vmatprep.subr.mxu0 0.0
  %3065 = vmatpush1.xpose.msra.mxu0 0.0
  %3066 = vmatprep.subr.mxu0 0.0
  %3067 = vmatpush1.xpose.msra.mxu0 0.0
  %3068 = vmatprep.subr.mxu0 0.0
  %3069 = vmatpush1.xpose.msra.mxu0 0.0
  %3070 = vmatprep.subr.mxu0 0.0
  %3071 = vmatpush1.xpose.msra.mxu0 0.0
  %3072 = vmatprep.subr.mxu0 0.0
  %3073 = vmatpush1.xpose.msra.mxu0 0.0
  %3074 = vmatprep.subr.mxu0 0.0
  %3075 = vmatpush1.xpose.msra.mxu0 0.0
  %3076 = vmatprep.subr.mxu0 0.0
  %3077 = vmatpush1.xpose.msra.mxu0 0.0
  %3078 = vmatprep.subr.mxu0 0.0
  %3079 = vmatpush1.xpose.msra.mxu0 0.0
  %3080 = vmatprep.subr.mxu0 0.0
  %3081 = vmatpush1.xpose.msra.mxu0 0.0
  %3082 = vmatprep.subr.mxu0 0.0
  %3083 = vmatpush1.xpose.msra.mxu0 0.0
  %3084 = vmatprep.mubr.f32.mxu0 0.0
  %3085 = vmatmul.mubr.f32.gmra.mrb[0].mxu0 %v3016
  %v3086 = vpop.f32.mrb[0].mxu0
  %v3087 = vadd.f32 0.0, %v3086
  %v3088 = vpop.f32.mrb[0].mxu0
  %3089 = vdwg.mxu0
  %3090 = vrot.lane.b32.xlu0 %v2861, 96
  %v3091 = vpop.permute.xlu0 %3090
  %v3092 = vsel %vm187, %v2861, 0
  %v3094 = vsel %vm187, %v3091, 0
  %3096 = vmatprep.subr.mxu0 0.0
  %3097 = vmatpush1.xpose.msra.mxu0 %v3094
  %3098 = vmatprep.subr.mxu0 0.0
  %3099 = vmatpush1.xpose.msra.mxu0 0.0
  %3100 = vmatprep.subr.mxu0 0.0
  %3101 = vmatpush1.xpose.msra.mxu0 0.0
  %3102 = vmatprep.subr.mxu0 0.0
  %3103 = vmatpush1.xpose.msra.mxu0 0.0
  %3104 = vmatprep.subr.mxu0 0.0
  %3105 = vmatpush1.xpose.msra.mxu0 0.0
  %3106 = vmatprep.subr.mxu0 0.0
  %3107 = vmatpush1.xpose.msra.mxu0 0.0
  %3108 = vmatprep.subr.mxu0 0.0
  %3109 = vmatpush1.xpose.msra.mxu0 0.0
  %3110 = vmatprep.subr.mxu0 0.0
  %3111 = vmatpush1.xpose.msra.mxu0 0.0
  %3112 = vmatprep.subr.mxu0 0.0
  %3113 = vmatpush1.xpose.msra.mxu0 0.0
  %3114 = vmatprep.subr.mxu0 0.0
  %3115 = vmatpush1.xpose.msra.mxu0 0.0
  %3116 = vmatprep.subr.mxu0 0.0
  %3117 = vmatpush1.xpose.msra.mxu0 0.0
  %3118 = vmatprep.subr.mxu0 0.0
  %3119 = vmatpush1.xpose.msra.mxu0 0.0
  %3120 = vmatprep.subr.mxu0 0.0
  %3121 = vmatpush1.xpose.msra.mxu0 0.0
  %3122 = vmatprep.subr.mxu0 0.0
  %3123 = vmatpush1.xpose.msra.mxu0 0.0
  %3124 = vmatprep.subr.mxu0 0.0
  %3125 = vmatpush1.xpose.msra.mxu0 0.0
  %3126 = vmatprep.subr.mxu0 0.0
  %3127 = vmatpush1.xpose.msra.mxu0 0.0
  %3128 = vmatprep.subr.mxu0 0.0
  %3129 = vmatpush1.xpose.msra.mxu0 0.0
  %3130 = vmatprep.subr.mxu0 0.0
  %3131 = vmatpush1.xpose.msra.mxu0 0.0
  %3132 = vmatprep.subr.mxu0 0.0
  %3133 = vmatpush1.xpose.msra.mxu0 0.0
  %3134 = vmatprep.subr.mxu0 0.0
  %3135 = vmatpush1.xpose.msra.mxu0 0.0
  %3136 = vmatprep.subr.mxu0 0.0
  %3137 = vmatpush1.xpose.msra.mxu0 0.0
  %3138 = vmatprep.subr.mxu0 0.0
  %3139 = vmatpush1.xpose.msra.mxu0 0.0
  %3140 = vmatprep.subr.mxu0 0.0
  %3141 = vmatpush1.xpose.msra.mxu0 0.0
  %3142 = vmatprep.subr.mxu0 0.0
  %3143 = vmatpush1.xpose.msra.mxu0 0.0
  %3144 = vmatprep.subr.mxu0 0.0
  %3145 = vmatpush1.xpose.msra.mxu0 0.0
  %3146 = vmatprep.subr.mxu0 0.0
  %3147 = vmatpush1.xpose.msra.mxu0 0.0
  %3148 = vmatprep.subr.mxu0 0.0
  %3149 = vmatpush1.xpose.msra.mxu0 0.0
  %3150 = vmatprep.subr.mxu0 0.0
  %3151 = vmatpush1.xpose.msra.mxu0 0.0
  %3152 = vmatprep.subr.mxu0 0.0
  %3153 = vmatpush1.xpose.msra.mxu0 0.0
  %3154 = vmatprep.subr.mxu0 0.0
  %3155 = vmatpush1.xpose.msra.mxu0 0.0
  %3156 = vmatprep.subr.mxu0 0.0
  %3157 = vmatpush1.xpose.msra.mxu0 0.0
  %3158 = vmatprep.subr.mxu0 0.0
  %3159 = vmatpush1.xpose.msra.mxu0 0.0
  %3160 = vmatprep.mubr.f32.mxu0 0.0
  %3161 = vmatmul.mubr.f32.gmra.mrb[0].mxu0 %v3092
  %v3162 = vpop.f32.mrb[0].mxu0
  %v3163 = vadd.f32 0.0, %v3162
  %v3164 = vpop.f32.mrb[0].mxu0
  %3165 = vdwg.mxu0
  %v3166 = vmul.f32 %v2935, 0.35355338
  %v3167 = vmul.f32 %v3011, 0.35355338
  %v3168 = vmul.f32 %v3087, 0.35355338
  %v3169 = vmul.f32 %v3163, 0.35355338
  %v3170 = vadd.f32 %v3166, %v84
  %v3171 = vadd.f32 %v3167, %v84
  %v3172 = vadd.f32 %v3168, %v84
  %v3173 = vadd.f32 %v3169, %v84
  %v3174 = vsel %vm187, %v3170, -inf
  %3175 = vmax.xlane.f32.xlu0 %v3174
  %v3176 = vpop.xlane.xlu0 %3175
  %v3177 = vsel %vm187, %v3171, -inf
  %3178 = vmax.xlane.f32.xlu0 %v3177
  %v3179 = vpop.xlane.xlu0 %3178
  %v3180 = vsel %vm187, %v3172, -inf
  %3181 = vmax.xlane.f32.xlu0 %v3180
  %v3182 = vpop.xlane.xlu0 %3181
  %v3183 = vsel %vm187, %v3173, -inf
  %3184 = vmax.xlane.f32.xlu0 %v3183
  %v3185 = vpop.xlane.xlu0 %3184
  %v3186 = vsub.f32 %v3170, %v3176
  %v3187 = vsub.f32 %v3171, %v3179
  %v3188 = vsub.f32 %v3172, %v3182
  %v3189 = vsub.f32 %v3173, %v3185
  %v3190 = vmul.f32 %v3186, 1.442695
  %v3191 = vpow.pop %v3190
  %v3192 = vmul.f32 %v3187, 1.442695
  %v3193 = vpow.pop %v3192
  %v3194 = vmul.f32 %v3188, 1.442695
  %v3195 = vpow.pop %v3194
  %v3196 = vmul.f32 %v3189, 1.442695
  %v3197 = vpow.pop %v3196
  %v3198 = vsel %vm187, %v3191, 0.0
  %3199 = vadd.xlane.f32.xlu0 %v3198
  %v3200 = vpop.xlane.xlu0 %3199
  %v3201 = vsel %vm187, %v3193, 0.0
  %3202 = vadd.xlane.f32.xlu0 %v3201
  %v3203 = vpop.xlane.xlu0 %3202
  %v3204 = vsel %vm187, %v3195, 0.0
  %3205 = vadd.xlane.f32.xlu0 %v3204
  %v3206 = vpop.xlane.xlu0 %3205
  %v3207 = vsel %vm187, %v3197, 0.0
  %3208 = vadd.xlane.f32.xlu0 %v3207
  %v3209 = vpop.xlane.xlu0 %3208
  %v3210 = vrcp.pop %v3200
  %v3211 = vmul.f32 %v3191, %v3210
  %v3212 = vrcp.pop %v3203
  %v3213 = vmul.f32 %v3193, %v3212
  %v3214 = vrcp.pop %v3206
  %v3215 = vmul.f32 %v3195, %v3214
  %v3216 = vrcp.pop %v3209
  %v3217 = vmul.f32 %v3197, %v3216
  %3218 = vrot.lane.b32.xlu0 %v2092, 64
  %v3219 = vpop.permute.xlu0 %3218
  %v3222 = vsel %vm187, %v3211, 0
  %3224 = vmatprep.subr.mxu0 0.0
  %3225 = vmatpush1.msra.mxu0 %v3219
  %3226 = vmatprep.subr.mxu0 0.0
  %3227 = vmatpush1.msra.mxu0 0.0
  %3228 = vmatprep.subr.mxu0 0.0
  %3229 = vmatpush1.msra.mxu0 0.0
  %3230 = vmatprep.subr.mxu0 0.0
  %3231 = vmatpush1.msra.mxu0 0.0
  %3232 = vmatprep.subr.mxu0 0.0
  %3233 = vmatpush1.msra.mxu0 0.0
  %3234 = vmatprep.subr.mxu0 0.0
  %3235 = vmatpush1.msra.mxu0 0.0
  %3236 = vmatprep.subr.mxu0 0.0
  %3237 = vmatpush1.msra.mxu0 0.0
  %3238 = vmatprep.subr.mxu0 0.0
  %3239 = vmatpush1.msra.mxu0 0.0
  %3240 = vmatprep.subr.mxu0 0.0
  %3241 = vmatpush1.msra.mxu0 0.0
  %3242 = vmatprep.subr.mxu0 0.0
  %3243 = vmatpush1.msra.mxu0 0.0
  %3244 = vmatprep.subr.mxu0 0.0
  %3245 = vmatpush1.msra.mxu0 0.0
  %3246 = vmatprep.subr.mxu0 0.0
  %3247 = vmatpush1.msra.mxu0 0.0
  %3248 = vmatprep.subr.mxu0 0.0
  %3249 = vmatpush1.msra.mxu0 0.0
  %3250 = vmatprep.subr.mxu0 0.0
  %3251 = vmatpush1.msra.mxu0 0.0
  %3252 = vmatprep.subr.mxu0 0.0
  %3253 = vmatpush1.msra.mxu0 0.0
  %3254 = vmatprep.subr.mxu0 0.0
  %3255 = vmatpush1.msra.mxu0 0.0
  %3256 = vmatprep.subr.mxu0 0.0
  %3257 = vmatpush1.msra.mxu0 0.0
  %3258 = vmatprep.subr.mxu0 0.0
  %3259 = vmatpush1.msra.mxu0 0.0
  %3260 = vmatprep.subr.mxu0 0.0
  %3261 = vmatpush1.msra.mxu0 0.0
  %3262 = vmatprep.subr.mxu0 0.0
  %3263 = vmatpush1.msra.mxu0 0.0
  %3264 = vmatprep.subr.mxu0 0.0
  %3265 = vmatpush1.msra.mxu0 0.0
  %3266 = vmatprep.subr.mxu0 0.0
  %3267 = vmatpush1.msra.mxu0 0.0
  %3268 = vmatprep.subr.mxu0 0.0
  %3269 = vmatpush1.msra.mxu0 0.0
  %3270 = vmatprep.subr.mxu0 0.0
  %3271 = vmatpush1.msra.mxu0 0.0
  %3272 = vmatprep.subr.mxu0 0.0
  %3273 = vmatpush1.msra.mxu0 0.0
  %3274 = vmatprep.subr.mxu0 0.0
  %3275 = vmatpush1.msra.mxu0 0.0
  %3276 = vmatprep.subr.mxu0 0.0
  %3277 = vmatpush1.msra.mxu0 0.0
  %3278 = vmatprep.subr.mxu0 0.0
  %3279 = vmatpush1.msra.mxu0 0.0
  %3280 = vmatprep.subr.mxu0 0.0
  %3281 = vmatpush1.msra.mxu0 0.0
  %3282 = vmatprep.subr.mxu0 0.0
  %3283 = vmatpush1.msra.mxu0 0.0
  %3284 = vmatprep.subr.mxu0 0.0
  %3285 = vmatpush1.msra.mxu0 0.0
  %3286 = vmatprep.subr.mxu0 0.0
  %3287 = vmatpush1.msra.mxu0 0.0
  %3288 = vmatprep.mubr.f32.mxu0 0.0
  %3289 = vmatmul.mubr.f32.gmra.mrb[0].mxu0 %v3222
  %v3290 = vpop.f32.mrb[0].mxu0
  %v3291 = vadd.f32 0.0, %v3290
  %v3292 = vpop.f32.mrb[0].mxu0
  %3293 = vdwg.mxu0
  %3294 = vrot.lane.b32.xlu0 %v2857, 64
  %v3295 = vpop.permute.xlu0 %3294
  %v3298 = vsel %vm187, %v3213, 0
  %3300 = vmatprep.subr.mxu0 0.0
  %3301 = vmatpush1.msra.mxu0 %v3295
  %3302 = vmatprep.subr.mxu0 0.0
  %3303 = vmatpush1.msra.mxu0 0.0
  %3304 = vmatprep.subr.mxu0 0.0
  %3305 = vmatpush1.msra.mxu0 0.0
  %3306 = vmatprep.subr.mxu0 0.0
  %3307 = vmatpush1.msra.mxu0 0.0
  %3308 = vmatprep.subr.mxu0 0.0
  %3309 = vmatpush1.msra.mxu0 0.0
  %3310 = vmatprep.subr.mxu0 0.0
  %3311 = vmatpush1.msra.mxu0 0.0
  %3312 = vmatprep.subr.mxu0 0.0
  %3313 = vmatpush1.msra.mxu0 0.0
  %3314 = vmatprep.subr.mxu0 0.0
  %3315 = vmatpush1.msra.mxu0 0.0
  %3316 = vmatprep.subr.mxu0 0.0
  %3317 = vmatpush1.msra.mxu0 0.0
  %3318 = vmatprep.subr.mxu0 0.0
  %3319 = vmatpush1.msra.mxu0 0.0
  %3320 = vmatprep.subr.mxu0 0.0
  %3321 = vmatpush1.msra.mxu0 0.0
  %3322 = vmatprep.subr.mxu0 0.0
  %3323 = vmatpush1.msra.mxu0 0.0
  %3324 = vmatprep.subr.mxu0 0.0
  %3325 = vmatpush1.msra.mxu0 0.0
  %3326 = vmatprep.subr.mxu0 0.0
  %3327 = vmatpush1.msra.mxu0 0.0
  %3328 = vmatprep.subr.mxu0 0.0
  %3329 = vmatpush1.msra.mxu0 0.0
  %3330 = vmatprep.subr.mxu0 0.0
  %3331 = vmatpush1.msra.mxu0 0.0
  %3332 = vmatprep.subr.mxu0 0.0
  %3333 = vmatpush1.msra.mxu0 0.0
  %3334 = vmatprep.subr.mxu0 0.0
  %3335 = vmatpush1.msra.mxu0 0.0
  %3336 = vmatprep.subr.mxu0 0.0
  %3337 = vmatpush1.msra.mxu0 0.0
  %3338 = vmatprep.subr.mxu0 0.0
  %3339 = vmatpush1.msra.mxu0 0.0
  %3340 = vmatprep.subr.mxu0 0.0
  %3341 = vmatpush1.msra.mxu0 0.0
  %3342 = vmatprep.subr.mxu0 0.0
  %3343 = vmatpush1.msra.mxu0 0.0
  %3344 = vmatprep.subr.mxu0 0.0
  %3345 = vmatpush1.msra.mxu0 0.0
  %3346 = vmatprep.subr.mxu0 0.0
  %3347 = vmatpush1.msra.mxu0 0.0
  %3348 = vmatprep.subr.mxu0 0.0
  %3349 = vmatpush1.msra.mxu0 0.0
  %3350 = vmatprep.subr.mxu0 0.0
  %3351 = vmatpush1.msra.mxu0 0.0
  %3352 = vmatprep.subr.mxu0 0.0
  %3353 = vmatpush1.msra.mxu0 0.0
  %3354 = vmatprep.subr.mxu0 0.0
  %3355 = vmatpush1.msra.mxu0 0.0
  %3356 = vmatprep.subr.mxu0 0.0
  %3357 = vmatpush1.msra.mxu0 0.0
  %3358 = vmatprep.subr.mxu0 0.0
  %3359 = vmatpush1.msra.mxu0 0.0
  %3360 = vmatprep.subr.mxu0 0.0
  %3361 = vmatpush1.msra.mxu0 0.0
  %3362 = vmatprep.subr.mxu0 0.0
  %3363 = vmatpush1.msra.mxu0 0.0
  %3364 = vmatprep.mubr.f32.mxu0 0.0
  %3365 = vmatmul.mubr.f32.gmra.mrb[0].mxu0 %v3298
  %v3366 = vpop.f32.mrb[0].mxu0
  %v3367 = vadd.f32 0.0, %v3366
  %v3368 = vpop.f32.mrb[0].mxu0
  %3369 = vdwg.mxu0
  %3370 = vrot.lane.b32.xlu0 %v2859, 64
  %v3371 = vpop.permute.xlu0 %3370
  %v3374 = vsel %vm187, %v3215, 0
  %3376 = vmatprep.subr.mxu0 0.0
  %3377 = vmatpush1.msra.mxu0 %v3371
  %3378 = vmatprep.subr.mxu0 0.0
  %3379 = vmatpush1.msra.mxu0 0.0
  %3380 = vmatprep.subr.mxu0 0.0
  %3381 = vmatpush1.msra.mxu0 0.0
  %3382 = vmatprep.subr.mxu0 0.0
  %3383 = vmatpush1.msra.mxu0 0.0
  %3384 = vmatprep.subr.mxu0 0.0
  %3385 = vmatpush1.msra.mxu0 0.0
  %3386 = vmatprep.subr.mxu0 0.0
  %3387 = vmatpush1.msra.mxu0 0.0
  %3388 = vmatprep.subr.mxu0 0.0
  %3389 = vmatpush1.msra.mxu0 0.0
  %3390 = vmatprep.subr.mxu0 0.0
  %3391 = vmatpush1.msra.mxu0 0.0
  %3392 = vmatprep.subr.mxu0 0.0
  %3393 = vmatpush1.msra.mxu0 0.0
  %3394 = vmatprep.subr.mxu0 0.0
  %3395 = vmatpush1.msra.mxu0 0.0
  %3396 = vmatprep.subr.mxu0 0.0
  %3397 = vmatpush1.msra.mxu0 0.0
  %3398 = vmatprep.subr.mxu0 0.0
  %3399 = vmatpush1.msra.mxu0 0.0
  %3400 = vmatprep.subr.mxu0 0.0
  %3401 = vmatpush1.msra.mxu0 0.0
  %3402 = vmatprep.subr.mxu0 0.0
  %3403 = vmatpush1.msra.mxu0 0.0
  %3404 = vmatprep.subr.mxu0 0.0
  %3405 = vmatpush1.msra.mxu0 0.0
  %3406 = vmatprep.subr.mxu0 0.0
  %3407 = vmatpush1.msra.mxu0 0.0
  %3408 = vmatprep.subr.mxu0 0.0
  %3409 = vmatpush1.msra.mxu0 0.0
  %3410 = vmatprep.subr.mxu0 0.0
  %3411 = vmatpush1.msra.mxu0 0.0
  %3412 = vmatprep.subr.mxu0 0.0
  %3413 = vmatpush1.msra.mxu0 0.0
  %3414 = vmatprep.subr.mxu0 0.0
  %3415 = vmatpush1.msra.mxu0 0.0
  %3416 = vmatprep.subr.mxu0 0.0
  %3417 = vmatpush1.msra.mxu0 0.0
  %3418 = vmatprep.subr.mxu0 0.0
  %3419 = vmatpush1.msra.mxu0 0.0
  %3420 = vmatprep.subr.mxu0 0.0
  %3421 = vmatpush1.msra.mxu0 0.0
  %3422 = vmatprep.subr.mxu0 0.0
  %3423 = vmatpush1.msra.mxu0 0.0
  %3424 = vmatprep.subr.mxu0 0.0
  %3425 = vmatpush1.msra.mxu0 0.0
  %3426 = vmatprep.subr.mxu0 0.0
  %3427 = vmatpush1.msra.mxu0 0.0
  %3428 = vmatprep.subr.mxu0 0.0
  %3429 = vmatpush1.msra.mxu0 0.0
  %3430 = vmatprep.subr.mxu0 0.0
  %3431 = vmatpush1.msra.mxu0 0.0
  %3432 = vmatprep.subr.mxu0 0.0
  %3433 = vmatpush1.msra.mxu0 0.0
  %3434 = vmatprep.subr.mxu0 0.0
  %3435 = vmatpush1.msra.mxu0 0.0
  %3436 = vmatprep.subr.mxu0 0.0
  %3437 = vmatpush1.msra.mxu0 0.0
  %3438 = vmatprep.subr.mxu0 0.0
  %3439 = vmatpush1.msra.mxu0 0.0
  %3440 = vmatprep.mubr.f32.mxu0 0.0
  %3441 = vmatmul.mubr.f32.gmra.mrb[0].mxu0 %v3374
  %v3442 = vpop.f32.mrb[0].mxu0
  %v3443 = vadd.f32 0.0, %v3442
  %v3444 = vpop.f32.mrb[0].mxu0
  %3445 = vdwg.mxu0
  %3446 = vrot.lane.b32.xlu0 %v2861, 64
  %v3447 = vpop.permute.xlu0 %3446
  %v3450 = vsel %vm187, %v3217, 0
  %3452 = vmatprep.subr.mxu0 0.0
  %3453 = vmatpush1.msra.mxu0 %v3447
  %3454 = vmatprep.subr.mxu0 0.0
  %3455 = vmatpush1.msra.mxu0 0.0
  %3456 = vmatprep.subr.mxu0 0.0
  %3457 = vmatpush1.msra.mxu0 0.0
  %3458 = vmatprep.subr.mxu0 0.0
  %3459 = vmatpush1.msra.mxu0 0.0
  %3460 = vmatprep.subr.mxu0 0.0
  %3461 = vmatpush1.msra.mxu0 0.0
  %3462 = vmatprep.subr.mxu0 0.0
  %3463 = vmatpush1.msra.mxu0 0.0
  %3464 = vmatprep.subr.mxu0 0.0
  %3465 = vmatpush1.msra.mxu0 0.0
  %3466 = vmatprep.subr.mxu0 0.0
  %3467 = vmatpush1.msra.mxu0 0.0
  %3468 = vmatprep.subr.mxu0 0.0
  %3469 = vmatpush1.msra.mxu0 0.0
  %3470 = vmatprep.subr.mxu0 0.0
  %3471 = vmatpush1.msra.mxu0 0.0
  %3472 = vmatprep.subr.mxu0 0.0
  %3473 = vmatpush1.msra.mxu0 0.0
  %3474 = vmatprep.subr.mxu0 0.0
  %3475 = vmatpush1.msra.mxu0 0.0
  %3476 = vmatprep.subr.mxu0 0.0
  %3477 = vmatpush1.msra.mxu0 0.0
  %3478 = vmatprep.subr.mxu0 0.0
  %3479 = vmatpush1.msra.mxu0 0.0
  %3480 = vmatprep.subr.mxu0 0.0
  %3481 = vmatpush1.msra.mxu0 0.0
  %3482 = vmatprep.subr.mxu0 0.0
  %3483 = vmatpush1.msra.mxu0 0.0
  %3484 = vmatprep.subr.mxu0 0.0
  %3485 = vmatpush1.msra.mxu0 0.0
  %3486 = vmatprep.subr.mxu0 0.0
  %3487 = vmatpush1.msra.mxu0 0.0
  %3488 = vmatprep.subr.mxu0 0.0
  %3489 = vmatpush1.msra.mxu0 0.0
  %3490 = vmatprep.subr.mxu0 0.0
  %3491 = vmatpush1.msra.mxu0 0.0
  %3492 = vmatprep.subr.mxu0 0.0
  %3493 = vmatpush1.msra.mxu0 0.0
  %3494 = vmatprep.subr.mxu0 0.0
  %3495 = vmatpush1.msra.mxu0 0.0
  %3496 = vmatprep.subr.mxu0 0.0
  %3497 = vmatpush1.msra.mxu0 0.0
  %3498 = vmatprep.subr.mxu0 0.0
  %3499 = vmatpush1.msra.mxu0 0.0
  %3500 = vmatprep.subr.mxu0 0.0
  %3501 = vmatpush1.msra.mxu0 0.0
  %3502 = vmatprep.subr.mxu0 0.0
  %3503 = vmatpush1.msra.mxu0 0.0
  %3504 = vmatprep.subr.mxu0 0.0
  %3505 = vmatpush1.msra.mxu0 0.0
  %3506 = vmatprep.subr.mxu0 0.0
  %3507 = vmatpush1.msra.mxu0 0.0
  %3508 = vmatprep.subr.mxu0 0.0
  %3509 = vmatpush1.msra.mxu0 0.0
  %3510 = vmatprep.subr.mxu0 0.0
  %3511 = vmatpush1.msra.mxu0 0.0
  %3512 = vmatprep.subr.mxu0 0.0
  %3513 = vmatpush1.msra.mxu0 0.0
  %3514 = vmatprep.subr.mxu0 0.0
  %3515 = vmatpush1.msra.mxu0 0.0
  %3516 = vmatprep.mubr.f32.mxu0 0.0
  %3517 = vmatmul.mubr.f32.gmra.mrb[0].mxu0 %v3450
  %v3518 = vpop.f32.mrb[0].mxu0
  %v3519 = vadd.f32 0.0, %v3518
  %v3520 = vpop.f32.mrb[0].mxu0
  %3521 = vdwg.mxu0
  %3523 = vrot.lane.b32.xlu0 %v3367, 8
  %v3524 = vpop.permute.xlu0 %3523
  %3527 = vrot.lane.b32.xlu0 %v3443, 16
  %v3528 = vpop.permute.xlu0 %3527
  %3531 = vrot.lane.b32.xlu0 %v3519, 24
  %v3532 = vpop.permute.xlu0 %3531
  %v3534 = vsel %vm187, %v3291, %v3524
  %v3535 = vsel %vm859, %v3534, %v3528
  %v3536 = vsel %vm861, %v3535, %v3532
  %v3537 = vld [vmem:[%s2777] sm:$0xff]
  %v3538 = vld [vmem:[%s2777 + $0x8] sm:$0xff]
  %v3539 = vld [vmem:[%s2777 + $0x10] sm:$0xff]
  %v3540 = vld [vmem:[%s2777 + $0x18] sm:$0xff]
  %v3542 = vsel %vm96, %v3536, 0
  %3544 = vmatprep.subr.mxu0 0.0
  %3545 = vmatpush1.msra.mxu0 %v3537
  %3546 = vmatprep.subr.mxu0 0.0
  %3547 = vmatpush1.msra.mxu0 %v3538
  %3548 = vmatprep.subr.mxu0 0.0
  %3549 = vmatpush1.msra.mxu0 %v3539
  %3550 = vmatprep.subr.mxu0 0.0
  %3551 = vmatpush1.msra.mxu0 %v3540
  %3552 = vmatprep.subr.mxu0 0.0
  %3553 = vmatpush1.msra.mxu0 0.0
  %3554 = vmatprep.subr.mxu0 0.0
  %3555 = vmatpush1.msra.mxu0 0.0
  %3556 = vmatprep.subr.mxu0 0.0
  %3557 = vmatpush1.msra.mxu0 0.0
  %3558 = vmatprep.subr.mxu0 0.0
  %3559 = vmatpush1.msra.mxu0 0.0
  %3560 = vmatprep.subr.mxu0 0.0
  %3561 = vmatpush1.msra.mxu0 0.0
  %3562 = vmatprep.subr.mxu0 0.0
  %3563 = vmatpush1.msra.mxu0 0.0
  %3564 = vmatprep.subr.mxu0 0.0
  %3565 = vmatpush1.msra.mxu0 0.0
  %3566 = vmatprep.subr.mxu0 0.0
  %3567 = vmatpush1.msra.mxu0 0.0
  %3568 = vmatprep.subr.mxu0 0.0
  %3569 = vmatpush1.msra.mxu0 0.0
  %3570 = vmatprep.subr.mxu0 0.0
  %3571 = vmatpush1.msra.mxu0 0.0
  %3572 = vmatprep.subr.mxu0 0.0
  %3573 = vmatpush1.msra.mxu0 0.0
  %3574 = vmatprep.subr.mxu0 0.0
  %3575 = vmatpush1.msra.mxu0 0.0
  %3576 = vmatprep.subr.mxu0 0.0
  %3577 = vmatpush1.msra.mxu0 0.0
  %3578 = vmatprep.subr.mxu0 0.0
  %3579 = vmatpush1.msra.mxu0 0.0
  %3580 = vmatprep.subr.mxu0 0.0
  %3581 = vmatpush1.msra.mxu0 0.0
  %3582 = vmatprep.subr.mxu0 0.0
  %3583 = vmatpush1.msra.mxu0 0.0
  %3584 = vmatprep.subr.mxu0 0.0
  %3585 = vmatpush1.msra.mxu0 0.0
  %3586 = vmatprep.subr.mxu0 0.0
  %3587 = vmatpush1.msra.mxu0 0.0
  %3588 = vmatprep.subr.mxu0 0.0
  %3589 = vmatpush1.msra.mxu0 0.0
  %3590 = vmatprep.subr.mxu0 0.0
  %3591 = vmatpush1.msra.mxu0 0.0
  %3592 = vmatprep.subr.mxu0 0.0
  %3593 = vmatpush1.msra.mxu0 0.0
  %3594 = vmatprep.subr.mxu0 0.0
  %3595 = vmatpush1.msra.mxu0 0.0
  %3596 = vmatprep.subr.mxu0 0.0
  %3597 = vmatpush1.msra.mxu0 0.0
  %3598 = vmatprep.subr.mxu0 0.0
  %3599 = vmatpush1.msra.mxu0 0.0
  %3600 = vmatprep.subr.mxu0 0.0
  %3601 = vmatpush1.msra.mxu0 0.0
  %3602 = vmatprep.subr.mxu0 0.0
  %3603 = vmatpush1.msra.mxu0 0.0
  %3604 = vmatprep.subr.mxu0 0.0
  %3605 = vmatpush1.msra.mxu0 0.0
  %3606 = vmatprep.subr.mxu0 0.0
  %3607 = vmatpush1.msra.mxu0 0.0
  %3608 = vmatprep.mubr.f32.mxu0 0.0
  %3609 = vmatmul.mubr.f32.gmra.mrb[0].mxu0 %v3542
  %v3610 = vpop.f32.mrb[0].mxu0
  %v3611 = vadd.f32 0.0, %v3610
  %v3612 = vpop.f32.mrb[0].mxu0
  %3613 = vdwg.mxu0
  %s3614 = scalar_lea.vmem %s6, 1
  %v3615 = vld [vmem:[%s3614] sm:$0x1]
  %v3617 = vlaneseq
  %v3618 = vshrl.u32 %v3617, 7
  %v3619 = vsub.s32 0, %v3618
  %v3620 = vrot.slane %v3615, %v3619
  %v3622 = vadd.f32 %v2852, %v3620
  %v3623 = vadd.f32 %v3611, %v3620
  %v3624 = vadd.f32 %v1999, %v3622
  %v3625 = vadd.f32 %v2000, %v3623
  %v3626 = vsel %vm96, %v3624, 0.0
  %3627 = vadd.xlane.f32.xlu0 %v3626
  %v3628 = vpop.xlane.xlu0 %3627
  %v3629 = vsel %vm96, %v3625, 0.0
  %3630 = vadd.xlane.f32.xlu0 %v3629
  %v3631 = vpop.xlane.xlu0 %3630
  %v3632 = vmul.f32 %v3628, %v1716
  %v3633 = vmul.f32 %v3631, %v1716
  %v3634 = vsub.f32 %v3624, %v3632
  %v3635 = vsub.f32 %v3625, %v3633
  %v3636 = vmul.f32 %v3634, %v3634
  %v3637 = vmul.f32 %v3635, %v3635
  %v3638 = vsel %vm96, %v3636, 0.0
  %3639 = vadd.xlane.f32.xlu0 %v3638
  %v3640 = vpop.xlane.xlu0 %3639
  %v3641 = vsel %vm96, %v3637, 0.0
  %3642 = vadd.xlane.f32.xlu0 %v3641
  %v3643 = vpop.xlane.xlu0 %3642
  %v3644 = vmul.f32 %v3640, %v1716
  %v3645 = vmul.f32 %v3643, %v1716
  %s3646 = scalar_lea.vmem %s7, 1
  %v3647 = vld [vmem:[%s3646] sm:$0x1]
  %v3648 = vadd.f32 %v3644, 1e-05
  %v3649 = vadd.f32 %v3645, 1e-05
  %v3650 = vrsqrt.pop %v3648
  %v3651 = vrsqrt.pop %v3649
  %v3652 = vmul.f32 %v3634, %v3650
  %v3653 = vmul.f32 %v3635, %v3651
  %v3655 = vlaneseq
  %v3656 = vshrl.u32 %v3655, 7
  %v3657 = vsub.s32 0, %v3656
  %v3658 = vrot.slane %v3647, %v3657
  %v3660 = vmul.f32 %v3658, %v3652
  %v3661 = vmul.f32 %v3658, %v3653
  %s3662 = scalar_lea.vmem %s8, 1
  %v3663 = vld [vmem:[%s3662] sm:$0x1]
  %v3665 = vlaneseq
  %v3666 = vshrl.u32 %v3665, 7
  %v3667 = vsub.s32 0, %v3666
  %v3668 = vrot.slane %v3663, %v3667
  %v3670 = vadd.f32 %v3660, %v3668
  %v3671 = vadd.f32 %v3661, %v3668
  %s3672 = scalar_lea.vmem %s9, 32
  %v3673 = vld [vmem:[%s3672] sm:$0xff]
  %v3674 = vld [vmem:[%s3672 + $0x8] sm:$0xff]
  %v3675 = vld [vmem:[%s3672 + $0x10] sm:$0xff]
  %v3676 = vld [vmem:[%s3672 + $0x18] sm:$0xff]
  %s3677 = scalar_lea.vmem %s10, 1
  %v3678 = vld [vmem:[%s3677] sm:$0x1]
  %v3680 = vlaneseq
  %v3681 = vshrl.u32 %v3680, 7
  %v3682 = vsub.s32 0, %v3681
  %v3683 = vrot.slane %v3678, %v3682
  %v3686 = vsel %vm96, %v3670, 0
  %v3689 = vsel %vm96, %v3671, 0
  %3691 = vmatprep.subr.mxu0 0.0
  %3692 = vmatpush1.msra.mxu0 %v3673
  %3693 = vmatprep.subr.mxu0 0.0
  %3694 = vmatpush1.msra.mxu0 %v3674
  %3695 = vmatprep.subr.mxu0 0.0
  %3696 = vmatpush1.msra.mxu0 %v3675
  %3697 = vmatprep.subr.mxu0 0.0
  %3698 = vmatpush1.msra.mxu0 %v3676
  %3699 = vmatprep.subr.mxu0 0.0
  %3700 = vmatpush1.msra.mxu0 0.0
  %3701 = vmatprep.subr.mxu0 0.0
  %3702 = vmatpush1.msra.mxu0 0.0
  %3703 = vmatprep.subr.mxu0 0.0
  %3704 = vmatpush1.msra.mxu0 0.0
  %3705 = vmatprep.subr.mxu0 0.0
  %3706 = vmatpush1.msra.mxu0 0.0
  %3707 = vmatprep.subr.mxu0 0.0
  %3708 = vmatpush1.msra.mxu0 0.0
  %3709 = vmatprep.subr.mxu0 0.0
  %3710 = vmatpush1.msra.mxu0 0.0
  %3711 = vmatprep.subr.mxu0 0.0
  %3712 = vmatpush1.msra.mxu0 0.0
  %3713 = vmatprep.subr.mxu0 0.0
  %3714 = vmatpush1.msra.mxu0 0.0
  %3715 = vmatprep.subr.mxu0 0.0
  %3716 = vmatpush1.msra.mxu0 0.0
  %3717 = vmatprep.subr.mxu0 0.0
  %3718 = vmatpush1.msra.mxu0 0.0
  %3719 = vmatprep.subr.mxu0 0.0
  %3720 = vmatpush1.msra.mxu0 0.0
  %3721 = vmatprep.subr.mxu0 0.0
  %3722 = vmatpush1.msra.mxu0 0.0
  %3723 = vmatprep.subr.mxu0 0.0
  %3724 = vmatpush1.msra.mxu0 0.0
  %3725 = vmatprep.subr.mxu0 0.0
  %3726 = vmatpush1.msra.mxu0 0.0
  %3727 = vmatprep.subr.mxu0 0.0
  %3728 = vmatpush1.msra.mxu0 0.0
  %3729 = vmatprep.subr.mxu0 0.0
  %3730 = vmatpush1.msra.mxu0 0.0
  %3731 = vmatprep.subr.mxu0 0.0
  %3732 = vmatpush1.msra.mxu0 0.0
  %3733 = vmatprep.subr.mxu0 0.0
  %3734 = vmatpush1.msra.mxu0 0.0
  %3735 = vmatprep.subr.mxu0 0.0
  %3736 = vmatpush1.msra.mxu0 0.0
  %3737 = vmatprep.subr.mxu0 0.0
  %3738 = vmatpush1.msra.mxu0 0.0
  %3739 = vmatprep.subr.mxu0 0.0
  %3740 = vmatpush1.msra.mxu0 0.0
  %3741 = vmatprep.subr.mxu0 0.0
  %3742 = vmatpush1.msra.mxu0 0.0
  %3743 = vmatprep.subr.mxu0 0.0
  %3744 = vmatpush1.msra.mxu0 0.0
  %3745 = vmatprep.subr.mxu0 0.0
  %3746 = vmatpush1.msra.mxu0 0.0
  %3747 = vmatprep.subr.mxu0 0.0
  %3748 = vmatpush1.msra.mxu0 0.0
  %3749 = vmatprep.subr.mxu0 0.0
  %3750 = vmatpush1.msra.mxu0 0.0
  %3751 = vmatprep.subr.mxu0 0.0
  %3752 = vmatpush1.msra.mxu0 0.0
  %3753 = vmatprep.subr.mxu0 0.0
  %3754 = vmatpush1.msra.mxu0 0.0
  %3755 = vmatprep.mubr.f32.mxu0 0.0
  %3756 = vmatmul.mubr.f32.gmra.mrb[0].mxu0 %v3686
  %v3757 = vpop.f32.mrb[0].mxu0
  %v3758 = vadd.f32 %v3683, %v3757
  %v3759 = vpop.f32.mrb[0].mxu0
  %3760 = vmatprep.mubr.f32.mxu0 0.0
  %3761 = vmatmul.mubr.f32.gmra.mrb[0].mxu0 %v3689
  %v3762 = vpop.f32.mrb[0].mxu0
  %v3763 = vadd.f32 %v3683, %v3762
  %v3764 = vpop.f32.mrb[0].mxu0
  %3765 = vdwg.mxu0
  %v3766 = vmul.f32 %v3758, 0.5
  %v3767 = vmul.f32 %v3763, 0.5
  %v3768 = vmul.f32 %v3758, 0.70710677
  %v3769 = vmul.f32 %v3763, 0.70710677
  %v3770 = verf.f32.pop %v3768
  %v3771 = verf.f32.pop %v3769
  %v3772 = vadd.f32 %v3770, 1.0
  %v3773 = vadd.f32 %v3771, 1.0
  %v3774 = vmul.f32 %v3766, %v3772
  %v3775 = vmul.f32 %v3767, %v3773
  %s3776 = scalar_lea.vmem %s11, 128
  %v3777 = vld [vmem:[%s3776] sm:$0xff]
  %v3778 = vld [vmem:[%s3776 + $0x8] sm:$0xff]
  %v3779 = vld [vmem:[%s3776 + $0x10] sm:$0xff]
  %v3780 = vld [vmem:[%s3776 + $0x18] sm:$0xff]
  %v3781 = vld [vmem:[%s3776 + $0x20] sm:$0xff]
  %v3782 = vld [vmem:[%s3776 + $0x28] sm:$0xff]
  %v3783 = vld [vmem:[%s3776 + $0x30] sm:$0xff]
  %v3784 = vld [vmem:[%s3776 + $0x38] sm:$0xff]
  %v3785 = vld [vmem:[%s3776 + $0x40] sm:$0xff]
  %v3786 = vld [vmem:[%s3776 + $0x48] sm:$0xff]
  %v3787 = vld [vmem:[%s3776 + $0x50] sm:$0xff]
  %v3788 = vld [vmem:[%s3776 + $0x58] sm:$0xff]
  %v3789 = vld [vmem:[%s3776 + $0x60] sm:$0xff]
  %v3790 = vld [vmem:[%s3776 + $0x68] sm:$0xff]
  %v3791 = vld [vmem:[%s3776 + $0x70] sm:$0xff]
  %v3792 = vld [vmem:[%s3776 + $0x78] sm:$0xff]
  %s3793 = scalar_lea.vmem %s12, 1
  %v3794 = vld [vmem:[%s3793] sm:$0x1]
  %v3796 = vlaneseq
  %v3797 = vshrl.u32 %v3796, 7
  %v3798 = vsub.s32 0, %v3797
  %v3799 = vrot.slane %v3794, %v3798
  %3801 = vmatprep.subr.mxu0 0.0
  %3802 = vmatpush1.msra.mxu0 %v3777
  %3803 = vmatprep.subr.mxu0 0.0
  %3804 = vmatpush1.msra.mxu0 %v3778
  %3805 = vmatprep.subr.mxu0 0.0
  %3806 = vmatpush1.msra.mxu0 %v3779
  %3807 = vmatprep.subr.mxu0 0.0
  %3808 = vmatpush1.msra.mxu0 %v3780
  %3809 = vmatprep.subr.mxu0 0.0
  %3810 = vmatpush1.msra.mxu0 %v3781
  %3811 = vmatprep.subr.mxu0 0.0
  %3812 = vmatpush1.msra.mxu0 %v3782
  %3813 = vmatprep.subr.mxu0 0.0
  %3814 = vmatpush1.msra.mxu0 %v3783
  %3815 = vmatprep.subr.mxu0 0.0
  %3816 = vmatpush1.msra.mxu0 %v3784
  %3817 = vmatprep.subr.mxu0 0.0
  %3818 = vmatpush1.msra.mxu0 %v3785
  %3819 = vmatprep.subr.mxu0 0.0
  %3820 = vmatpush1.msra.mxu0 %v3786
  %3821 = vmatprep.subr.mxu0 0.0
  %3822 = vmatpush1.msra.mxu0 %v3787
  %3823 = vmatprep.subr.mxu0 0.0
  %3824 = vmatpush1.msra.mxu0 %v3788
  %3825 = vmatprep.subr.mxu0 0.0
  %3826 = vmatpush1.msra.mxu0 %v3789
  %3827 = vmatprep.subr.mxu0 0.0
  %3828 = vmatpush1.msra.mxu0 %v3790
  %3829 = vmatprep.subr.mxu0 0.0
  %3830 = vmatpush1.msra.mxu0 %v3791
  %3831 = vmatprep.subr.mxu0 0.0
  %3832 = vmatpush1.msra.mxu0 %v3792
  %3833 = vmatprep.subr.mxu0 0.0
  %3834 = vmatpush1.msra.mxu0 0.0
  %3835 = vmatprep.subr.mxu0 0.0
  %3836 = vmatpush1.msra.mxu0 0.0
  %3837 = vmatprep.subr.mxu0 0.0
  %3838 = vmatpush1.msra.mxu0 0.0
  %3839 = vmatprep.subr.mxu0 0.0
  %3840 = vmatpush1.msra.mxu0 0.0
  %3841 = vmatprep.subr.mxu0 0.0
  %3842 = vmatpush1.msra.mxu0 0.0
  %3843 = vmatprep.subr.mxu0 0.0
  %3844 = vmatpush1.msra.mxu0 0.0
  %3845 = vmatprep.subr.mxu0 0.0
  %3846 = vmatpush1.msra.mxu0 0.0
  %3847 = vmatprep.subr.mxu0 0.0
  %3848 = vmatpush1.msra.mxu0 0.0
  %3849 = vmatprep.subr.mxu0 0.0
  %3850 = vmatpush1.msra.mxu0 0.0
  %3851 = vmatprep.subr.mxu0 0.0
  %3852 = vmatpush1.msra.mxu0 0.0
  %3853 = vmatprep.subr.mxu0 0.0
  %3854 = vmatpush1.msra.mxu0 0.0
  %3855 = vmatprep.subr.mxu0 0.0
  %3856 = vmatpush1.msra.mxu0 0.0
  %3857 = vmatprep.subr.mxu0 0.0
  %3858 = vmatpush1.msra.mxu0 0.0
  %3859 = vmatprep.subr.mxu0 0.0
  %3860 = vmatpush1.msra.mxu0 0.0
  %3861 = vmatprep.subr.mxu0 0.0
  %3862 = vmatpush1.msra.mxu0 0.0
  %3863 = vmatprep.subr.mxu0 0.0
  %3864 = vmatpush1.msra.mxu0 0.0
  %3865 = vmatprep.mubr.f32.mxu0 0.0
  %3866 = vmatmul.mubr.f32.gmra.mrb[0].mxu0 %v3774
  %v3867 = vpop.f32.mrb[0].mxu0
  %v3868 = vadd.f32 %v3799, %v3867
  %v3869 = vpop.f32.mrb[0].mxu0
  %3870 = vmatprep.mubr.f32.mxu0 0.0
  %3871 = vmatmul.mubr.f32.gmra.mrb[0].mxu0 %v3775
  %v3872 = vpop.f32.mrb[0].mxu0
  %v3873 = vadd.f32 %v3799, %v3872
  %v3874 = vpop.f32.mrb[0].mxu0
  %3875 = vdwg.mxu0
  %v3876 = vadd.f32 %v3670, %v3868
  %v3877 = vadd.f32 %v3671, %v3873
  %v3878 = vsel %vm96, %v3876, 0.0
  %3879 = vadd.xlane.f32.xlu0 %v3878
  %v3880 = vpop.xlane.xlu0 %3879
  %v3881 = vsel %vm96, %v3877, 0.0
  %3882 = vadd.xlane.f32.xlu0 %v3881
  %v3883 = vpop.xlane.xlu0 %3882
  %v3884 = vmul.f32 %v3880, %v1716
  %v3885 = vmul.f32 %v3883, %v1716
  %v3886 = vsub.f32 %v3876, %v3884
  %v3887 = vsub.f32 %v3877, %v3885
  %v3888 = vmul.f32 %v3886, %v3886
  %v3889 = vmul.f32 %v3887, %v3887
  %v3890 = vsel %vm96, %v3888, 0.0
  %3891 = vadd.xlane.f32.xlu0 %v3890
  %v3892 = vpop.xlane.xlu0 %3891
  %v3893 = vsel %vm96, %v3889, 0.0
  %3894 = vadd.xlane.f32.xlu0 %v3893
  %v3895 = vpop.xlane.xlu0 %3894
  %v3896 = vmul.f32 %v3892, %v1716
  %v3897 = vmul.f32 %v3895, %v1716
  %s3898 = scalar_lea.vmem %s13, 1
  %v3899 = vld [vmem:[%s3898] sm:$0x1]
  %v3900 = vadd.f32 %v3896, 1e-05
  %v3901 = vadd.f32 %v3897, 1e-05
  %v3902 = vrsqrt.pop %v3900
  %v3903 = vrsqrt.pop %v3901
  %v3904 = vmul.f32 %v3886, %v3902
  %v3905 = vmul.f32 %v3887, %v3903
  %v3907 = vlaneseq
  %v3908 = vshrl.u32 %v3907, 7
  %v3909 = vsub.s32 0, %v3908
  %v3910 = vrot.slane %v3899, %v3909
  %v3912 = vmul.f32 %v3910, %v3904
  %v3913 = vmul.f32 %v3910, %v3905
  %s3914 = scalar_lea.vmem %s14, 1
  %v3915 = vld [vmem:[%s3914] sm:$0x1]
  %v3917 = vlaneseq
  %v3918 = vshrl.u32 %v3917, 7
  %v3919 = vsub.s32 0, %v3918
  %v3920 = vrot.slane %v3915, %v3919
  %v3922 = vadd.f32 %v3912, %v3920
  %v3923 = vadd.f32 %v3913, %v3920
  %v3924 = vld [vmem:[%s15] sm:$0xff]
  %v3925 = vld [vmem:[%s15 + $0x8] sm:$0xff]
  %v3926 = vld [vmem:[%s15 + $0x10] sm:$0xff]
  %v3927 = vld [vmem:[%s15 + $0x18] sm:$0xff]
  %v3929 = vsel %vm96, %v3922, 0
  %v3932 = vsel %vm96, %v3923, 0
  %3934 = vmatprep.subr.mxu0 0.0
  %3935 = vmatpush1.msra.mxu0 %v3924
  %3936 = vmatprep.subr.mxu0 0.0
  %3937 = vmatpush1.msra.mxu0 %v3925
  %3938 = vmatprep.subr.mxu0 0.0
  %3939 = vmatpush1.msra.mxu0 %v3926
  %3940 = vmatprep.subr.mxu0 0.0
  %3941 = vmatpush1.msra.mxu0 %v3927
  %3942 = vmatprep.subr.mxu0 0.0
  %3943 = vmatpush1.msra.mxu0 0.0
  %3944 = vmatprep.subr.mxu0 0.0
  %3945 = vmatpush1.msra.mxu0 0.0
  %3946 = vmatprep.subr.mxu0 0.0
  %3947 = vmatpush1.msra.mxu0 0.0
  %3948 = vmatprep.subr.mxu0 0.0
  %3949 = vmatpush1.msra.mxu0 0.0
  %3950 = vmatprep.subr.mxu0 0.0
  %3951 = vmatpush1.msra.mxu0 0.0
  %3952 = vmatprep.subr.mxu0 0.0
  %3953 = vmatpush1.msra.mxu0 0.0
  %3954 = vmatprep.subr.mxu0 0.0
  %3955 = vmatpush1.msra.mxu0 0.0
  %3956 = vmatprep.subr.mxu0 0.0
  %3957 = vmatpush1.msra.mxu0 0.0
  %3958 = vmatprep.subr.mxu0 0.0
  %3959 = vmatpush1.msra.mxu0 0.0
  %3960 = vmatprep.subr.mxu0 0.0
  %3961 = vmatpush1.msra.mxu0 0.0
  %3962 = vmatprep.subr.mxu0 0.0
  %3963 = vmatpush1.msra.mxu0 0.0
  %3964 = vmatprep.subr.mxu0 0.0
  %3965 = vmatpush1.msra.mxu0 0.0
  %3966 = vmatprep.subr.mxu0 0.0
  %3967 = vmatpush1.msra.mxu0 0.0
  %3968 = vmatprep.subr.mxu0 0.0
  %3969 = vmatpush1.msra.mxu0 0.0
  %3970 = vmatprep.subr.mxu0 0.0
  %3971 = vmatpush1.msra.mxu0 0.0
  %3972 = vmatprep.subr.mxu0 0.0
  %3973 = vmatpush1.msra.mxu0 0.0
  %3974 = vmatprep.subr.mxu0 0.0
  %3975 = vmatpush1.msra.mxu0 0.0
  %3976 = vmatprep.subr.mxu0 0.0
  %3977 = vmatpush1.msra.mxu0 0.0
  %3978 = vmatprep.subr.mxu0 0.0
  %3979 = vmatpush1.msra.mxu0 0.0
  %3980 = vmatprep.subr.mxu0 0.0
  %3981 = vmatpush1.msra.mxu0 0.0
  %3982 = vmatprep.subr.mxu0 0.0
  %3983 = vmatpush1.msra.mxu0 0.0
  %3984 = vmatprep.subr.mxu0 0.0
  %3985 = vmatpush1.msra.mxu0 0.0
  %3986 = vmatprep.subr.mxu0 0.0
  %3987 = vmatpush1.msra.mxu0 0.0
  %3988 = vmatprep.subr.mxu0 0.0
  %3989 = vmatpush1.msra.mxu0 0.0
  %3990 = vmatprep.subr.mxu0 0.0
  %3991 = vmatpush1.msra.mxu0 0.0
  %3992 = vmatprep.subr.mxu0 0.0
  %3993 = vmatpush1.msra.mxu0 0.0
  %3994 = vmatprep.subr.mxu0 0.0
  %3995 = vmatpush1.msra.mxu0 0.0
  %3996 = vmatprep.subr.mxu0 0.0
  %3997 = vmatpush1.msra.mxu0 0.0
  %3998 = vmatprep.mubr.f32.mxu0 0.0
  %3999 = vmatmul.mubr.f32.gmra.mrb[0].mxu0 %v3929
  %v4000 = vpop.f32.mrb[0].mxu0
  %v4001 = vadd.f32 0.0, %v4000
  %v4002 = vpop.f32.mrb[0].mxu0
  %4003 = vmatprep.mubr.f32.mxu0 0.0
  %4004 = vmatmul.mubr.f32.gmra.mrb[0].mxu0 %v3932
  %v4005 = vpop.f32.mrb[0].mxu0
  %v4006 = vadd.f32 0.0, %v4005
  %v4007 = vpop.f32.mrb[0].mxu0
  %4008 = vdwg.mxu0
  %vm4009 = vcmask 523264
  %v4010 = vsel %vm4009, %v4001, -inf
  %4011 = vmax.xlane.f32.xlu0 %v4010
  %v4012 = vpop.xlane.xlu0 %4011
  %v4013 = vsel %vm4009, %v4006, -inf
  %4014 = vmax.xlane.f32.xlu0 %v4013
  %v4015 = vpop.xlane.xlu0 %4014
  %v4016 = vsub.f32 %v4001, %v4012
  %v4017 = vsub.f32 %v4006, %v4015
  %v4018 = vmul.f32 %v4016, 1.442695
  %v4019 = vpow.pop %v4018
  %v4020 = vmul.f32 %v4017, 1.442695
  %v4021 = vpow.pop %v4020
  %v4022 = vsel %vm4009, %v4019, 0.0
  %4023 = vadd.xlane.f32.xlu0 %v4022
  %v4024 = vpop.xlane.xlu0 %4023
  %v4025 = vsel %vm4009, %v4021, 0.0
  %4026 = vadd.xlane.f32.xlu0 %v4025
  %v4027 = vpop.xlane.xlu0 %4026
  %v4028 = vrcp.pop %v4024
  %v4029 = vmul.f32 %v4019, %v4028
  %v4030 = vrcp.pop %v4027
  %v4031 = vmul.f32 %v4021, %v4030
  %4034 = vrot.lane.b32.xlu0 %v4029, 64
  %v4035 = vpop.permute.xlu0 %4034
  %4036 = vrot.lane.b32.xlu0 %v4031, 64
  %v4037 = vpop.permute.xlu0 %4036
  %v4040 = vsel %vm4009, %v4001, %v4035
  %v4041 = vsel %vm4009, %v4006, %v4037
  %4042 = vst [vmem:[%s16] sm:$0xff] %v4040
  %4043 = vst [vmem:[%s16 + $0x8] sm:$0xff] %v4041
  // Predicated region
  $region66: #{gpt_forward.1} parent=0 // pred_check
    _
  $region67: #{gpt_forward.1} parent=0 // pred_check_branch
    %4045 = sbr.rel (0) target = $region69
  $region68: #{gpt_forward.1} parent=0 // pred_region
    _
  $region69: #{gpt_forward.1} parent=0 // pred_fallthru
    _
  // Predicated region
  $region70: #{gpt_forward.1} parent=0 // pred_check
    _
  $region71: #{gpt_forward.1} parent=0 // pred_check_branch
    %4047 = sbr.rel (0) target = $region73
  $region72: #{gpt_forward.1} parent=0 // pred_region
    _
  $region73: #{gpt_forward.1} parent=0 // pred_fallthru
    _

</llo_original>
